<compile_context>
chip_gen: v5e
topology: v5e:2x2
jax: 0.10.0
libtpu: 0.0.40
codegen_flags: <defaults>
</compile_context>

<pallas_src>
import functools

import jax
import jax.numpy as jnp
from jax import lax
from jax.experimental import pallas as pl
from jax.experimental.pallas import tpu as pltpu


def _round_up(a, b):
    return ((a + b - 1) // b) * b


def _flash_attn_kernel(q_ref, k_ref, v_ref, kbias_ref, wo_ref, bo_ref,
                       o_ref,
                       m_sc, l_sc, acc_sc,
                       *, use_kbias, approx_recip):
    """Grid = (batch, q_tile, k_tile); k_tile innermost ("arbitrary").

    q_ref    : (1, heads, tq, d)   scaled, projected queries  (compute dtype)
    k_ref    : (1, heads, tk, d)   projected keys              (compute dtype)
    v_ref    : (1, heads, tk, d)   projected values            (compute dtype)
    kbias_ref: (1, tk)             additive key mask (0 / -1e30, f32)
    wo_ref   : (heads, d, Dq)      output-projection weights   (compute dtype)
    bo_ref   : (1, Dq)             output bias (f32)
    o_ref    : (1, tq, Dq)         output tile (resident across k axis)
    m_sc     : (heads, tq, 1)      running max      (f32 scratch)
    l_sc     : (heads, tq, 1)      running sum      (f32 scratch)
    acc_sc   : (heads, tq, d)      running P@V acc  (f32 scratch)
    """
    kj = pl.program_id(2)
    num_k = pl.num_programs(2)

    # New (batch, q-tile): reset online-softmax running state.
    @pl.when(kj == 0)
    def _():
        m_sc[...] = jnp.full_like(m_sc, -jnp.inf)
        l_sc[...] = jnp.zeros_like(l_sc)
        acc_sc[...] = jnp.zeros_like(acc_sc)

    q = q_ref[0]                                         # (heads, tq, d)
    k = k_ref[0]                                         # (heads, tk, d)
    v = v_ref[0]                                         # (heads, tk, d)

    # Scores for all heads at once: (heads, tq, tk), f32 accumulation.
    s = lax.dot_general(q, k, (((2,), (2,)), ((0,), (0,))),
                        preferred_element_type=jnp.float32)

    if use_kbias:  # static: only emitted when the key side was padded
        s = s + kbias_ref[...][None]                     # (1,1,tk) broadcast

    # Online softmax update (all f32, vectorized over heads).
    m_prev = m_sc[...]
    m_new = jnp.maximum(m_prev, jnp.max(s, axis=-1, keepdims=True))
    alpha = jnp.exp(m_prev - m_new)
    p = jnp.exp(s - m_new)
    l_sc[...] = alpha * l_sc[...] + jnp.sum(p, axis=-1, keepdims=True)
    acc_sc[...] = alpha * acc_sc[...] + lax.dot_general(
        p.astype(v.dtype), v, (((2,), (1,)), ((0,), (0,))),
        preferred_element_type=jnp.float32)
    m_sc[...] = m_new

    # Last k tile: normalize, apply the output projection once (batched over
    # heads, summed), add the bias once and store.
    @pl.when(kj == num_k - 1)
    def _():
        inv_l = pl.reciprocal(l_sc[...], approx=approx_recip)
        o_h = (acc_sc[...] * inv_l).astype(wo_ref.dtype)          # (h, tq, d)
        y_h = lax.dot_general(o_h, wo_ref[...],
                              (((2,), (1,)), ((0,), (0,))),
                              preferred_element_type=jnp.float32)  # (h, tq, Dq)
        y = jnp.sum(y_h, axis=0) + bo_ref[...]                     # (tq, Dq)
        o_ref[0] = y.astype(o_ref.dtype)


def attention_forward(x, w_q, w_kv, w_out, b_out, *, heads, dim_head,
                      block_q=256, block_k=512, compute_dtype=jnp.bfloat16,
                      vmem_limit_bytes=48 * 1024 * 1024):
    """Perceiver Attention forward (context = x, mask = None, dropout = 0).

    x:     (B, N, query_dim)
    w_q:   (query_dim, inner),  inner = heads * dim_head   (== torch W_q.T)
    w_kv:  (query_dim, 2 * inner)                           (== torch W_kv.T)
    w_out: (inner, query_dim)                               (== torch W_out.T)
    b_out: (query_dim,)
    Returns (B, N, query_dim) in x.dtype.
    """
    B, N, Dq = x.shape
    inner = heads * dim_head
    assert w_q.shape == (Dq, inner)
    assert w_kv.shape == (Dq, 2 * inner)
    assert w_out.shape == (inner, Dq)
    scale = dim_head ** (-0.5)

    # ---- Q/K/V projections: plain XLA matmuls, computed exactly once at
    # full MXU shapes.  The softmax scale is folded into Q here. ----
    x32 = x.astype(jnp.float32)
    q = (x32 @ w_q.astype(jnp.float32)) * scale            # (B, N, inner)
    kv = x32 @ w_kv.astype(jnp.float32)                    # (B, N, 2*inner)
    k, v = kv[..., :inner], kv[..., inner:]

    def to_heads(t):                    # (B, N, inner) -> (B, heads, N, d)
        return t.reshape(B, N, heads, dim_head).transpose(0, 2, 1, 3) \
                .astype(compute_dtype)

    q, k, v = to_heads(q), to_heads(k), to_heads(v)

    # ---- Sequence tiling: q and k sides padded independently. ----
    bq = min(block_q, _round_up(N, 8))
    bk = min(block_k, _round_up(N, 128))
    n_q_pad = _round_up(N, bq)
    n_k_pad = _round_up(N, bk)
    if n_q_pad != N:
        q = jnp.pad(q, ((0, 0), (0, 0), (0, n_q_pad - N), (0, 0)))
    if n_k_pad != N:
        k = jnp.pad(k, ((0, 0), (0, 0), (0, n_k_pad - N), (0, 0)))
        v = jnp.pad(v, ((0, 0), (0, 0), (0, n_k_pad - N), (0, 0)))
    use_kbias = (n_k_pad != N)
    kbias = jnp.where(jnp.arange(n_k_pad) < N, 0.0, -1e30) \
               .astype(jnp.float32).reshape(1, n_k_pad)

    # Head-major output projection weights; bias kept in f32.
    wo_h = w_out.reshape(heads, dim_head, Dq).astype(compute_dtype)
    bo = b_out.reshape(1, Dq).astype(jnp.float32)

    grid = (B, n_q_pad // bq, n_k_pad // bk)

    kernel = functools.partial(
        _flash_attn_kernel,
        use_kbias=use_kbias,
        approx_recip=(compute_dtype != jnp.float32))

    # TODO(synk): user-supplied `mask` path (masked_fill before softmax) not
    # implemented; this kernel covers the mask=None forward (padded keys are
    # masked internally via the additive key bias).
    out = pl.pallas_call(
        kernel,
        out_shape=jax.ShapeDtypeStruct((B, n_q_pad, Dq), x.dtype),
        grid_spec=pltpu.PrefetchScalarGridSpec(
            num_scalar_prefetch=0,
            grid=grid,
            in_specs=[
                pl.BlockSpec((1, heads, bq, dim_head),
                             lambda b, qi, kj: (b, 0, qi, 0)),      # Q tile
                pl.BlockSpec((1, heads, bk, dim_head),
                             lambda b, qi, kj: (b, 0, kj, 0)),      # K tile
                pl.BlockSpec((1, heads, bk, dim_head),
                             lambda b, qi, kj: (b, 0, kj, 0)),      # V tile
                pl.BlockSpec((1, bk), lambda b, qi, kj: (0, kj)),   # key bias
                pl.BlockSpec((heads, dim_head, Dq),
                             lambda b, qi, kj: (0, 0, 0)),          # W_out
                pl.BlockSpec((1, Dq), lambda b, qi, kj: (0, 0)),    # bias
            ],
            out_specs=pl.BlockSpec((1, bq, Dq), lambda b, qi, kj: (b, qi, 0)),
            scratch_shapes=[
                pltpu.VMEM((heads, bq, 1), jnp.float32),         # running max
                pltpu.VMEM((heads, bq, 1), jnp.float32),         # running sum
                pltpu.VMEM((heads, bq, dim_head), jnp.float32),  # P@V accum
            ]),
        compiler_params=pltpu.CompilerParams(
            dimension_semantics=("parallel", "parallel", "arbitrary"),
            vmem_limit_bytes=vmem_limit_bytes),
    )(q, k, v, kbias, wo_h, bo)

    return out[:, :N, :] if n_q_pad != N else out


def attention_reference(x, w_q, w_kv, w_out, b_out, *, heads, dim_head):
    """Pure-JAX (f32) reference mirroring the PyTorch forward exactly."""
    B, N, Dq = x.shape
    inner = heads * dim_head
    scale = dim_head ** (-0.5)
    q = x @ w_q                                   # (B, N, inner)
    kv = x @ w_kv                                 # (B, N, 2*inner)
    k, v = kv[..., :inner], kv[..., inner:]

    def split_heads(t):                           # 'b n (h d) -> (b h) n d'
        return t.reshape(B, N, heads, dim_head).transpose(0, 2, 1, 3).reshape(
            B * heads, N, dim_head)

    q, k, v = map(split_heads, (q, k, v))
    sim = jnp.einsum('bid,bjd->bij', q, k) * scale
    attn = jax.nn.softmax(sim, axis=-1)
    out = jnp.einsum('bij,bjd->bid', attn, v)
    out = out.reshape(B, heads, N, dim_head).transpose(0, 2, 1, 3).reshape(
        B, N, inner)
    return out @ w_out + b_out


if __name__ == "__main__":
    # Small shapes consistent with the module but large enough to exercise a
    # multi-tile (q-tile x k-tile) grid and the padded-key mask path.
    B, N = 2, 384
    query_dim = 64
    heads, dim_head = 4, 32
    inner = heads * dim_head

    key = jax.random.PRNGKey(0)
    kx, kq, kkv, kwo, kbo = jax.random.split(key, 5)
    x = jax.random.normal(kx, (B, N, query_dim), dtype=jnp.float32)
    w_q = jax.random.normal(kq, (query_dim, inner), dtype=jnp.float32) * 0.1
    w_kv = jax.random.normal(kkv, (query_dim, 2 * inner), dtype=jnp.float32) * 0.1
    w_out = jax.random.normal(kwo, (inner, query_dim), dtype=jnp.float32) * 0.1
    b_out = jax.random.normal(kbo, (query_dim,), dtype=jnp.float32) * 0.1

    # Primary run: bf16 MXU operands, f32 softmax/accumulation, explicit small
    # tiles (128) so the grid has 3 q-tiles x 3 k-tiles per batch.
    y = attention_forward(x, w_q, w_kv, w_out, b_out,
                          heads=heads, dim_head=dim_head,
                          block_q=128, block_k=128)
    y = jax.block_until_ready(y)
    y_ref = attention_reference(x, w_q, w_kv, w_out, b_out,
                                heads=heads, dim_head=dim_head)
    assert y.shape == (B, N, query_dim)
    assert jnp.allclose(y, y_ref, atol=5e-2, rtol=5e-2), \
        float(jnp.max(jnp.abs(y - y_ref)))

    # Secondary check: unaligned sequence length (exercises padded-key masking
    # and the default large/decoupled tiles) with an f32 compute path.
    N2 = 200
    x2 = x[:, :N2, :]
    y2 = attention_forward(x2, w_q, w_kv, w_out, b_out,
                           heads=heads, dim_head=dim_head,
                           compute_dtype=jnp.float32)
    y2 = jax.block_until_ready(y2)
    y2_ref = attention_reference(x2, w_q, w_kv, w_out, b_out,
                                 heads=heads, dim_head=dim_head)
    assert y2.shape == (B, N2, query_dim)
    assert jnp.allclose(y2, y2_ref, atol=1e-2, rtol=1e-2), \
        float(jnp.max(jnp.abs(y2 - y2_ref)))

    print("KERNEL_OK")
</pallas_src>

<mosaic_0001>
module attributes {stable_mosaic.version = 11 : i64} {
  func.func @_flash_attn_kernel(%arg0: i32, %arg1: i32, %arg2: i32, %arg3: memref<1x4x128x32xbf16, #tpu.memory_space<vmem>>, %arg4: memref<1x4x128x32xbf16, #tpu.memory_space<vmem>>, %arg5: memref<1x4x128x32xbf16, #tpu.memory_space<vmem>>, %arg6: memref<1x128xf32, #tpu.memory_space<vmem>>, %arg7: memref<4x32x64xbf16, #tpu.memory_space<vmem>>, %arg8: memref<1x64xf32, #tpu.memory_space<vmem>>, %arg9: memref<1x128x64xf32, #tpu.memory_space<vmem>>, %arg10: memref<4x128x1xf32, #tpu.memory_space<vmem>>, %arg11: memref<4x128x1xf32, #tpu.memory_space<vmem>>, %arg12: memref<4x128x32xf32, #tpu.memory_space<vmem>>) attributes {dimension_semantics = [#tpu.dimension_semantics<parallel>, #tpu.dimension_semantics<parallel>, #tpu.dimension_semantics<arbitrary>], iteration_bounds = array<i64: 2, 3, 3>, scalar_prefetch = 0 : i64, scratch_operands = 3 : i64, tpu.core_type = #tpu.core_type<tc>, window_params = [{transform_indices = @transform_0, window_bounds = array<i64: 1, 4, 128, 32>}, {transform_indices = @transform_1, window_bounds = array<i64: 1, 4, 128, 32>}, {transform_indices = @transform_2, window_bounds = array<i64: 1, 4, 128, 32>}, {transform_indices = @transform_3, window_bounds = array<i64: 1, 128>}, {pipeline_mode = #tpu.pipeline_mode<synchronous>, transform_indices = @transform_4, window_bounds = array<i64: 4, 32, 64>}, {pipeline_mode = #tpu.pipeline_mode<synchronous>, transform_indices = @transform_5, window_bounds = array<i64: 1, 64>}, {transform_indices = @transform_6, window_bounds = array<i64: 1, 128, 64>}]} {
    %c0_i32 = arith.constant 0 : i32
    %0 = arith.cmpi eq, %arg2, %c0_i32 : i32
    %1 = arith.extui %0 : i1 to i32
    %c0_i32_0 = arith.constant 0 : i32
    %2 = arith.cmpi ne, %1, %c0_i32_0 : i32
    scf.if %2 {
      %cst_34 = arith.constant 0xFF800000 : f32
      %36 = vector.broadcast %cst_34 : f32 to vector<4x128x1xf32>
      %c0_35 = arith.constant 0 : index
      %c0_36 = arith.constant 0 : index
      %c0_37 = arith.constant 0 : index
      %37 = vector.load %arg10[%c0_35, %c0_36, %c0_37] : memref<4x128x1xf32, #tpu.memory_space<vmem>>, vector<4x128x1xf32>
      tpu.vector_store %arg10[%c0_35, %c0_36, %c0_37], %36 {strides = array<i32>} : memref<4x128x1xf32, #tpu.memory_space<vmem>>, vector<4x128x1xf32>,
      %cst_38 = arith.constant 0.000000e+00 : f32
      %38 = vector.broadcast %cst_38 : f32 to vector<4x128x1xf32>
      %c0_39 = arith.constant 0 : index
      %c0_40 = arith.constant 0 : index
      %c0_41 = arith.constant 0 : index
      %39 = vector.load %arg11[%c0_39, %c0_40, %c0_41] : memref<4x128x1xf32, #tpu.memory_space<vmem>>, vector<4x128x1xf32>
      tpu.vector_store %arg11[%c0_39, %c0_40, %c0_41], %38 {strides = array<i32>} : memref<4x128x1xf32, #tpu.memory_space<vmem>>, vector<4x128x1xf32>,
      %cst_42 = arith.constant 0.000000e+00 : f32
      %40 = vector.broadcast %cst_42 : f32 to vector<4x128x32xf32>
      %c0_43 = arith.constant 0 : index
      %c0_44 = arith.constant 0 : index
      %c0_45 = arith.constant 0 : index
      %41 = vector.load %arg12[%c0_43, %c0_44, %c0_45] : memref<4x128x32xf32, #tpu.memory_space<vmem>>, vector<4x128x32xf32>
      tpu.vector_store %arg12[%c0_43, %c0_44, %c0_45], %40 {strides = array<i32>} : memref<4x128x32xf32, #tpu.memory_space<vmem>>, vector<4x128x32xf32>,
    } else {
    }
    %c0 = arith.constant 0 : index
    %c0_1 = arith.constant 0 : index
    %c0_2 = arith.constant 0 : index
    %c0_3 = arith.constant 0 : index
    %3 = vector.load %arg3[%c0, %c0_1, %c0_2, %c0_3] : memref<1x4x128x32xbf16, #tpu.memory_space<vmem>>, vector<1x4x128x32xbf16>
    %4 = vector.shape_cast %3 : vector<1x4x128x32xbf16> to vector<4x128x32xbf16>
    %c0_4 = arith.constant 0 : index
    %c0_5 = arith.constant 0 : index
    %c0_6 = arith.constant 0 : index
    %c0_7 = arith.constant 0 : index
    %5 = vector.load %arg4[%c0_4, %c0_5, %c0_6, %c0_7] : memref<1x4x128x32xbf16, #tpu.memory_space<vmem>>, vector<1x4x128x32xbf16>
    %6 = vector.shape_cast %5 : vector<1x4x128x32xbf16> to vector<4x128x32xbf16>
    %c0_8 = arith.constant 0 : index
    %c0_9 = arith.constant 0 : index
    %c0_10 = arith.constant 0 : index
    %c0_11 = arith.constant 0 : index
    %7 = vector.load %arg5[%c0_8, %c0_9, %c0_10, %c0_11] : memref<1x4x128x32xbf16, #tpu.memory_space<vmem>>, vector<1x4x128x32xbf16>
    %8 = vector.shape_cast %7 : vector<1x4x128x32xbf16> to vector<4x128x32xbf16>
    %cst = arith.constant dense<0.000000e+00> : vector<4x128x128xf32>
    %9 = tpu.matmul %4, %6, %cst {dimension_numbers = #tpu.dot_dimension_numbers<[2], [2], [1], [1], [0, 0, 0, 1, 1, 1], [0], [0]>} : vector<4x128x32xbf16>, vector<4x128x32xbf16>, vector<4x128x128xf32> -> vector<4x128x128xf32>
    %c0_12 = arith.constant 0 : index
    %c0_13 = arith.constant 0 : index
    %c0_14 = arith.constant 0 : index
    %10 = vector.load %arg10[%c0_12, %c0_13, %c0_14] : memref<4x128x1xf32, #tpu.memory_space<vmem>>, vector<4x128x1xf32>
    %cst_15 = arith.constant dense<0xFF800000> : vector<4x128xf32>
    %11 = vector.multi_reduction <maximumf>, %9, %cst_15 [2] : vector<4x128x128xf32> to vector<4x128xf32>
    %12 = vector.shape_cast %11 : vector<4x128xf32> to vector<4x128x1xf32>
    %13 = arith.maximumf %10, %12 : vector<4x128x1xf32>
    %14 = arith.subf %10, %13 : vector<4x128x1xf32>
    %15 = math.exp %14 : vector<4x128x1xf32>
    %16 = vector.broadcast %13 : vector<4x128x1xf32> to vector<4x128x128xf32>
    %17 = arith.subf %9, %16 : vector<4x128x128xf32>
    %18 = math.exp %17 : vector<4x128x128xf32>
    %c0_16 = arith.constant 0 : index
    %c0_17 = arith.constant 0 : index
    %c0_18 = arith.constant 0 : index
    %19 = vector.load %arg11[%c0_16, %c0_17, %c0_18] : memref<4x128x1xf32, #tpu.memory_space<vmem>>, vector<4x128x1xf32>
    %20 = arith.mulf %15, %19 : vector<4x128x1xf32>
    %cst_19 = arith.constant dense<0.000000e+00> : vector<4x128xf32>
    %21 = vector.multi_reduction <add>, %18, %cst_19 [2] : vector<4x128x128xf32> to vector<4x128xf32>
    %22 = vector.shape_cast %21 : vector<4x128xf32> to vector<4x128x1xf32>
    %23 = arith.addf %20, %22 : vector<4x128x1xf32>
    %c0_20 = arith.constant 0 : index
    %c0_21 = arith.constant 0 : index
    %c0_22 = arith.constant 0 : index
    %24 = vector.load %arg11[%c0_20, %c0_21, %c0_22] : memref<4x128x1xf32, #tpu.memory_space<vmem>>, vector<4x128x1xf32>
    tpu.vector_store %arg11[%c0_20, %c0_21, %c0_22], %23 {strides = array<i32>} : memref<4x128x1xf32, #tpu.memory_space<vmem>>, vector<4x128x1xf32>,
    %c0_23 = arith.constant 0 : index
    %c0_24 = arith.constant 0 : index
    %c0_25 = arith.constant 0 : index
    %25 = vector.load %arg12[%c0_23, %c0_24, %c0_25] : memref<4x128x32xf32, #tpu.memory_space<vmem>>, vector<4x128x32xf32>
    %26 = vector.broadcast %15 : vector<4x128x1xf32> to vector<4x128x32xf32>
    %27 = arith.mulf %26, %25 : vector<4x128x32xf32>
    %28 = arith.truncf %18 : vector<4x128x128xf32> to vector<4x128x128xbf16>
    %cst_26 = arith.constant dense<0.000000e+00> : vector<4x128x32xf32>
    %29 = tpu.matmul %28, %8, %cst_26 {dimension_numbers = #tpu.dot_dimension_numbers<[2], [1], [1], [2], [0, 0, 0, 1, 1, 2], [0], [0]>} : vector<4x128x128xbf16>, vector<4x128x32xbf16>, vector<4x128x32xf32> -> vector<4x128x32xf32>
    %30 = arith.addf %27, %29 : vector<4x128x32xf32>
    %c0_27 = arith.constant 0 : index
    %c0_28 = arith.constant 0 : index
    %c0_29 = arith.constant 0 : index
    %31 = vector.load %arg12[%c0_27, %c0_28, %c0_29] : memref<4x128x32xf32, #tpu.memory_space<vmem>>, vector<4x128x32xf32>
    tpu.vector_store %arg12[%c0_27, %c0_28, %c0_29], %30 {strides = array<i32>} : memref<4x128x32xf32, #tpu.memory_space<vmem>>, vector<4x128x32xf32>,
    %c0_30 = arith.constant 0 : index
    %c0_31 = arith.constant 0 : index
    %c0_32 = arith.constant 0 : index
    %32 = vector.load %arg10[%c0_30, %c0_31, %c0_32] : memref<4x128x1xf32, #tpu.memory_space<vmem>>, vector<4x128x1xf32>
    tpu.vector_store %arg10[%c0_30, %c0_31, %c0_32], %13 {strides = array<i32>} : memref<4x128x1xf32, #tpu.memory_space<vmem>>, vector<4x128x1xf32>,
    %c2_i32 = arith.constant 2 : i32
    %33 = arith.cmpi eq, %arg2, %c2_i32 : i32
    %34 = arith.extui %33 : i1 to i32
    %c0_i32_33 = arith.constant 0 : i32
    %35 = arith.cmpi ne, %34, %c0_i32_33 : i32
    scf.if %35 {
      %c0_34 = arith.constant 0 : index
      %c0_35 = arith.constant 0 : index
      %c0_36 = arith.constant 0 : index
      %36 = vector.load %arg11[%c0_34, %c0_35, %c0_36] : memref<4x128x1xf32, #tpu.memory_space<vmem>>, vector<4x128x1xf32>
      %37 = tpu.reciprocal %36 {approx = true} : vector<4x128x1xf32> -> vector<4x128x1xf32>
      %c0_37 = arith.constant 0 : index
      %c0_38 = arith.constant 0 : index
      %c0_39 = arith.constant 0 : index
      %38 = vector.load %arg12[%c0_37, %c0_38, %c0_39] : memref<4x128x32xf32, #tpu.memory_space<vmem>>, vector<4x128x32xf32>
      %39 = vector.broadcast %37 : vector<4x128x1xf32> to vector<4x128x32xf32>
      %40 = arith.mulf %38, %39 : vector<4x128x32xf32>
      %41 = arith.truncf %40 : vector<4x128x32xf32> to vector<4x128x32xbf16>
      %c0_40 = arith.constant 0 : index
      %c0_41 = arith.constant 0 : index
      %c0_42 = arith.constant 0 : index
      %42 = vector.load %arg7[%c0_40, %c0_41, %c0_42] : memref<4x32x64xbf16, #tpu.memory_space<vmem>>, vector<4x32x64xbf16>
      %cst_43 = arith.constant dense<0.000000e+00> : vector<4x128x64xf32>
      %43 = tpu.matmul %41, %42, %cst_43 {dimension_numbers = #tpu.dot_dimension_numbers<[2], [1], [1], [2], [0, 0, 0, 1, 1, 2], [0], [0]>} : vector<4x128x32xbf16>, vector<4x32x64xbf16>, vector<4x128x64xf32> -> vector<4x128x64xf32>
      %cst_44 = arith.constant dense<0.000000e+00> : vector<128x64xf32>
      %44 = vector.multi_reduction <add>, %43, %cst_44 [0] : vector<4x128x64xf32> to vector<128x64xf32>
      %c0_45 = arith.constant 0 : index
      %c0_46 = arith.constant 0 : index
      %45 = vector.load %arg8[%c0_45, %c0_46] : memref<1x64xf32, #tpu.memory_space<vmem>>, vector<1x64xf32>
      %46 = vector.broadcast %45 : vector<1x64xf32> to vector<128x64xf32>
      %47 = arith.addf %44, %46 : vector<128x64xf32>
      %c0_47 = arith.constant 0 : index
      %c0_48 = arith.constant 0 : index
      %c0_49 = arith.constant 0 : index
      %48 = vector.load %arg9[%c0_47, %c0_48, %c0_49] : memref<1x128x64xf32, #tpu.memory_space<vmem>>, vector<1x128x64xf32>
      %49 = vector.shape_cast %48 : vector<1x128x64xf32> to vector<128x64xf32>
      %50 = vector.shape_cast %47 : vector<128x64xf32> to vector<1x128x64xf32>
      tpu.vector_store %arg9[%c0_47, %c0_48, %c0_49], %50 {strides = array<i32>} : memref<1x128x64xf32, #tpu.memory_space<vmem>>, vector<1x128x64xf32>,
    } else {
    }
    return
  }
  func.func @transform_0(%arg0: i32, %arg1: i32, %arg2: i32) -> (i32, i32, i32, i32) {
    %c0_i32 = arith.constant 0 : i32
    %c0_i32_0 = arith.constant 0 : i32
    %c0_i32_1 = arith.constant 0 : i32
    return %arg0, %c0_i32, %arg1, %c0_i32_0 : i32, i32, i32, i32
  }
  func.func @transform_1(%arg0: i32, %arg1: i32, %arg2: i32) -> (i32, i32, i32, i32) {
    %c0_i32 = arith.constant 0 : i32
    %c0_i32_0 = arith.constant 0 : i32
    %c0_i32_1 = arith.constant 0 : i32
    return %arg0, %c0_i32, %arg2, %c0_i32_0 : i32, i32, i32, i32
  }
  func.func @transform_2(%arg0: i32, %arg1: i32, %arg2: i32) -> (i32, i32, i32, i32) {
    %c0_i32 = arith.constant 0 : i32
    %c0_i32_0 = arith.constant 0 : i32
    %c0_i32_1 = arith.constant 0 : i32
    return %arg0, %c0_i32, %arg2, %c0_i32_0 : i32, i32, i32, i32
  }
  func.func @transform_3(%arg0: i32, %arg1: i32, %arg2: i32) -> (i32, i32) {
    %c0_i32 = arith.constant 0 : i32
    %c0_i32_0 = arith.constant 0 : i32
    return %c0_i32, %arg2 : i32, i32
  }
  func.func @transform_4(%arg0: i32, %arg1: i32, %arg2: i32) -> (i32, i32, i32) {
    %c0_i32 = arith.constant 0 : i32
    %c0_i32_0 = arith.constant 0 : i32
    %c0_i32_1 = arith.constant 0 : i32
    %c0_i32_2 = arith.constant 0 : i32
    return %c0_i32, %c0_i32_0, %c0_i32_1 : i32, i32, i32
  }
  func.func @transform_5(%arg0: i32, %arg1: i32, %arg2: i32) -> (i32, i32) {
    %c0_i32 = arith.constant 0 : i32
    %c0_i32_0 = arith.constant 0 : i32
    %c0_i32_1 = arith.constant 0 : i32
    return %c0_i32, %c0_i32_0 : i32, i32
  }
  func.func @transform_6(%arg0: i32, %arg1: i32, %arg2: i32) -> (i32, i32, i32) {
    %c0_i32 = arith.constant 0 : i32
    %c0_i32_0 = arith.constant 0 : i32
    return %arg0, %arg1, %c0_i32 : i32, i32, i32
  }
}

</mosaic_0001>

<llo_original>
// kernel: tpu_custom_call.1
$region0: #{tpu_custom_call.1}
  #allocation0 [shape = 'u32[]', space=smem, size = 0x4, offset = 0x4, fixed_abs, tag = 'smem constant byte address 0x4 - core index']
  #allocation1 [shape = 'u32[72,128]{1,0:T(1,128)}', space=vmem, size = 0x9000, scoped, tag = 'internal scratch']
  #allocation2 [shape = 'f32[4,128,1]{2,1,0:T(8,128)}', space=vmem, size = 0x40000, scoped, tag = 'scratch operand']
  #allocation3 [shape = 'f32[4,128,1]{2,1,0:T(8,128)}', space=vmem, size = 0x40000, scoped, tag = 'scratch operand']
  #allocation4 [shape = 'f32[4,128,32]{2,1,0:T(8,128)}', space=vmem, size = 0x40000, scoped, tag = 'scratch operand']
  %s0 = inlined_call_operand.vmem [shape: bf16[2,4,384,32], index: 0, kind: input, shape index: {}]
  %s1 = inlined_call_operand.vmem [shape: bf16[2,4,384,32], index: 1, kind: input, shape index: {}]
  %s2 = inlined_call_operand.vmem [shape: bf16[2,4,384,32], index: 2, kind: input, shape index: {}]
  %s3 = inlined_call_operand.vmem [shape: f32[1,384], index: 3, kind: input, shape index: {}]
  %s4 = inlined_call_operand.vmem [shape: bf16[4,32,64], index: 4, kind: input, shape index: {}]
  %s5 = inlined_call_operand.vmem [shape: f32[1,64], index: 5, kind: input, shape index: {}]
  %s6 = inlined_call_operand.vmem [shape: f32[2,384,64], index: 6, kind: output, shape index: {}]
  %s7 = sld [smem:[#allocation0]]
  $region188: #{tpu_custom_call.1} parent=0
    _
  %s9 = ssub.s32 1, %s7
  %s10 = scalar_select 0, %s9, %s7
  $region1: #{tpu_custom_call.1} parent=0
    #allocation5 [shape = 'u8[262144]{0}', space=vmem, size = 0x40000, scoped, tag = 'input window, operand 0']
    #allocation6 [shape = 'u8[262144]{0}', space=vmem, size = 0x40000, scoped, tag = 'input window, operand 1']
    #allocation7 [shape = 'u8[262144]{0}', space=vmem, size = 0x40000, scoped, tag = 'input window, operand 2']
    loop: start=0, step=1, limit=20
    $region2: #{tpu_custom_call.1} parent=1 // loop_pre_header
      _
    $region3: #{tpu_custom_call.1} parent=1 // loop_header
      %s12 = sphi 0, %s16
      %p13 = scmp.ge.s32.totalorder %s12, 20
      %s19 = sphi 0, %s38
      %s20 = sphi 0, %s34
      %s21 = sphi 0, %s30
      %s22 = sphi 0, %s19
      %s23 = sphi 0, %s20
      %s24 = sphi 0, %s21
      %s25 = sphi 0, %s22
      %s26 = sphi 0, %s23
      %s27 = sphi 0, %s24
      %s43 = sphi 0, %s45
      %s46 = sphi 0, %s43
      %s47 = sphi 0, %s46
      %s63 = sphi 0, %s47
      %s71 = sphi 0, %s73
      %s74 = sphi 0, %s71
      %s75 = sphi 0, %s74
      %s91 = sphi 0, %s75
      %s99 = sphi 0, %s101
      %s102 = sphi 0, %s99
      %s103 = sphi 0, %s102
      %s119 = sphi 0, %s103
      %s125 = sphi 0, %s127
      %s128 = sphi 0, %s125
      %s129 = sphi 0, %s128
      %s145 = sphi 0, %s129
      %s149 = sphi 0, %s149
      %s151 = sphi 0, %s149
      %s152 = sphi 0, %s151
      %s166 = sphi 0, %s152
      %s170 = sphi 0, %s170
      %s172 = sphi 0, %s170
      %s173 = sphi 0, %s172
      %s187 = sphi 0, %s173
      %s195 = sphi 0, %s197
      %s198 = sphi 0, %s195
      %s199 = sphi 0, %s198
      %s215 = sphi 0, %s199
    $region4: #{tpu_custom_call.1} parent=1 // loop_header_branch
      %15 = sbr.rel (%p13) target = $region8
    $region5: #{tpu_custom_call.1} parent=1 // loop_body
      %s17 = ssub.s32 %s12, 1
      %s18 = ssub.s32 %s12, 2
      %s28 = sadd.s32 1, %s21
      %p29 = scmp.ge.s32.totalorder %s28, 3
      %s30 = scalar_select %p29, 0, %s28
      %s31 = sadd.s32 1, %s20
      %s32 = scalar_select %p29, %s31, %s20
      %p33 = scmp.ge.s32.totalorder %s32, 3
      %s34 = scalar_select %p33, 0, %s32
      %s35 = sadd.s32 1, %s19
      %s36 = scalar_select %p33, %s35, %s19
      %p37 = scmp.ge.s32.totalorder %s36, 2
      %s38 = scalar_select %p37, 0, %s36
      %s39 = ssub.s32 %s19, %s38
      %s40 = ssub.s32 %s20, %s34
      %s41 = sor.u32 %s39, %s40
      %p42 = scmp.eq.s32.totalorder %s41, 0
      %s44 = sadd.s32 %s43, 1
      %s45 = scalar_select %p42, %s43, %s44
      %p48 = pneg %p42
      %p49 = scmp.eq.s32.totalorder %s12, 17
      %p50 = por %p48, %p49
      %p51 = scmp.ne.s32.totalorder %s43, %s46
      %p52 = scmp.eq.s32.totalorder %s12, 0
      %p53 = por %p51, %p52
      %p54 = scmp.ne.s32.totalorder %s43, %s46
      %p55 = scmp.eq.s32.totalorder %s17, 17
      %p56 = por %p54, %p55
      %p57 = scmp.ne.s32.totalorder %s46, %s47
      %p58 = scmp.eq.s32.totalorder %s17, 0
      %p59 = por %p57, %p58
      %p60 = scmp.ne.s32.totalorder %s46, %s47
      %p61 = scmp.eq.s32.totalorder %s18, 17
      %p62 = por %p60, %p61
      %p64 = scmp.ne.s32.totalorder %s47, %s63
      %p65 = scmp.eq.s32.totalorder %s18, 0
      %p66 = por %p64, %p65
      %s67 = ssub.s32 %s19, %s38
      %s68 = ssub.s32 %s21, %s30
      %s69 = sor.u32 %s67, %s68
      %p70 = scmp.eq.s32.totalorder %s69, 0
      %s72 = sadd.s32 %s71, 1
      %s73 = scalar_select %p70, %s71, %s72
      %p76 = pneg %p70
      %p77 = scmp.eq.s32.totalorder %s12, 17
      %p78 = por %p76, %p77
      %p79 = scmp.ne.s32.totalorder %s71, %s74
      %p80 = scmp.eq.s32.totalorder %s12, 0
      %p81 = por %p79, %p80
      %p82 = scmp.ne.s32.totalorder %s71, %s74
      %p83 = scmp.eq.s32.totalorder %s17, 17
      %p84 = por %p82, %p83
      %p85 = scmp.ne.s32.totalorder %s74, %s75
      %p86 = scmp.eq.s32.totalorder %s17, 0
      %p87 = por %p85, %p86
      %p88 = scmp.ne.s32.totalorder %s74, %s75
      %p89 = scmp.eq.s32.totalorder %s18, 17
      %p90 = por %p88, %p89
      %p92 = scmp.ne.s32.totalorder %s75, %s91
      %p93 = scmp.eq.s32.totalorder %s18, 0
      %p94 = por %p92, %p93
      %s95 = ssub.s32 %s19, %s38
      %s96 = ssub.s32 %s21, %s30
      %s97 = sor.u32 %s95, %s96
      %p98 = scmp.eq.s32.totalorder %s97, 0
      %s100 = sadd.s32 %s99, 1
      %s101 = scalar_select %p98, %s99, %s100
      %p104 = pneg %p98
      %p105 = scmp.eq.s32.totalorder %s12, 17
      %p106 = por %p104, %p105
      %p107 = scmp.ne.s32.totalorder %s99, %s102
      %p108 = scmp.eq.s32.totalorder %s12, 0
      %p109 = por %p107, %p108
      %p110 = scmp.ne.s32.totalorder %s99, %s102
      %p111 = scmp.eq.s32.totalorder %s17, 17
      %p112 = por %p110, %p111
      %p113 = scmp.ne.s32.totalorder %s102, %s103
      %p114 = scmp.eq.s32.totalorder %s17, 0
      %p115 = por %p113, %p114
      %p116 = scmp.ne.s32.totalorder %s102, %s103
      %p117 = scmp.eq.s32.totalorder %s18, 17
      %p118 = por %p116, %p117
      %p120 = scmp.ne.s32.totalorder %s103, %s119
      %p121 = scmp.eq.s32.totalorder %s18, 0
      %p122 = por %p120, %p121
      %s123 = ssub.s32 %s21, %s30
      %p124 = scmp.eq.s32.totalorder %s123, 0
      %s126 = sadd.s32 %s125, 1
      %s127 = scalar_select %p124, %s125, %s126
      %p130 = pneg %p124
      %p131 = scmp.eq.s32.totalorder %s12, 17
      %p132 = por %p130, %p131
      %p133 = scmp.ne.s32.totalorder %s125, %s128
      %p134 = scmp.eq.s32.totalorder %s12, 0
      %p135 = por %p133, %p134
      %p136 = scmp.ne.s32.totalorder %s125, %s128
      %p137 = scmp.eq.s32.totalorder %s17, 17
      %p138 = por %p136, %p137
      %p139 = scmp.ne.s32.totalorder %s128, %s129
      %p140 = scmp.eq.s32.totalorder %s17, 0
      %p141 = por %p139, %p140
      %p142 = scmp.ne.s32.totalorder %s128, %s129
      %p143 = scmp.eq.s32.totalorder %s18, 17
      %p144 = por %p142, %p143
      %p146 = scmp.ne.s32.totalorder %s129, %s145
      %p147 = scmp.eq.s32.totalorder %s18, 0
      %p148 = por %p146, %p147
      %s150 = sadd.s32 %s149, 1
      %p153 = scmp.eq.s32.totalorder %s12, 17
      %p154 = scmp.ne.s32.totalorder %s149, %s151
      %p155 = scmp.eq.s32.totalorder %s12, 0
      %p156 = por %p154, %p155
      %p157 = scmp.ne.s32.totalorder %s149, %s151
      %p158 = scmp.eq.s32.totalorder %s17, 17
      %p159 = por %p157, %p158
      %p160 = scmp.ne.s32.totalorder %s151, %s152
      %p161 = scmp.eq.s32.totalorder %s17, 0
      %p162 = por %p160, %p161
      %p163 = scmp.ne.s32.totalorder %s151, %s152
      %p164 = scmp.eq.s32.totalorder %s18, 17
      %p165 = por %p163, %p164
      %p167 = scmp.ne.s32.totalorder %s152, %s166
      %p168 = scmp.eq.s32.totalorder %s18, 0
      %p169 = por %p167, %p168
      %s171 = sadd.s32 %s170, 1
      %p174 = scmp.eq.s32.totalorder %s12, 17
      %p175 = scmp.ne.s32.totalorder %s170, %s172
      %p176 = scmp.eq.s32.totalorder %s12, 0
      %p177 = por %p175, %p176
      %p178 = scmp.ne.s32.totalorder %s170, %s172
      %p179 = scmp.eq.s32.totalorder %s17, 17
      %p180 = por %p178, %p179
      %p181 = scmp.ne.s32.totalorder %s172, %s173
      %p182 = scmp.eq.s32.totalorder %s17, 0
      %p183 = por %p181, %p182
      %p184 = scmp.ne.s32.totalorder %s172, %s173
      %p185 = scmp.eq.s32.totalorder %s18, 17
      %p186 = por %p184, %p185
      %p188 = scmp.ne.s32.totalorder %s173, %s187
      %p189 = scmp.eq.s32.totalorder %s18, 0
      %p190 = por %p188, %p189
      %s191 = ssub.s32 %s19, %s38
      %s192 = ssub.s32 %s20, %s34
      %s193 = sor.u32 %s191, %s192
      %p194 = scmp.eq.s32.totalorder %s193, 0
      %s196 = sadd.s32 %s195, 1
      %s197 = scalar_select %p194, %s195, %s196
      %p200 = pneg %p194
      %p201 = scmp.eq.s32.totalorder %s12, 17
      %p202 = por %p200, %p201
      %p203 = scmp.ne.s32.totalorder %s195, %s198
      %p204 = scmp.eq.s32.totalorder %s12, 0
      %p205 = por %p203, %p204
      %p206 = scmp.ne.s32.totalorder %s195, %s198
      %p207 = scmp.eq.s32.totalorder %s17, 17
      %p208 = por %p206, %p207
      %p209 = scmp.ne.s32.totalorder %s198, %s199
      %p210 = scmp.eq.s32.totalorder %s17, 0
      %p211 = por %p209, %p210
      %p212 = scmp.ne.s32.totalorder %s198, %s199
      %p213 = scmp.eq.s32.totalorder %s18, 17
      %p214 = por %p212, %p213
      %p216 = scmp.ne.s32.totalorder %s199, %s215
      %p217 = scmp.eq.s32.totalorder %s18, 0
      %p218 = por %p216, %p217
      %p219 = scmp.le.s32.totalorder 1, %s12
      %p220 = scmp.lt.s32.totalorder %s12, 19
      %p221 = pnand %p219, %p220
      %p222 = pneg %p221
      // Predicated region
      $region9: #{tpu_custom_call.1} parent=5 // pred_check
        _
      $region10: #{tpu_custom_call.1} parent=5 // pred_check_branch
        %224 = sbr.rel (%p221) target = $region12
      $region11: #{tpu_custom_call.1} parent=5 // pred_region
        %s225 = ssub.s32 %s12, 1
        // Predicated region
        $region13: #{tpu_custom_call.1} parent=11 // pred_check
          %p226 = pneg %p162
        $region14: #{tpu_custom_call.1} parent=11 // pred_check_branch
          %228 = sbr.rel (%p226) target = $region16
        $region15: #{tpu_custom_call.1} parent=11 // pred_region
          _
        $region16: #{tpu_custom_call.1} parent=11 // pred_fallthru
          _
        // Predicated region
        $region17: #{tpu_custom_call.1} parent=11 // pred_check
          %p229 = pneg %p183
        $region18: #{tpu_custom_call.1} parent=11 // pred_check_branch
          %231 = sbr.rel (%p229) target = $region20
        $region19: #{tpu_custom_call.1} parent=11 // pred_region
          _
        $region20: #{tpu_custom_call.1} parent=11 // pred_fallthru
          _
      $region12: #{tpu_custom_call.1} parent=5 // pred_fallthru
        _
      %p232 = scmp.lt.s32.totalorder %s12, 18
      // Predicated region
      $region21: #{tpu_custom_call.1} parent=5 // pred_check
        %p233 = pneg %p232
      $region22: #{tpu_custom_call.1} parent=5 // pred_check_branch
        %235 = sbr.rel (%p233) target = $region24
      $region23: #{tpu_custom_call.1} parent=5 // pred_region
        // Predicated region
        $region25: #{tpu_custom_call.1} parent=23 // pred_check
          %p236 = pneg %p53
        $region26: #{tpu_custom_call.1} parent=23 // pred_check_branch
          %238 = sbr.rel (%p236) target = $region28
        $region27: #{tpu_custom_call.1} parent=23 // pred_region
          %s239 = sand.u32 %s43, 1
          %s240 = sand.u32 %s43, 1
          %s241 = smul.addr %s240, 256
          %s242 = scalar_lea.vmem [#allocation5], %s241
          %s243 = smul.u32 16, %s20
          %s244 = smul.addr %s19, 192
          %s245 = sadd.s32 %s243, %s244
          %s246 = smul.addr %s245, 4
          %s247 = scalar_lea.vmem %s0, %s246
          // Predicated region
          $region29: #{tpu_custom_call.1} parent=27 // pred_check
            _
          $region30: #{tpu_custom_call.1} parent=27 // pred_check_branch
            %249 = sbr.rel (0) target = $region32
          $region31: #{tpu_custom_call.1} parent=27 // pred_region
            // Predicated region
            $region33: #{tpu_custom_call.1} parent=31 // pred_check
              _
            $region34: #{tpu_custom_call.1} parent=31 // pred_check_branch
              %251 = sbr.rel target = $region36
            $region35: #{tpu_custom_call.1} parent=31 // pred_region
              // Predicated region
              $region48: #{tpu_custom_call.1} parent=35 // pred_check
                _
              $region49: #{tpu_custom_call.1} parent=35 // pred_check_branch
                %393 = sbr.rel (0) target = $region51
              $region50: #{tpu_custom_call.1} parent=35 // pred_region
                loop: start=0, step=1, limit=1
                $region52: #{tpu_custom_call.1} parent=50 // loop_pre_header
                  _
                $region53: #{tpu_custom_call.1} parent=50 // loop_header
                  %s395 = sphi 0, %s399
                  %p396 = scmp.ge.s32.totalorder %s395, 1
                  %s400 = sphi %s247, %s247
                  %s401 = sphi %s242, %s242
                $region54: #{tpu_custom_call.1} parent=50 // loop_header_branch
                  %398 = sbr.rel (%p396) target = $region58
                $region55: #{tpu_custom_call.1} parent=50 // loop_body
                  _
                $region56: #{tpu_custom_call.1} parent=50 // loop_footer
                  %s399 = sadd.s32 1, %s395
                $region57: #{tpu_custom_call.1} parent=50 // loop_footer_branch
                  %394 = sbr.rel target = $region53
                $region58: #{tpu_custom_call.1} parent=50 // loop_exit
                  _
                %s403 = ssub.s32 16, 1
                loop: start=0, step=1, limit=1
                $region59: #{tpu_custom_call.1} parent=50 // loop_pre_header
                  _
                $region60: #{tpu_custom_call.1} parent=50 // loop_header
                  %s405 = sphi 0, %s409
                  %p406 = scmp.ge.s32.totalorder %s405, 1
                  %s410 = sphi %s247, %s247
                  %s411 = sphi %s242, %s242
                $region61: #{tpu_custom_call.1} parent=50 // loop_header_branch
                  %408 = sbr.rel (%p406) target = $region65
                $region62: #{tpu_custom_call.1} parent=50 // loop_body
                  %v412 = vld [vmem:[%s410] sm:%s403]
                  %413 = vst [vmem:[%s411] sm:%s403] %v412
                  %v414 = vld [vmem:[%s410 + $0x4] sm:%s403]
                  %415 = vst [vmem:[%s411 + $0x4] sm:%s403] %v414
                  %v416 = vld [vmem:[%s410 + $0x8] sm:%s403]
                  %417 = vst [vmem:[%s411 + $0x8] sm:%s403] %v416
                  %v418 = vld [vmem:[%s410 + $0xc] sm:%s403]
                  %419 = vst [vmem:[%s411 + $0xc] sm:%s403] %v418
                  %v420 = vld [vmem:[%s410 + $0x10] sm:%s403]
                  %421 = vst [vmem:[%s411 + $0x10] sm:%s403] %v420
                  %v422 = vld [vmem:[%s410 + $0x14] sm:%s403]
                  %423 = vst [vmem:[%s411 + $0x14] sm:%s403] %v422
                  %v424 = vld [vmem:[%s410 + $0x18] sm:%s403]
                  %425 = vst [vmem:[%s411 + $0x18] sm:%s403] %v424
                  %v426 = vld [vmem:[%s410 + $0x1c] sm:%s403]
                  %427 = vst [vmem:[%s411 + $0x1c] sm:%s403] %v426
                  %v428 = vld [vmem:[%s410 + $0x20] sm:%s403]
                  %429 = vst [vmem:[%s411 + $0x20] sm:%s403] %v428
                  %v430 = vld [vmem:[%s410 + $0x24] sm:%s403]
                  %431 = vst [vmem:[%s411 + $0x24] sm:%s403] %v430
                  %v432 = vld [vmem:[%s410 + $0x28] sm:%s403]
                  %433 = vst [vmem:[%s411 + $0x28] sm:%s403] %v432
                  %v434 = vld [vmem:[%s410 + $0x2c] sm:%s403]
                  %435 = vst [vmem:[%s411 + $0x2c] sm:%s403] %v434
                  %v436 = vld [vmem:[%s410 + $0x30] sm:%s403]
                  %437 = vst [vmem:[%s411 + $0x30] sm:%s403] %v436
                  %v438 = vld [vmem:[%s410 + $0x34] sm:%s403]
                  %439 = vst [vmem:[%s411 + $0x34] sm:%s403] %v438
                  %v440 = vld [vmem:[%s410 + $0x38] sm:%s403]
                  %441 = vst [vmem:[%s411 + $0x38] sm:%s403] %v440
                  %v442 = vld [vmem:[%s410 + $0x3c] sm:%s403]
                  %443 = vst [vmem:[%s411 + $0x3c] sm:%s403] %v442
                  %v444 = vld [vmem:[%s410 + $0xc0] sm:%s403]
                  %445 = vst [vmem:[%s411 + $0x40] sm:%s403] %v444
                  %v446 = vld [vmem:[%s410 + $0xc4] sm:%s403]
                  %447 = vst [vmem:[%s411 + $0x44] sm:%s403] %v446
                  %v448 = vld [vmem:[%s410 + $0xc8] sm:%s403]
                  %449 = vst [vmem:[%s411 + $0x48] sm:%s403] %v448
                  %v450 = vld [vmem:[%s410 + $0xcc] sm:%s403]
                  %451 = vst [vmem:[%s411 + $0x4c] sm:%s403] %v450
                  %v452 = vld [vmem:[%s410 + $0xd0] sm:%s403]
                  %453 = vst [vmem:[%s411 + $0x50] sm:%s403] %v452
                  %v454 = vld [vmem:[%s410 + $0xd4] sm:%s403]
                  %455 = vst [vmem:[%s411 + $0x54] sm:%s403] %v454
                  %v456 = vld [vmem:[%s410 + $0xd8] sm:%s403]
                  %457 = vst [vmem:[%s411 + $0x58] sm:%s403] %v456
                  %v458 = vld [vmem:[%s410 + $0xdc] sm:%s403]
                  %459 = vst [vmem:[%s411 + $0x5c] sm:%s403] %v458
                  %v460 = vld [vmem:[%s410 + $0xe0] sm:%s403]
                  %461 = vst [vmem:[%s411 + $0x60] sm:%s403] %v460
                  %v462 = vld [vmem:[%s410 + $0xe4] sm:%s403]
                  %463 = vst [vmem:[%s411 + $0x64] sm:%s403] %v462
                  %v464 = vld [vmem:[%s410 + $0xe8] sm:%s403]
                  %465 = vst [vmem:[%s411 + $0x68] sm:%s403] %v464
                  %v466 = vld [vmem:[%s410 + $0xec] sm:%s403]
                  %467 = vst [vmem:[%s411 + $0x6c] sm:%s403] %v466
                  %v468 = vld [vmem:[%s410 + $0xf0] sm:%s403]
                  %469 = vst [vmem:[%s411 + $0x70] sm:%s403] %v468
                  %v470 = vld [vmem:[%s410 + $0xf4] sm:%s403]
                  %471 = vst [vmem:[%s411 + $0x74] sm:%s403] %v470
                  %v472 = vld [vmem:[%s410 + $0xf8] sm:%s403]
                  %473 = vst [vmem:[%s411 + $0x78] sm:%s403] %v472
                  %v474 = vld [vmem:[%s410 + $0xfc] sm:%s403]
                  %475 = vst [vmem:[%s411 + $0x7c] sm:%s403] %v474
                  %v476 = vld [vmem:[%s410 + $0x180] sm:%s403]
                  %477 = vst [vmem:[%s411 + $0x80] sm:%s403] %v476
                  %v478 = vld [vmem:[%s410 + $0x184] sm:%s403]
                  %479 = vst [vmem:[%s411 + $0x84] sm:%s403] %v478
                  %v480 = vld [vmem:[%s410 + $0x188] sm:%s403]
                  %481 = vst [vmem:[%s411 + $0x88] sm:%s403] %v480
                  %v482 = vld [vmem:[%s410 + $0x18c] sm:%s403]
                  %483 = vst [vmem:[%s411 + $0x8c] sm:%s403] %v482
                  %v484 = vld [vmem:[%s410 + $0x190] sm:%s403]
                  %485 = vst [vmem:[%s411 + $0x90] sm:%s403] %v484
                  %v486 = vld [vmem:[%s410 + $0x194] sm:%s403]
                  %487 = vst [vmem:[%s411 + $0x94] sm:%s403] %v486
                  %v488 = vld [vmem:[%s410 + $0x198] sm:%s403]
                  %489 = vst [vmem:[%s411 + $0x98] sm:%s403] %v488
                  %v490 = vld [vmem:[%s410 + $0x19c] sm:%s403]
                  %491 = vst [vmem:[%s411 + $0x9c] sm:%s403] %v490
                  %v492 = vld [vmem:[%s410 + $0x1a0] sm:%s403]
                  %493 = vst [vmem:[%s411 + $0xa0] sm:%s403] %v492
                  %v494 = vld [vmem:[%s410 + $0x1a4] sm:%s403]
                  %495 = vst [vmem:[%s411 + $0xa4] sm:%s403] %v494
                  %v496 = vld [vmem:[%s410 + $0x1a8] sm:%s403]
                  %497 = vst [vmem:[%s411 + $0xa8] sm:%s403] %v496
                  %v498 = vld [vmem:[%s410 + $0x1ac] sm:%s403]
                  %499 = vst [vmem:[%s411 + $0xac] sm:%s403] %v498
                  %v500 = vld [vmem:[%s410 + $0x1b0] sm:%s403]
                  %501 = vst [vmem:[%s411 + $0xb0] sm:%s403] %v500
                  %v502 = vld [vmem:[%s410 + $0x1b4] sm:%s403]
                  %503 = vst [vmem:[%s411 + $0xb4] sm:%s403] %v502
                  %v504 = vld [vmem:[%s410 + $0x1b8] sm:%s403]
                  %505 = vst [vmem:[%s411 + $0xb8] sm:%s403] %v504
                  %v506 = vld [vmem:[%s410 + $0x1bc] sm:%s403]
                  %507 = vst [vmem:[%s411 + $0xbc] sm:%s403] %v506
                  %v508 = vld [vmem:[%s410 + $0x240] sm:%s403]
                  %509 = vst [vmem:[%s411 + $0xc0] sm:%s403] %v508
                  %v510 = vld [vmem:[%s410 + $0x244] sm:%s403]
                  %511 = vst [vmem:[%s411 + $0xc4] sm:%s403] %v510
                  %v512 = vld [vmem:[%s410 + $0x248] sm:%s403]
                  %513 = vst [vmem:[%s411 + $0xc8] sm:%s403] %v512
                  %v514 = vld [vmem:[%s410 + $0x24c] sm:%s403]
                  %515 = vst [vmem:[%s411 + $0xcc] sm:%s403] %v514
                  %v516 = vld [vmem:[%s410 + $0x250] sm:%s403]
                  %517 = vst [vmem:[%s411 + $0xd0] sm:%s403] %v516
                  %v518 = vld [vmem:[%s410 + $0x254] sm:%s403]
                  %519 = vst [vmem:[%s411 + $0xd4] sm:%s403] %v518
                  %v520 = vld [vmem:[%s410 + $0x258] sm:%s403]
                  %521 = vst [vmem:[%s411 + $0xd8] sm:%s403] %v520
                  %v522 = vld [vmem:[%s410 + $0x25c] sm:%s403]
                  %523 = vst [vmem:[%s411 + $0xdc] sm:%s403] %v522
                  %v524 = vld [vmem:[%s410 + $0x260] sm:%s403]
                  %525 = vst [vmem:[%s411 + $0xe0] sm:%s403] %v524
                  %v526 = vld [vmem:[%s410 + $0x264] sm:%s403]
                  %527 = vst [vmem:[%s411 + $0xe4] sm:%s403] %v526
                  %v528 = vld [vmem:[%s410 + $0x268] sm:%s403]
                  %529 = vst [vmem:[%s411 + $0xe8] sm:%s403] %v528
                  %v530 = vld [vmem:[%s410 + $0x26c] sm:%s403]
                  %531 = vst [vmem:[%s411 + $0xec] sm:%s403] %v530
                  %v532 = vld [vmem:[%s410 + $0x270] sm:%s403]
                  %533 = vst [vmem:[%s411 + $0xf0] sm:%s403] %v532
                  %v534 = vld [vmem:[%s410 + $0x274] sm:%s403]
                  %535 = vst [vmem:[%s411 + $0xf4] sm:%s403] %v534
                  %v536 = vld [vmem:[%s410 + $0x278] sm:%s403]
                  %537 = vst [vmem:[%s411 + $0xf8] sm:%s403] %v536
                  %v538 = vld [vmem:[%s410 + $0x27c] sm:%s403]
                  %539 = vst [vmem:[%s411 + $0xfc] sm:%s403] %v538
                $region63: #{tpu_custom_call.1} parent=50 // loop_footer
                  %s409 = sadd.s32 1, %s405
                $region64: #{tpu_custom_call.1} parent=50 // loop_footer_branch
                  %404 = sbr.rel target = $region60
                $region65: #{tpu_custom_call.1} parent=50 // loop_exit
                  _
              $region51: #{tpu_custom_call.1} parent=35 // pred_fallthru
                _
            $region36: #{tpu_custom_call.1} parent=31 // pred_fallthru
              _
            // Predicated region
            $region37: #{tpu_custom_call.1} parent=31 // pred_check
              _
            $region38: #{tpu_custom_call.1} parent=31 // pred_check_branch
              %253 = sbr.rel (0) target = $region40
            $region39: #{tpu_custom_call.1} parent=31 // pred_region
              %s255 = ssub.s32 16, 1
              loop: start=0, step=1, limit=1
              $region41: #{tpu_custom_call.1} parent=39 // loop_pre_header
                _
              $region42: #{tpu_custom_call.1} parent=39 // loop_header
                %s257 = sphi 0, %s261
                %p258 = scmp.ge.s32.totalorder %s257, 1
                %s262 = sphi %s247, %s247
                %s263 = sphi %s242, %s242
              $region43: #{tpu_custom_call.1} parent=39 // loop_header_branch
                %260 = sbr.rel (%p258) target = $region47
              $region44: #{tpu_custom_call.1} parent=39 // loop_body
                %v264 = vld [vmem:[%s262] sm:%s255]
                %265 = vst [vmem:[%s263] sm:%s255] %v264
                %v266 = vld [vmem:[%s262 + $0x4] sm:%s255]
                %267 = vst [vmem:[%s263 + $0x4] sm:%s255] %v266
                %v268 = vld [vmem:[%s262 + $0x8] sm:%s255]
                %269 = vst [vmem:[%s263 + $0x8] sm:%s255] %v268
                %v270 = vld [vmem:[%s262 + $0xc] sm:%s255]
                %271 = vst [vmem:[%s263 + $0xc] sm:%s255] %v270
                %v272 = vld [vmem:[%s262 + $0x10] sm:%s255]
                %273 = vst [vmem:[%s263 + $0x10] sm:%s255] %v272
                %v274 = vld [vmem:[%s262 + $0x14] sm:%s255]
                %275 = vst [vmem:[%s263 + $0x14] sm:%s255] %v274
                %v276 = vld [vmem:[%s262 + $0x18] sm:%s255]
                %277 = vst [vmem:[%s263 + $0x18] sm:%s255] %v276
                %v278 = vld [vmem:[%s262 + $0x1c] sm:%s255]
                %279 = vst [vmem:[%s263 + $0x1c] sm:%s255] %v278
                %v280 = vld [vmem:[%s262 + $0x20] sm:%s255]
                %281 = vst [vmem:[%s263 + $0x20] sm:%s255] %v280
                %v282 = vld [vmem:[%s262 + $0x24] sm:%s255]
                %283 = vst [vmem:[%s263 + $0x24] sm:%s255] %v282
                %v284 = vld [vmem:[%s262 + $0x28] sm:%s255]
                %285 = vst [vmem:[%s263 + $0x28] sm:%s255] %v284
                %v286 = vld [vmem:[%s262 + $0x2c] sm:%s255]
                %287 = vst [vmem:[%s263 + $0x2c] sm:%s255] %v286
                %v288 = vld [vmem:[%s262 + $0x30] sm:%s255]
                %289 = vst [vmem:[%s263 + $0x30] sm:%s255] %v288
                %v290 = vld [vmem:[%s262 + $0x34] sm:%s255]
                %291 = vst [vmem:[%s263 + $0x34] sm:%s255] %v290
                %v292 = vld [vmem:[%s262 + $0x38] sm:%s255]
                %293 = vst [vmem:[%s263 + $0x38] sm:%s255] %v292
                %v294 = vld [vmem:[%s262 + $0x3c] sm:%s255]
                %295 = vst [vmem:[%s263 + $0x3c] sm:%s255] %v294
                %v296 = vld [vmem:[%s262 + $0xc0] sm:%s255]
                %297 = vst [vmem:[%s263 + $0x40] sm:%s255] %v296
                %v298 = vld [vmem:[%s262 + $0xc4] sm:%s255]
                %299 = vst [vmem:[%s263 + $0x44] sm:%s255] %v298
                %v300 = vld [vmem:[%s262 + $0xc8] sm:%s255]
                %301 = vst [vmem:[%s263 + $0x48] sm:%s255] %v300
                %v302 = vld [vmem:[%s262 + $0xcc] sm:%s255]
                %303 = vst [vmem:[%s263 + $0x4c] sm:%s255] %v302
                %v304 = vld [vmem:[%s262 + $0xd0] sm:%s255]
                %305 = vst [vmem:[%s263 + $0x50] sm:%s255] %v304
                %v306 = vld [vmem:[%s262 + $0xd4] sm:%s255]
                %307 = vst [vmem:[%s263 + $0x54] sm:%s255] %v306
                %v308 = vld [vmem:[%s262 + $0xd8] sm:%s255]
                %309 = vst [vmem:[%s263 + $0x58] sm:%s255] %v308
                %v310 = vld [vmem:[%s262 + $0xdc] sm:%s255]
                %311 = vst [vmem:[%s263 + $0x5c] sm:%s255] %v310
                %v312 = vld [vmem:[%s262 + $0xe0] sm:%s255]
                %313 = vst [vmem:[%s263 + $0x60] sm:%s255] %v312
                %v314 = vld [vmem:[%s262 + $0xe4] sm:%s255]
                %315 = vst [vmem:[%s263 + $0x64] sm:%s255] %v314
                %v316 = vld [vmem:[%s262 + $0xe8] sm:%s255]
                %317 = vst [vmem:[%s263 + $0x68] sm:%s255] %v316
                %v318 = vld [vmem:[%s262 + $0xec] sm:%s255]
                %319 = vst [vmem:[%s263 + $0x6c] sm:%s255] %v318
                %v320 = vld [vmem:[%s262 + $0xf0] sm:%s255]
                %321 = vst [vmem:[%s263 + $0x70] sm:%s255] %v320
                %v322 = vld [vmem:[%s262 + $0xf4] sm:%s255]
                %323 = vst [vmem:[%s263 + $0x74] sm:%s255] %v322
                %v324 = vld [vmem:[%s262 + $0xf8] sm:%s255]
                %325 = vst [vmem:[%s263 + $0x78] sm:%s255] %v324
                %v326 = vld [vmem:[%s262 + $0xfc] sm:%s255]
                %327 = vst [vmem:[%s263 + $0x7c] sm:%s255] %v326
                %v328 = vld [vmem:[%s262 + $0x180] sm:%s255]
                %329 = vst [vmem:[%s263 + $0x80] sm:%s255] %v328
                %v330 = vld [vmem:[%s262 + $0x184] sm:%s255]
                %331 = vst [vmem:[%s263 + $0x84] sm:%s255] %v330
                %v332 = vld [vmem:[%s262 + $0x188] sm:%s255]
                %333 = vst [vmem:[%s263 + $0x88] sm:%s255] %v332
                %v334 = vld [vmem:[%s262 + $0x18c] sm:%s255]
                %335 = vst [vmem:[%s263 + $0x8c] sm:%s255] %v334
                %v336 = vld [vmem:[%s262 + $0x190] sm:%s255]
                %337 = vst [vmem:[%s263 + $0x90] sm:%s255] %v336
                %v338 = vld [vmem:[%s262 + $0x194] sm:%s255]
                %339 = vst [vmem:[%s263 + $0x94] sm:%s255] %v338
                %v340 = vld [vmem:[%s262 + $0x198] sm:%s255]
                %341 = vst [vmem:[%s263 + $0x98] sm:%s255] %v340
                %v342 = vld [vmem:[%s262 + $0x19c] sm:%s255]
                %343 = vst [vmem:[%s263 + $0x9c] sm:%s255] %v342
                %v344 = vld [vmem:[%s262 + $0x1a0] sm:%s255]
                %345 = vst [vmem:[%s263 + $0xa0] sm:%s255] %v344
                %v346 = vld [vmem:[%s262 + $0x1a4] sm:%s255]
                %347 = vst [vmem:[%s263 + $0xa4] sm:%s255] %v346
                %v348 = vld [vmem:[%s262 + $0x1a8] sm:%s255]
                %349 = vst [vmem:[%s263 + $0xa8] sm:%s255] %v348
                %v350 = vld [vmem:[%s262 + $0x1ac] sm:%s255]
                %351 = vst [vmem:[%s263 + $0xac] sm:%s255] %v350
                %v352 = vld [vmem:[%s262 + $0x1b0] sm:%s255]
                %353 = vst [vmem:[%s263 + $0xb0] sm:%s255] %v352
                %v354 = vld [vmem:[%s262 + $0x1b4] sm:%s255]
                %355 = vst [vmem:[%s263 + $0xb4] sm:%s255] %v354
                %v356 = vld [vmem:[%s262 + $0x1b8] sm:%s255]
                %357 = vst [vmem:[%s263 + $0xb8] sm:%s255] %v356
                %v358 = vld [vmem:[%s262 + $0x1bc] sm:%s255]
                %359 = vst [vmem:[%s263 + $0xbc] sm:%s255] %v358
                %v360 = vld [vmem:[%s262 + $0x240] sm:%s255]
                %361 = vst [vmem:[%s263 + $0xc0] sm:%s255] %v360
                %v362 = vld [vmem:[%s262 + $0x244] sm:%s255]
                %363 = vst [vmem:[%s263 + $0xc4] sm:%s255] %v362
                %v364 = vld [vmem:[%s262 + $0x248] sm:%s255]
                %365 = vst [vmem:[%s263 + $0xc8] sm:%s255] %v364
                %v366 = vld [vmem:[%s262 + $0x24c] sm:%s255]
                %367 = vst [vmem:[%s263 + $0xcc] sm:%s255] %v366
                %v368 = vld [vmem:[%s262 + $0x250] sm:%s255]
                %369 = vst [vmem:[%s263 + $0xd0] sm:%s255] %v368
                %v370 = vld [vmem:[%s262 + $0x254] sm:%s255]
                %371 = vst [vmem:[%s263 + $0xd4] sm:%s255] %v370
                %v372 = vld [vmem:[%s262 + $0x258] sm:%s255]
                %373 = vst [vmem:[%s263 + $0xd8] sm:%s255] %v372
                %v374 = vld [vmem:[%s262 + $0x25c] sm:%s255]
                %375 = vst [vmem:[%s263 + $0xdc] sm:%s255] %v374
                %v376 = vld [vmem:[%s262 + $0x260] sm:%s255]
                %377 = vst [vmem:[%s263 + $0xe0] sm:%s255] %v376
                %v378 = vld [vmem:[%s262 + $0x264] sm:%s255]
                %379 = vst [vmem:[%s263 + $0xe4] sm:%s255] %v378
                %v380 = vld [vmem:[%s262 + $0x268] sm:%s255]
                %381 = vst [vmem:[%s263 + $0xe8] sm:%s255] %v380
                %v382 = vld [vmem:[%s262 + $0x26c] sm:%s255]
                %383 = vst [vmem:[%s263 + $0xec] sm:%s255] %v382
                %v384 = vld [vmem:[%s262 + $0x270] sm:%s255]
                %385 = vst [vmem:[%s263 + $0xf0] sm:%s255] %v384
                %v386 = vld [vmem:[%s262 + $0x274] sm:%s255]
                %387 = vst [vmem:[%s263 + $0xf4] sm:%s255] %v386
                %v388 = vld [vmem:[%s262 + $0x278] sm:%s255]
                %389 = vst [vmem:[%s263 + $0xf8] sm:%s255] %v388
                %v390 = vld [vmem:[%s262 + $0x27c] sm:%s255]
                %391 = vst [vmem:[%s263 + $0xfc] sm:%s255] %v390
              $region45: #{tpu_custom_call.1} parent=39 // loop_footer
                %s261 = sadd.s32 1, %s257
              $region46: #{tpu_custom_call.1} parent=39 // loop_footer_branch
                %256 = sbr.rel target = $region42
              $region47: #{tpu_custom_call.1} parent=39 // loop_exit
                _
            $region40: #{tpu_custom_call.1} parent=31 // pred_fallthru
              _
          $region32: #{tpu_custom_call.1} parent=27 // pred_fallthru
            _
          %540 = vnop
        $region28: #{tpu_custom_call.1} parent=23 // pred_fallthru
          _
        // Predicated region
        $region66: #{tpu_custom_call.1} parent=23 // pred_check
          %p541 = pneg %p81
        $region67: #{tpu_custom_call.1} parent=23 // pred_check_branch
          %543 = sbr.rel (%p541) target = $region69
        $region68: #{tpu_custom_call.1} parent=23 // pred_region
          %s544 = sand.u32 %s71, 1
          %s545 = sand.u32 %s71, 1
          %s546 = smul.addr %s545, 256
          %s547 = scalar_lea.vmem [#allocation6], %s546
          %s548 = smul.u32 16, %s21
          %s549 = smul.addr %s19, 192
          %s550 = sadd.s32 %s548, %s549
          %s551 = smul.addr %s550, 4
          %s552 = scalar_lea.vmem %s1, %s551
          // Predicated region
          $region70: #{tpu_custom_call.1} parent=68 // pred_check
            _
          $region71: #{tpu_custom_call.1} parent=68 // pred_check_branch
            %554 = sbr.rel (0) target = $region73
          $region72: #{tpu_custom_call.1} parent=68 // pred_region
            // Predicated region
            $region74: #{tpu_custom_call.1} parent=72 // pred_check
              _
            $region75: #{tpu_custom_call.1} parent=72 // pred_check_branch
              %556 = sbr.rel target = $region77
            $region76: #{tpu_custom_call.1} parent=72 // pred_region
              // Predicated region
              $region89: #{tpu_custom_call.1} parent=76 // pred_check
                _
              $region90: #{tpu_custom_call.1} parent=76 // pred_check_branch
                %698 = sbr.rel (0) target = $region92
              $region91: #{tpu_custom_call.1} parent=76 // pred_region
                loop: start=0, step=1, limit=1
                $region93: #{tpu_custom_call.1} parent=91 // loop_pre_header
                  _
                $region94: #{tpu_custom_call.1} parent=91 // loop_header
                  %s700 = sphi 0, %s704
                  %p701 = scmp.ge.s32.totalorder %s700, 1
                  %s705 = sphi %s552, %s552
                  %s706 = sphi %s547, %s547
                $region95: #{tpu_custom_call.1} parent=91 // loop_header_branch
                  %703 = sbr.rel (%p701) target = $region99
                $region96: #{tpu_custom_call.1} parent=91 // loop_body
                  _
                $region97: #{tpu_custom_call.1} parent=91 // loop_footer
                  %s704 = sadd.s32 1, %s700
                $region98: #{tpu_custom_call.1} parent=91 // loop_footer_branch
                  %699 = sbr.rel target = $region94
                $region99: #{tpu_custom_call.1} parent=91 // loop_exit
                  _
                %s708 = ssub.s32 16, 1
                loop: start=0, step=1, limit=1
                $region100: #{tpu_custom_call.1} parent=91 // loop_pre_header
                  _
                $region101: #{tpu_custom_call.1} parent=91 // loop_header
                  %s710 = sphi 0, %s714
                  %p711 = scmp.ge.s32.totalorder %s710, 1
                  %s715 = sphi %s552, %s552
                  %s716 = sphi %s547, %s547
                $region102: #{tpu_custom_call.1} parent=91 // loop_header_branch
                  %713 = sbr.rel (%p711) target = $region106
                $region103: #{tpu_custom_call.1} parent=91 // loop_body
                  %v717 = vld [vmem:[%s715] sm:%s708]
                  %718 = vst [vmem:[%s716] sm:%s708] %v717
                  %v719 = vld [vmem:[%s715 + $0x4] sm:%s708]
                  %720 = vst [vmem:[%s716 + $0x4] sm:%s708] %v719
                  %v721 = vld [vmem:[%s715 + $0x8] sm:%s708]
                  %722 = vst [vmem:[%s716 + $0x8] sm:%s708] %v721
                  %v723 = vld [vmem:[%s715 + $0xc] sm:%s708]
                  %724 = vst [vmem:[%s716 + $0xc] sm:%s708] %v723
                  %v725 = vld [vmem:[%s715 + $0x10] sm:%s708]
                  %726 = vst [vmem:[%s716 + $0x10] sm:%s708] %v725
                  %v727 = vld [vmem:[%s715 + $0x14] sm:%s708]
                  %728 = vst [vmem:[%s716 + $0x14] sm:%s708] %v727
                  %v729 = vld [vmem:[%s715 + $0x18] sm:%s708]
                  %730 = vst [vmem:[%s716 + $0x18] sm:%s708] %v729
                  %v731 = vld [vmem:[%s715 + $0x1c] sm:%s708]
                  %732 = vst [vmem:[%s716 + $0x1c] sm:%s708] %v731
                  %v733 = vld [vmem:[%s715 + $0x20] sm:%s708]
                  %734 = vst [vmem:[%s716 + $0x20] sm:%s708] %v733
                  %v735 = vld [vmem:[%s715 + $0x24] sm:%s708]
                  %736 = vst [vmem:[%s716 + $0x24] sm:%s708] %v735
                  %v737 = vld [vmem:[%s715 + $0x28] sm:%s708]
                  %738 = vst [vmem:[%s716 + $0x28] sm:%s708] %v737
                  %v739 = vld [vmem:[%s715 + $0x2c] sm:%s708]
                  %740 = vst [vmem:[%s716 + $0x2c] sm:%s708] %v739
                  %v741 = vld [vmem:[%s715 + $0x30] sm:%s708]
                  %742 = vst [vmem:[%s716 + $0x30] sm:%s708] %v741
                  %v743 = vld [vmem:[%s715 + $0x34] sm:%s708]
                  %744 = vst [vmem:[%s716 + $0x34] sm:%s708] %v743
                  %v745 = vld [vmem:[%s715 + $0x38] sm:%s708]
                  %746 = vst [vmem:[%s716 + $0x38] sm:%s708] %v745
                  %v747 = vld [vmem:[%s715 + $0x3c] sm:%s708]
                  %748 = vst [vmem:[%s716 + $0x3c] sm:%s708] %v747
                  %v749 = vld [vmem:[%s715 + $0xc0] sm:%s708]
                  %750 = vst [vmem:[%s716 + $0x40] sm:%s708] %v749
                  %v751 = vld [vmem:[%s715 + $0xc4] sm:%s708]
                  %752 = vst [vmem:[%s716 + $0x44] sm:%s708] %v751
                  %v753 = vld [vmem:[%s715 + $0xc8] sm:%s708]
                  %754 = vst [vmem:[%s716 + $0x48] sm:%s708] %v753
                  %v755 = vld [vmem:[%s715 + $0xcc] sm:%s708]
                  %756 = vst [vmem:[%s716 + $0x4c] sm:%s708] %v755
                  %v757 = vld [vmem:[%s715 + $0xd0] sm:%s708]
                  %758 = vst [vmem:[%s716 + $0x50] sm:%s708] %v757
                  %v759 = vld [vmem:[%s715 + $0xd4] sm:%s708]
                  %760 = vst [vmem:[%s716 + $0x54] sm:%s708] %v759
                  %v761 = vld [vmem:[%s715 + $0xd8] sm:%s708]
                  %762 = vst [vmem:[%s716 + $0x58] sm:%s708] %v761
                  %v763 = vld [vmem:[%s715 + $0xdc] sm:%s708]
                  %764 = vst [vmem:[%s716 + $0x5c] sm:%s708] %v763
                  %v765 = vld [vmem:[%s715 + $0xe0] sm:%s708]
                  %766 = vst [vmem:[%s716 + $0x60] sm:%s708] %v765
                  %v767 = vld [vmem:[%s715 + $0xe4] sm:%s708]
                  %768 = vst [vmem:[%s716 + $0x64] sm:%s708] %v767
                  %v769 = vld [vmem:[%s715 + $0xe8] sm:%s708]
                  %770 = vst [vmem:[%s716 + $0x68] sm:%s708] %v769
                  %v771 = vld [vmem:[%s715 + $0xec] sm:%s708]
                  %772 = vst [vmem:[%s716 + $0x6c] sm:%s708] %v771
                  %v773 = vld [vmem:[%s715 + $0xf0] sm:%s708]
                  %774 = vst [vmem:[%s716 + $0x70] sm:%s708] %v773
                  %v775 = vld [vmem:[%s715 + $0xf4] sm:%s708]
                  %776 = vst [vmem:[%s716 + $0x74] sm:%s708] %v775
                  %v777 = vld [vmem:[%s715 + $0xf8] sm:%s708]
                  %778 = vst [vmem:[%s716 + $0x78] sm:%s708] %v777
                  %v779 = vld [vmem:[%s715 + $0xfc] sm:%s708]
                  %780 = vst [vmem:[%s716 + $0x7c] sm:%s708] %v779
                  %v781 = vld [vmem:[%s715 + $0x180] sm:%s708]
                  %782 = vst [vmem:[%s716 + $0x80] sm:%s708] %v781
                  %v783 = vld [vmem:[%s715 + $0x184] sm:%s708]
                  %784 = vst [vmem:[%s716 + $0x84] sm:%s708] %v783
                  %v785 = vld [vmem:[%s715 + $0x188] sm:%s708]
                  %786 = vst [vmem:[%s716 + $0x88] sm:%s708] %v785
                  %v787 = vld [vmem:[%s715 + $0x18c] sm:%s708]
                  %788 = vst [vmem:[%s716 + $0x8c] sm:%s708] %v787
                  %v789 = vld [vmem:[%s715 + $0x190] sm:%s708]
                  %790 = vst [vmem:[%s716 + $0x90] sm:%s708] %v789
                  %v791 = vld [vmem:[%s715 + $0x194] sm:%s708]
                  %792 = vst [vmem:[%s716 + $0x94] sm:%s708] %v791
                  %v793 = vld [vmem:[%s715 + $0x198] sm:%s708]
                  %794 = vst [vmem:[%s716 + $0x98] sm:%s708] %v793
                  %v795 = vld [vmem:[%s715 + $0x19c] sm:%s708]
                  %796 = vst [vmem:[%s716 + $0x9c] sm:%s708] %v795
                  %v797 = vld [vmem:[%s715 + $0x1a0] sm:%s708]
                  %798 = vst [vmem:[%s716 + $0xa0] sm:%s708] %v797
                  %v799 = vld [vmem:[%s715 + $0x1a4] sm:%s708]
                  %800 = vst [vmem:[%s716 + $0xa4] sm:%s708] %v799
                  %v801 = vld [vmem:[%s715 + $0x1a8] sm:%s708]
                  %802 = vst [vmem:[%s716 + $0xa8] sm:%s708] %v801
                  %v803 = vld [vmem:[%s715 + $0x1ac] sm:%s708]
                  %804 = vst [vmem:[%s716 + $0xac] sm:%s708] %v803
                  %v805 = vld [vmem:[%s715 + $0x1b0] sm:%s708]
                  %806 = vst [vmem:[%s716 + $0xb0] sm:%s708] %v805
                  %v807 = vld [vmem:[%s715 + $0x1b4] sm:%s708]
                  %808 = vst [vmem:[%s716 + $0xb4] sm:%s708] %v807
                  %v809 = vld [vmem:[%s715 + $0x1b8] sm:%s708]
                  %810 = vst [vmem:[%s716 + $0xb8] sm:%s708] %v809
                  %v811 = vld [vmem:[%s715 + $0x1bc] sm:%s708]
                  %812 = vst [vmem:[%s716 + $0xbc] sm:%s708] %v811
                  %v813 = vld [vmem:[%s715 + $0x240] sm:%s708]
                  %814 = vst [vmem:[%s716 + $0xc0] sm:%s708] %v813
                  %v815 = vld [vmem:[%s715 + $0x244] sm:%s708]
                  %816 = vst [vmem:[%s716 + $0xc4] sm:%s708] %v815
                  %v817 = vld [vmem:[%s715 + $0x248] sm:%s708]
                  %818 = vst [vmem:[%s716 + $0xc8] sm:%s708] %v817
                  %v819 = vld [vmem:[%s715 + $0x24c] sm:%s708]
                  %820 = vst [vmem:[%s716 + $0xcc] sm:%s708] %v819
                  %v821 = vld [vmem:[%s715 + $0x250] sm:%s708]
                  %822 = vst [vmem:[%s716 + $0xd0] sm:%s708] %v821
                  %v823 = vld [vmem:[%s715 + $0x254] sm:%s708]
                  %824 = vst [vmem:[%s716 + $0xd4] sm:%s708] %v823
                  %v825 = vld [vmem:[%s715 + $0x258] sm:%s708]
                  %826 = vst [vmem:[%s716 + $0xd8] sm:%s708] %v825
                  %v827 = vld [vmem:[%s715 + $0x25c] sm:%s708]
                  %828 = vst [vmem:[%s716 + $0xdc] sm:%s708] %v827
                  %v829 = vld [vmem:[%s715 + $0x260] sm:%s708]
                  %830 = vst [vmem:[%s716 + $0xe0] sm:%s708] %v829
                  %v831 = vld [vmem:[%s715 + $0x264] sm:%s708]
                  %832 = vst [vmem:[%s716 + $0xe4] sm:%s708] %v831
                  %v833 = vld [vmem:[%s715 + $0x268] sm:%s708]
                  %834 = vst [vmem:[%s716 + $0xe8] sm:%s708] %v833
                  %v835 = vld [vmem:[%s715 + $0x26c] sm:%s708]
                  %836 = vst [vmem:[%s716 + $0xec] sm:%s708] %v835
                  %v837 = vld [vmem:[%s715 + $0x270] sm:%s708]
                  %838 = vst [vmem:[%s716 + $0xf0] sm:%s708] %v837
                  %v839 = vld [vmem:[%s715 + $0x274] sm:%s708]
                  %840 = vst [vmem:[%s716 + $0xf4] sm:%s708] %v839
                  %v841 = vld [vmem:[%s715 + $0x278] sm:%s708]
                  %842 = vst [vmem:[%s716 + $0xf8] sm:%s708] %v841
                  %v843 = vld [vmem:[%s715 + $0x27c] sm:%s708]
                  %844 = vst [vmem:[%s716 + $0xfc] sm:%s708] %v843
                $region104: #{tpu_custom_call.1} parent=91 // loop_footer
                  %s714 = sadd.s32 1, %s710
                $region105: #{tpu_custom_call.1} parent=91 // loop_footer_branch
                  %709 = sbr.rel target = $region101
                $region106: #{tpu_custom_call.1} parent=91 // loop_exit
                  _
              $region92: #{tpu_custom_call.1} parent=76 // pred_fallthru
                _
            $region77: #{tpu_custom_call.1} parent=72 // pred_fallthru
              _
            // Predicated region
            $region78: #{tpu_custom_call.1} parent=72 // pred_check
              _
            $region79: #{tpu_custom_call.1} parent=72 // pred_check_branch
              %558 = sbr.rel (0) target = $region81
            $region80: #{tpu_custom_call.1} parent=72 // pred_region
              %s560 = ssub.s32 16, 1
              loop: start=0, step=1, limit=1
              $region82: #{tpu_custom_call.1} parent=80 // loop_pre_header
                _
              $region83: #{tpu_custom_call.1} parent=80 // loop_header
                %s562 = sphi 0, %s566
                %p563 = scmp.ge.s32.totalorder %s562, 1
                %s567 = sphi %s552, %s552
                %s568 = sphi %s547, %s547
              $region84: #{tpu_custom_call.1} parent=80 // loop_header_branch
                %565 = sbr.rel (%p563) target = $region88
              $region85: #{tpu_custom_call.1} parent=80 // loop_body
                %v569 = vld [vmem:[%s567] sm:%s560]
                %570 = vst [vmem:[%s568] sm:%s560] %v569
                %v571 = vld [vmem:[%s567 + $0x4] sm:%s560]
                %572 = vst [vmem:[%s568 + $0x4] sm:%s560] %v571
                %v573 = vld [vmem:[%s567 + $0x8] sm:%s560]
                %574 = vst [vmem:[%s568 + $0x8] sm:%s560] %v573
                %v575 = vld [vmem:[%s567 + $0xc] sm:%s560]
                %576 = vst [vmem:[%s568 + $0xc] sm:%s560] %v575
                %v577 = vld [vmem:[%s567 + $0x10] sm:%s560]
                %578 = vst [vmem:[%s568 + $0x10] sm:%s560] %v577
                %v579 = vld [vmem:[%s567 + $0x14] sm:%s560]
                %580 = vst [vmem:[%s568 + $0x14] sm:%s560] %v579
                %v581 = vld [vmem:[%s567 + $0x18] sm:%s560]
                %582 = vst [vmem:[%s568 + $0x18] sm:%s560] %v581
                %v583 = vld [vmem:[%s567 + $0x1c] sm:%s560]
                %584 = vst [vmem:[%s568 + $0x1c] sm:%s560] %v583
                %v585 = vld [vmem:[%s567 + $0x20] sm:%s560]
                %586 = vst [vmem:[%s568 + $0x20] sm:%s560] %v585
                %v587 = vld [vmem:[%s567 + $0x24] sm:%s560]
                %588 = vst [vmem:[%s568 + $0x24] sm:%s560] %v587
                %v589 = vld [vmem:[%s567 + $0x28] sm:%s560]
                %590 = vst [vmem:[%s568 + $0x28] sm:%s560] %v589
                %v591 = vld [vmem:[%s567 + $0x2c] sm:%s560]
                %592 = vst [vmem:[%s568 + $0x2c] sm:%s560] %v591
                %v593 = vld [vmem:[%s567 + $0x30] sm:%s560]
                %594 = vst [vmem:[%s568 + $0x30] sm:%s560] %v593
                %v595 = vld [vmem:[%s567 + $0x34] sm:%s560]
                %596 = vst [vmem:[%s568 + $0x34] sm:%s560] %v595
                %v597 = vld [vmem:[%s567 + $0x38] sm:%s560]
                %598 = vst [vmem:[%s568 + $0x38] sm:%s560] %v597
                %v599 = vld [vmem:[%s567 + $0x3c] sm:%s560]
                %600 = vst [vmem:[%s568 + $0x3c] sm:%s560] %v599
                %v601 = vld [vmem:[%s567 + $0xc0] sm:%s560]
                %602 = vst [vmem:[%s568 + $0x40] sm:%s560] %v601
                %v603 = vld [vmem:[%s567 + $0xc4] sm:%s560]
                %604 = vst [vmem:[%s568 + $0x44] sm:%s560] %v603
                %v605 = vld [vmem:[%s567 + $0xc8] sm:%s560]
                %606 = vst [vmem:[%s568 + $0x48] sm:%s560] %v605
                %v607 = vld [vmem:[%s567 + $0xcc] sm:%s560]
                %608 = vst [vmem:[%s568 + $0x4c] sm:%s560] %v607
                %v609 = vld [vmem:[%s567 + $0xd0] sm:%s560]
                %610 = vst [vmem:[%s568 + $0x50] sm:%s560] %v609
                %v611 = vld [vmem:[%s567 + $0xd4] sm:%s560]
                %612 = vst [vmem:[%s568 + $0x54] sm:%s560] %v611
                %v613 = vld [vmem:[%s567 + $0xd8] sm:%s560]
                %614 = vst [vmem:[%s568 + $0x58] sm:%s560] %v613
                %v615 = vld [vmem:[%s567 + $0xdc] sm:%s560]
                %616 = vst [vmem:[%s568 + $0x5c] sm:%s560] %v615
                %v617 = vld [vmem:[%s567 + $0xe0] sm:%s560]
                %618 = vst [vmem:[%s568 + $0x60] sm:%s560] %v617
                %v619 = vld [vmem:[%s567 + $0xe4] sm:%s560]
                %620 = vst [vmem:[%s568 + $0x64] sm:%s560] %v619
                %v621 = vld [vmem:[%s567 + $0xe8] sm:%s560]
                %622 = vst [vmem:[%s568 + $0x68] sm:%s560] %v621
                %v623 = vld [vmem:[%s567 + $0xec] sm:%s560]
                %624 = vst [vmem:[%s568 + $0x6c] sm:%s560] %v623
                %v625 = vld [vmem:[%s567 + $0xf0] sm:%s560]
                %626 = vst [vmem:[%s568 + $0x70] sm:%s560] %v625
                %v627 = vld [vmem:[%s567 + $0xf4] sm:%s560]
                %628 = vst [vmem:[%s568 + $0x74] sm:%s560] %v627
                %v629 = vld [vmem:[%s567 + $0xf8] sm:%s560]
                %630 = vst [vmem:[%s568 + $0x78] sm:%s560] %v629
                %v631 = vld [vmem:[%s567 + $0xfc] sm:%s560]
                %632 = vst [vmem:[%s568 + $0x7c] sm:%s560] %v631
                %v633 = vld [vmem:[%s567 + $0x180] sm:%s560]
                %634 = vst [vmem:[%s568 + $0x80] sm:%s560] %v633
                %v635 = vld [vmem:[%s567 + $0x184] sm:%s560]
                %636 = vst [vmem:[%s568 + $0x84] sm:%s560] %v635
                %v637 = vld [vmem:[%s567 + $0x188] sm:%s560]
                %638 = vst [vmem:[%s568 + $0x88] sm:%s560] %v637
                %v639 = vld [vmem:[%s567 + $0x18c] sm:%s560]
                %640 = vst [vmem:[%s568 + $0x8c] sm:%s560] %v639
                %v641 = vld [vmem:[%s567 + $0x190] sm:%s560]
                %642 = vst [vmem:[%s568 + $0x90] sm:%s560] %v641
                %v643 = vld [vmem:[%s567 + $0x194] sm:%s560]
                %644 = vst [vmem:[%s568 + $0x94] sm:%s560] %v643
                %v645 = vld [vmem:[%s567 + $0x198] sm:%s560]
                %646 = vst [vmem:[%s568 + $0x98] sm:%s560] %v645
                %v647 = vld [vmem:[%s567 + $0x19c] sm:%s560]
                %648 = vst [vmem:[%s568 + $0x9c] sm:%s560] %v647
                %v649 = vld [vmem:[%s567 + $0x1a0] sm:%s560]
                %650 = vst [vmem:[%s568 + $0xa0] sm:%s560] %v649
                %v651 = vld [vmem:[%s567 + $0x1a4] sm:%s560]
                %652 = vst [vmem:[%s568 + $0xa4] sm:%s560] %v651
                %v653 = vld [vmem:[%s567 + $0x1a8] sm:%s560]
                %654 = vst [vmem:[%s568 + $0xa8] sm:%s560] %v653
                %v655 = vld [vmem:[%s567 + $0x1ac] sm:%s560]
                %656 = vst [vmem:[%s568 + $0xac] sm:%s560] %v655
                %v657 = vld [vmem:[%s567 + $0x1b0] sm:%s560]
                %658 = vst [vmem:[%s568 + $0xb0] sm:%s560] %v657
                %v659 = vld [vmem:[%s567 + $0x1b4] sm:%s560]
                %660 = vst [vmem:[%s568 + $0xb4] sm:%s560] %v659
                %v661 = vld [vmem:[%s567 + $0x1b8] sm:%s560]
                %662 = vst [vmem:[%s568 + $0xb8] sm:%s560] %v661
                %v663 = vld [vmem:[%s567 + $0x1bc] sm:%s560]
                %664 = vst [vmem:[%s568 + $0xbc] sm:%s560] %v663
                %v665 = vld [vmem:[%s567 + $0x240] sm:%s560]
                %666 = vst [vmem:[%s568 + $0xc0] sm:%s560] %v665
                %v667 = vld [vmem:[%s567 + $0x244] sm:%s560]
                %668 = vst [vmem:[%s568 + $0xc4] sm:%s560] %v667
                %v669 = vld [vmem:[%s567 + $0x248] sm:%s560]
                %670 = vst [vmem:[%s568 + $0xc8] sm:%s560] %v669
                %v671 = vld [vmem:[%s567 + $0x24c] sm:%s560]
                %672 = vst [vmem:[%s568 + $0xcc] sm:%s560] %v671
                %v673 = vld [vmem:[%s567 + $0x250] sm:%s560]
                %674 = vst [vmem:[%s568 + $0xd0] sm:%s560] %v673
                %v675 = vld [vmem:[%s567 + $0x254] sm:%s560]
                %676 = vst [vmem:[%s568 + $0xd4] sm:%s560] %v675
                %v677 = vld [vmem:[%s567 + $0x258] sm:%s560]
                %678 = vst [vmem:[%s568 + $0xd8] sm:%s560] %v677
                %v679 = vld [vmem:[%s567 + $0x25c] sm:%s560]
                %680 = vst [vmem:[%s568 + $0xdc] sm:%s560] %v679
                %v681 = vld [vmem:[%s567 + $0x260] sm:%s560]
                %682 = vst [vmem:[%s568 + $0xe0] sm:%s560] %v681
                %v683 = vld [vmem:[%s567 + $0x264] sm:%s560]
                %684 = vst [vmem:[%s568 + $0xe4] sm:%s560] %v683
                %v685 = vld [vmem:[%s567 + $0x268] sm:%s560]
                %686 = vst [vmem:[%s568 + $0xe8] sm:%s560] %v685
                %v687 = vld [vmem:[%s567 + $0x26c] sm:%s560]
                %688 = vst [vmem:[%s568 + $0xec] sm:%s560] %v687
                %v689 = vld [vmem:[%s567 + $0x270] sm:%s560]
                %690 = vst [vmem:[%s568 + $0xf0] sm:%s560] %v689
                %v691 = vld [vmem:[%s567 + $0x274] sm:%s560]
                %692 = vst [vmem:[%s568 + $0xf4] sm:%s560] %v691
                %v693 = vld [vmem:[%s567 + $0x278] sm:%s560]
                %694 = vst [vmem:[%s568 + $0xf8] sm:%s560] %v693
                %v695 = vld [vmem:[%s567 + $0x27c] sm:%s560]
                %696 = vst [vmem:[%s568 + $0xfc] sm:%s560] %v695
              $region86: #{tpu_custom_call.1} parent=80 // loop_footer
                %s566 = sadd.s32 1, %s562
              $region87: #{tpu_custom_call.1} parent=80 // loop_footer_branch
                %561 = sbr.rel target = $region83
              $region88: #{tpu_custom_call.1} parent=80 // loop_exit
                _
            $region81: #{tpu_custom_call.1} parent=72 // pred_fallthru
              _
          $region73: #{tpu_custom_call.1} parent=68 // pred_fallthru
            _
          %845 = vnop
        $region69: #{tpu_custom_call.1} parent=23 // pred_fallthru
          _
        // Predicated region
        $region107: #{tpu_custom_call.1} parent=23 // pred_check
          %p846 = pneg %p109
        $region108: #{tpu_custom_call.1} parent=23 // pred_check_branch
          %848 = sbr.rel (%p846) target = $region110
        $region109: #{tpu_custom_call.1} parent=23 // pred_region
          %s849 = sand.u32 %s99, 1
          %s850 = sand.u32 %s99, 1
          %s851 = smul.addr %s850, 256
          %s852 = scalar_lea.vmem [#allocation7], %s851
          %s853 = smul.u32 16, %s21
          %s854 = smul.addr %s19, 192
          %s855 = sadd.s32 %s853, %s854
          %s856 = smul.addr %s855, 4
          %s857 = scalar_lea.vmem %s2, %s856
          // Predicated region
          $region111: #{tpu_custom_call.1} parent=109 // pred_check
            _
          $region112: #{tpu_custom_call.1} parent=109 // pred_check_branch
            %859 = sbr.rel (0) target = $region114
          $region113: #{tpu_custom_call.1} parent=109 // pred_region
            // Predicated region
            $region115: #{tpu_custom_call.1} parent=113 // pred_check
              _
            $region116: #{tpu_custom_call.1} parent=113 // pred_check_branch
              %861 = sbr.rel target = $region118
            $region117: #{tpu_custom_call.1} parent=113 // pred_region
              // Predicated region
              $region130: #{tpu_custom_call.1} parent=117 // pred_check
                _
              $region131: #{tpu_custom_call.1} parent=117 // pred_check_branch
                %1003 = sbr.rel (0) target = $region133
              $region132: #{tpu_custom_call.1} parent=117 // pred_region
                loop: start=0, step=1, limit=1
                $region134: #{tpu_custom_call.1} parent=132 // loop_pre_header
                  _
                $region135: #{tpu_custom_call.1} parent=132 // loop_header
                  %s1005 = sphi 0, %s1009
                  %p1006 = scmp.ge.s32.totalorder %s1005, 1
                  %s1010 = sphi %s857, %s857
                  %s1011 = sphi %s852, %s852
                $region136: #{tpu_custom_call.1} parent=132 // loop_header_branch
                  %1008 = sbr.rel (%p1006) target = $region140
                $region137: #{tpu_custom_call.1} parent=132 // loop_body
                  _
                $region138: #{tpu_custom_call.1} parent=132 // loop_footer
                  %s1009 = sadd.s32 1, %s1005
                $region139: #{tpu_custom_call.1} parent=132 // loop_footer_branch
                  %1004 = sbr.rel target = $region135
                $region140: #{tpu_custom_call.1} parent=132 // loop_exit
                  _
                %s1013 = ssub.s32 16, 1
                loop: start=0, step=1, limit=1
                $region141: #{tpu_custom_call.1} parent=132 // loop_pre_header
                  _
                $region142: #{tpu_custom_call.1} parent=132 // loop_header
                  %s1015 = sphi 0, %s1019
                  %p1016 = scmp.ge.s32.totalorder %s1015, 1
                  %s1020 = sphi %s857, %s857
                  %s1021 = sphi %s852, %s852
                $region143: #{tpu_custom_call.1} parent=132 // loop_header_branch
                  %1018 = sbr.rel (%p1016) target = $region147
                $region144: #{tpu_custom_call.1} parent=132 // loop_body
                  %v1022 = vld [vmem:[%s1020] sm:%s1013]
                  %1023 = vst [vmem:[%s1021] sm:%s1013] %v1022
                  %v1024 = vld [vmem:[%s1020 + $0x4] sm:%s1013]
                  %1025 = vst [vmem:[%s1021 + $0x4] sm:%s1013] %v1024
                  %v1026 = vld [vmem:[%s1020 + $0x8] sm:%s1013]
                  %1027 = vst [vmem:[%s1021 + $0x8] sm:%s1013] %v1026
                  %v1028 = vld [vmem:[%s1020 + $0xc] sm:%s1013]
                  %1029 = vst [vmem:[%s1021 + $0xc] sm:%s1013] %v1028
                  %v1030 = vld [vmem:[%s1020 + $0x10] sm:%s1013]
                  %1031 = vst [vmem:[%s1021 + $0x10] sm:%s1013] %v1030
                  %v1032 = vld [vmem:[%s1020 + $0x14] sm:%s1013]
                  %1033 = vst [vmem:[%s1021 + $0x14] sm:%s1013] %v1032
                  %v1034 = vld [vmem:[%s1020 + $0x18] sm:%s1013]
                  %1035 = vst [vmem:[%s1021 + $0x18] sm:%s1013] %v1034
                  %v1036 = vld [vmem:[%s1020 + $0x1c] sm:%s1013]
                  %1037 = vst [vmem:[%s1021 + $0x1c] sm:%s1013] %v1036
                  %v1038 = vld [vmem:[%s1020 + $0x20] sm:%s1013]
                  %1039 = vst [vmem:[%s1021 + $0x20] sm:%s1013] %v1038
                  %v1040 = vld [vmem:[%s1020 + $0x24] sm:%s1013]
                  %1041 = vst [vmem:[%s1021 + $0x24] sm:%s1013] %v1040
                  %v1042 = vld [vmem:[%s1020 + $0x28] sm:%s1013]
                  %1043 = vst [vmem:[%s1021 + $0x28] sm:%s1013] %v1042
                  %v1044 = vld [vmem:[%s1020 + $0x2c] sm:%s1013]
                  %1045 = vst [vmem:[%s1021 + $0x2c] sm:%s1013] %v1044
                  %v1046 = vld [vmem:[%s1020 + $0x30] sm:%s1013]
                  %1047 = vst [vmem:[%s1021 + $0x30] sm:%s1013] %v1046
                  %v1048 = vld [vmem:[%s1020 + $0x34] sm:%s1013]
                  %1049 = vst [vmem:[%s1021 + $0x34] sm:%s1013] %v1048
                  %v1050 = vld [vmem:[%s1020 + $0x38] sm:%s1013]
                  %1051 = vst [vmem:[%s1021 + $0x38] sm:%s1013] %v1050
                  %v1052 = vld [vmem:[%s1020 + $0x3c] sm:%s1013]
                  %1053 = vst [vmem:[%s1021 + $0x3c] sm:%s1013] %v1052
                  %v1054 = vld [vmem:[%s1020 + $0xc0] sm:%s1013]
                  %1055 = vst [vmem:[%s1021 + $0x40] sm:%s1013] %v1054
                  %v1056 = vld [vmem:[%s1020 + $0xc4] sm:%s1013]
                  %1057 = vst [vmem:[%s1021 + $0x44] sm:%s1013] %v1056
                  %v1058 = vld [vmem:[%s1020 + $0xc8] sm:%s1013]
                  %1059 = vst [vmem:[%s1021 + $0x48] sm:%s1013] %v1058
                  %v1060 = vld [vmem:[%s1020 + $0xcc] sm:%s1013]
                  %1061 = vst [vmem:[%s1021 + $0x4c] sm:%s1013] %v1060
                  %v1062 = vld [vmem:[%s1020 + $0xd0] sm:%s1013]
                  %1063 = vst [vmem:[%s1021 + $0x50] sm:%s1013] %v1062
                  %v1064 = vld [vmem:[%s1020 + $0xd4] sm:%s1013]
                  %1065 = vst [vmem:[%s1021 + $0x54] sm:%s1013] %v1064
                  %v1066 = vld [vmem:[%s1020 + $0xd8] sm:%s1013]
                  %1067 = vst [vmem:[%s1021 + $0x58] sm:%s1013] %v1066
                  %v1068 = vld [vmem:[%s1020 + $0xdc] sm:%s1013]
                  %1069 = vst [vmem:[%s1021 + $0x5c] sm:%s1013] %v1068
                  %v1070 = vld [vmem:[%s1020 + $0xe0] sm:%s1013]
                  %1071 = vst [vmem:[%s1021 + $0x60] sm:%s1013] %v1070
                  %v1072 = vld [vmem:[%s1020 + $0xe4] sm:%s1013]
                  %1073 = vst [vmem:[%s1021 + $0x64] sm:%s1013] %v1072
                  %v1074 = vld [vmem:[%s1020 + $0xe8] sm:%s1013]
                  %1075 = vst [vmem:[%s1021 + $0x68] sm:%s1013] %v1074
                  %v1076 = vld [vmem:[%s1020 + $0xec] sm:%s1013]
                  %1077 = vst [vmem:[%s1021 + $0x6c] sm:%s1013] %v1076
                  %v1078 = vld [vmem:[%s1020 + $0xf0] sm:%s1013]
                  %1079 = vst [vmem:[%s1021 + $0x70] sm:%s1013] %v1078
                  %v1080 = vld [vmem:[%s1020 + $0xf4] sm:%s1013]
                  %1081 = vst [vmem:[%s1021 + $0x74] sm:%s1013] %v1080
                  %v1082 = vld [vmem:[%s1020 + $0xf8] sm:%s1013]
                  %1083 = vst [vmem:[%s1021 + $0x78] sm:%s1013] %v1082
                  %v1084 = vld [vmem:[%s1020 + $0xfc] sm:%s1013]
                  %1085 = vst [vmem:[%s1021 + $0x7c] sm:%s1013] %v1084
                  %v1086 = vld [vmem:[%s1020 + $0x180] sm:%s1013]
                  %1087 = vst [vmem:[%s1021 + $0x80] sm:%s1013] %v1086
                  %v1088 = vld [vmem:[%s1020 + $0x184] sm:%s1013]
                  %1089 = vst [vmem:[%s1021 + $0x84] sm:%s1013] %v1088
                  %v1090 = vld [vmem:[%s1020 + $0x188] sm:%s1013]
                  %1091 = vst [vmem:[%s1021 + $0x88] sm:%s1013] %v1090
                  %v1092 = vld [vmem:[%s1020 + $0x18c] sm:%s1013]
                  %1093 = vst [vmem:[%s1021 + $0x8c] sm:%s1013] %v1092
                  %v1094 = vld [vmem:[%s1020 + $0x190] sm:%s1013]
                  %1095 = vst [vmem:[%s1021 + $0x90] sm:%s1013] %v1094
                  %v1096 = vld [vmem:[%s1020 + $0x194] sm:%s1013]
                  %1097 = vst [vmem:[%s1021 + $0x94] sm:%s1013] %v1096
                  %v1098 = vld [vmem:[%s1020 + $0x198] sm:%s1013]
                  %1099 = vst [vmem:[%s1021 + $0x98] sm:%s1013] %v1098
                  %v1100 = vld [vmem:[%s1020 + $0x19c] sm:%s1013]
                  %1101 = vst [vmem:[%s1021 + $0x9c] sm:%s1013] %v1100
                  %v1102 = vld [vmem:[%s1020 + $0x1a0] sm:%s1013]
                  %1103 = vst [vmem:[%s1021 + $0xa0] sm:%s1013] %v1102
                  %v1104 = vld [vmem:[%s1020 + $0x1a4] sm:%s1013]
                  %1105 = vst [vmem:[%s1021 + $0xa4] sm:%s1013] %v1104
                  %v1106 = vld [vmem:[%s1020 + $0x1a8] sm:%s1013]
                  %1107 = vst [vmem:[%s1021 + $0xa8] sm:%s1013] %v1106
                  %v1108 = vld [vmem:[%s1020 + $0x1ac] sm:%s1013]
                  %1109 = vst [vmem:[%s1021 + $0xac] sm:%s1013] %v1108
                  %v1110 = vld [vmem:[%s1020 + $0x1b0] sm:%s1013]
                  %1111 = vst [vmem:[%s1021 + $0xb0] sm:%s1013] %v1110
                  %v1112 = vld [vmem:[%s1020 + $0x1b4] sm:%s1013]
                  %1113 = vst [vmem:[%s1021 + $0xb4] sm:%s1013] %v1112
                  %v1114 = vld [vmem:[%s1020 + $0x1b8] sm:%s1013]
                  %1115 = vst [vmem:[%s1021 + $0xb8] sm:%s1013] %v1114
                  %v1116 = vld [vmem:[%s1020 + $0x1bc] sm:%s1013]
                  %1117 = vst [vmem:[%s1021 + $0xbc] sm:%s1013] %v1116
                  %v1118 = vld [vmem:[%s1020 + $0x240] sm:%s1013]
                  %1119 = vst [vmem:[%s1021 + $0xc0] sm:%s1013] %v1118
                  %v1120 = vld [vmem:[%s1020 + $0x244] sm:%s1013]
                  %1121 = vst [vmem:[%s1021 + $0xc4] sm:%s1013] %v1120
                  %v1122 = vld [vmem:[%s1020 + $0x248] sm:%s1013]
                  %1123 = vst [vmem:[%s1021 + $0xc8] sm:%s1013] %v1122
                  %v1124 = vld [vmem:[%s1020 + $0x24c] sm:%s1013]
                  %1125 = vst [vmem:[%s1021 + $0xcc] sm:%s1013] %v1124
                  %v1126 = vld [vmem:[%s1020 + $0x250] sm:%s1013]
                  %1127 = vst [vmem:[%s1021 + $0xd0] sm:%s1013] %v1126
                  %v1128 = vld [vmem:[%s1020 + $0x254] sm:%s1013]
                  %1129 = vst [vmem:[%s1021 + $0xd4] sm:%s1013] %v1128
                  %v1130 = vld [vmem:[%s1020 + $0x258] sm:%s1013]
                  %1131 = vst [vmem:[%s1021 + $0xd8] sm:%s1013] %v1130
                  %v1132 = vld [vmem:[%s1020 + $0x25c] sm:%s1013]
                  %1133 = vst [vmem:[%s1021 + $0xdc] sm:%s1013] %v1132
                  %v1134 = vld [vmem:[%s1020 + $0x260] sm:%s1013]
                  %1135 = vst [vmem:[%s1021 + $0xe0] sm:%s1013] %v1134
                  %v1136 = vld [vmem:[%s1020 + $0x264] sm:%s1013]
                  %1137 = vst [vmem:[%s1021 + $0xe4] sm:%s1013] %v1136
                  %v1138 = vld [vmem:[%s1020 + $0x268] sm:%s1013]
                  %1139 = vst [vmem:[%s1021 + $0xe8] sm:%s1013] %v1138
                  %v1140 = vld [vmem:[%s1020 + $0x26c] sm:%s1013]
                  %1141 = vst [vmem:[%s1021 + $0xec] sm:%s1013] %v1140
                  %v1142 = vld [vmem:[%s1020 + $0x270] sm:%s1013]
                  %1143 = vst [vmem:[%s1021 + $0xf0] sm:%s1013] %v1142
                  %v1144 = vld [vmem:[%s1020 + $0x274] sm:%s1013]
                  %1145 = vst [vmem:[%s1021 + $0xf4] sm:%s1013] %v1144
                  %v1146 = vld [vmem:[%s1020 + $0x278] sm:%s1013]
                  %1147 = vst [vmem:[%s1021 + $0xf8] sm:%s1013] %v1146
                  %v1148 = vld [vmem:[%s1020 + $0x27c] sm:%s1013]
                  %1149 = vst [vmem:[%s1021 + $0xfc] sm:%s1013] %v1148
                $region145: #{tpu_custom_call.1} parent=132 // loop_footer
                  %s1019 = sadd.s32 1, %s1015
                $region146: #{tpu_custom_call.1} parent=132 // loop_footer_branch
                  %1014 = sbr.rel target = $region142
                $region147: #{tpu_custom_call.1} parent=132 // loop_exit
                  _
              $region133: #{tpu_custom_call.1} parent=117 // pred_fallthru
                _
            $region118: #{tpu_custom_call.1} parent=113 // pred_fallthru
              _
            // Predicated region
            $region119: #{tpu_custom_call.1} parent=113 // pred_check
              _
            $region120: #{tpu_custom_call.1} parent=113 // pred_check_branch
              %863 = sbr.rel (0) target = $region122
            $region121: #{tpu_custom_call.1} parent=113 // pred_region
              %s865 = ssub.s32 16, 1
              loop: start=0, step=1, limit=1
              $region123: #{tpu_custom_call.1} parent=121 // loop_pre_header
                _
              $region124: #{tpu_custom_call.1} parent=121 // loop_header
                %s867 = sphi 0, %s871
                %p868 = scmp.ge.s32.totalorder %s867, 1
                %s872 = sphi %s857, %s857
                %s873 = sphi %s852, %s852
              $region125: #{tpu_custom_call.1} parent=121 // loop_header_branch
                %870 = sbr.rel (%p868) target = $region129
              $region126: #{tpu_custom_call.1} parent=121 // loop_body
                %v874 = vld [vmem:[%s872] sm:%s865]
                %875 = vst [vmem:[%s873] sm:%s865] %v874
                %v876 = vld [vmem:[%s872 + $0x4] sm:%s865]
                %877 = vst [vmem:[%s873 + $0x4] sm:%s865] %v876
                %v878 = vld [vmem:[%s872 + $0x8] sm:%s865]
                %879 = vst [vmem:[%s873 + $0x8] sm:%s865] %v878
                %v880 = vld [vmem:[%s872 + $0xc] sm:%s865]
                %881 = vst [vmem:[%s873 + $0xc] sm:%s865] %v880
                %v882 = vld [vmem:[%s872 + $0x10] sm:%s865]
                %883 = vst [vmem:[%s873 + $0x10] sm:%s865] %v882
                %v884 = vld [vmem:[%s872 + $0x14] sm:%s865]
                %885 = vst [vmem:[%s873 + $0x14] sm:%s865] %v884
                %v886 = vld [vmem:[%s872 + $0x18] sm:%s865]
                %887 = vst [vmem:[%s873 + $0x18] sm:%s865] %v886
                %v888 = vld [vmem:[%s872 + $0x1c] sm:%s865]
                %889 = vst [vmem:[%s873 + $0x1c] sm:%s865] %v888
                %v890 = vld [vmem:[%s872 + $0x20] sm:%s865]
                %891 = vst [vmem:[%s873 + $0x20] sm:%s865] %v890
                %v892 = vld [vmem:[%s872 + $0x24] sm:%s865]
                %893 = vst [vmem:[%s873 + $0x24] sm:%s865] %v892
                %v894 = vld [vmem:[%s872 + $0x28] sm:%s865]
                %895 = vst [vmem:[%s873 + $0x28] sm:%s865] %v894
                %v896 = vld [vmem:[%s872 + $0x2c] sm:%s865]
                %897 = vst [vmem:[%s873 + $0x2c] sm:%s865] %v896
                %v898 = vld [vmem:[%s872 + $0x30] sm:%s865]
                %899 = vst [vmem:[%s873 + $0x30] sm:%s865] %v898
                %v900 = vld [vmem:[%s872 + $0x34] sm:%s865]
                %901 = vst [vmem:[%s873 + $0x34] sm:%s865] %v900
                %v902 = vld [vmem:[%s872 + $0x38] sm:%s865]
                %903 = vst [vmem:[%s873 + $0x38] sm:%s865] %v902
                %v904 = vld [vmem:[%s872 + $0x3c] sm:%s865]
                %905 = vst [vmem:[%s873 + $0x3c] sm:%s865] %v904
                %v906 = vld [vmem:[%s872 + $0xc0] sm:%s865]
                %907 = vst [vmem:[%s873 + $0x40] sm:%s865] %v906
                %v908 = vld [vmem:[%s872 + $0xc4] sm:%s865]
                %909 = vst [vmem:[%s873 + $0x44] sm:%s865] %v908
                %v910 = vld [vmem:[%s872 + $0xc8] sm:%s865]
                %911 = vst [vmem:[%s873 + $0x48] sm:%s865] %v910
                %v912 = vld [vmem:[%s872 + $0xcc] sm:%s865]
                %913 = vst [vmem:[%s873 + $0x4c] sm:%s865] %v912
                %v914 = vld [vmem:[%s872 + $0xd0] sm:%s865]
                %915 = vst [vmem:[%s873 + $0x50] sm:%s865] %v914
                %v916 = vld [vmem:[%s872 + $0xd4] sm:%s865]
                %917 = vst [vmem:[%s873 + $0x54] sm:%s865] %v916
                %v918 = vld [vmem:[%s872 + $0xd8] sm:%s865]
                %919 = vst [vmem:[%s873 + $0x58] sm:%s865] %v918
                %v920 = vld [vmem:[%s872 + $0xdc] sm:%s865]
                %921 = vst [vmem:[%s873 + $0x5c] sm:%s865] %v920
                %v922 = vld [vmem:[%s872 + $0xe0] sm:%s865]
                %923 = vst [vmem:[%s873 + $0x60] sm:%s865] %v922
                %v924 = vld [vmem:[%s872 + $0xe4] sm:%s865]
                %925 = vst [vmem:[%s873 + $0x64] sm:%s865] %v924
                %v926 = vld [vmem:[%s872 + $0xe8] sm:%s865]
                %927 = vst [vmem:[%s873 + $0x68] sm:%s865] %v926
                %v928 = vld [vmem:[%s872 + $0xec] sm:%s865]
                %929 = vst [vmem:[%s873 + $0x6c] sm:%s865] %v928
                %v930 = vld [vmem:[%s872 + $0xf0] sm:%s865]
                %931 = vst [vmem:[%s873 + $0x70] sm:%s865] %v930
                %v932 = vld [vmem:[%s872 + $0xf4] sm:%s865]
                %933 = vst [vmem:[%s873 + $0x74] sm:%s865] %v932
                %v934 = vld [vmem:[%s872 + $0xf8] sm:%s865]
                %935 = vst [vmem:[%s873 + $0x78] sm:%s865] %v934
                %v936 = vld [vmem:[%s872 + $0xfc] sm:%s865]
                %937 = vst [vmem:[%s873 + $0x7c] sm:%s865] %v936
                %v938 = vld [vmem:[%s872 + $0x180] sm:%s865]
                %939 = vst [vmem:[%s873 + $0x80] sm:%s865] %v938
                %v940 = vld [vmem:[%s872 + $0x184] sm:%s865]
                %941 = vst [vmem:[%s873 + $0x84] sm:%s865] %v940
                %v942 = vld [vmem:[%s872 + $0x188] sm:%s865]
                %943 = vst [vmem:[%s873 + $0x88] sm:%s865] %v942
                %v944 = vld [vmem:[%s872 + $0x18c] sm:%s865]
                %945 = vst [vmem:[%s873 + $0x8c] sm:%s865] %v944
                %v946 = vld [vmem:[%s872 + $0x190] sm:%s865]
                %947 = vst [vmem:[%s873 + $0x90] sm:%s865] %v946
                %v948 = vld [vmem:[%s872 + $0x194] sm:%s865]
                %949 = vst [vmem:[%s873 + $0x94] sm:%s865] %v948
                %v950 = vld [vmem:[%s872 + $0x198] sm:%s865]
                %951 = vst [vmem:[%s873 + $0x98] sm:%s865] %v950
                %v952 = vld [vmem:[%s872 + $0x19c] sm:%s865]
                %953 = vst [vmem:[%s873 + $0x9c] sm:%s865] %v952
                %v954 = vld [vmem:[%s872 + $0x1a0] sm:%s865]
                %955 = vst [vmem:[%s873 + $0xa0] sm:%s865] %v954
                %v956 = vld [vmem:[%s872 + $0x1a4] sm:%s865]
                %957 = vst [vmem:[%s873 + $0xa4] sm:%s865] %v956
                %v958 = vld [vmem:[%s872 + $0x1a8] sm:%s865]
                %959 = vst [vmem:[%s873 + $0xa8] sm:%s865] %v958
                %v960 = vld [vmem:[%s872 + $0x1ac] sm:%s865]
                %961 = vst [vmem:[%s873 + $0xac] sm:%s865] %v960
                %v962 = vld [vmem:[%s872 + $0x1b0] sm:%s865]
                %963 = vst [vmem:[%s873 + $0xb0] sm:%s865] %v962
                %v964 = vld [vmem:[%s872 + $0x1b4] sm:%s865]
                %965 = vst [vmem:[%s873 + $0xb4] sm:%s865] %v964
                %v966 = vld [vmem:[%s872 + $0x1b8] sm:%s865]
                %967 = vst [vmem:[%s873 + $0xb8] sm:%s865] %v966
                %v968 = vld [vmem:[%s872 + $0x1bc] sm:%s865]
                %969 = vst [vmem:[%s873 + $0xbc] sm:%s865] %v968
                %v970 = vld [vmem:[%s872 + $0x240] sm:%s865]
                %971 = vst [vmem:[%s873 + $0xc0] sm:%s865] %v970
                %v972 = vld [vmem:[%s872 + $0x244] sm:%s865]
                %973 = vst [vmem:[%s873 + $0xc4] sm:%s865] %v972
                %v974 = vld [vmem:[%s872 + $0x248] sm:%s865]
                %975 = vst [vmem:[%s873 + $0xc8] sm:%s865] %v974
                %v976 = vld [vmem:[%s872 + $0x24c] sm:%s865]
                %977 = vst [vmem:[%s873 + $0xcc] sm:%s865] %v976
                %v978 = vld [vmem:[%s872 + $0x250] sm:%s865]
                %979 = vst [vmem:[%s873 + $0xd0] sm:%s865] %v978
                %v980 = vld [vmem:[%s872 + $0x254] sm:%s865]
                %981 = vst [vmem:[%s873 + $0xd4] sm:%s865] %v980
                %v982 = vld [vmem:[%s872 + $0x258] sm:%s865]
                %983 = vst [vmem:[%s873 + $0xd8] sm:%s865] %v982
                %v984 = vld [vmem:[%s872 + $0x25c] sm:%s865]
                %985 = vst [vmem:[%s873 + $0xdc] sm:%s865] %v984
                %v986 = vld [vmem:[%s872 + $0x260] sm:%s865]
                %987 = vst [vmem:[%s873 + $0xe0] sm:%s865] %v986
                %v988 = vld [vmem:[%s872 + $0x264] sm:%s865]
                %989 = vst [vmem:[%s873 + $0xe4] sm:%s865] %v988
                %v990 = vld [vmem:[%s872 + $0x268] sm:%s865]
                %991 = vst [vmem:[%s873 + $0xe8] sm:%s865] %v990
                %v992 = vld [vmem:[%s872 + $0x26c] sm:%s865]
                %993 = vst [vmem:[%s873 + $0xec] sm:%s865] %v992
                %v994 = vld [vmem:[%s872 + $0x270] sm:%s865]
                %995 = vst [vmem:[%s873 + $0xf0] sm:%s865] %v994
                %v996 = vld [vmem:[%s872 + $0x274] sm:%s865]
                %997 = vst [vmem:[%s873 + $0xf4] sm:%s865] %v996
                %v998 = vld [vmem:[%s872 + $0x278] sm:%s865]
                %999 = vst [vmem:[%s873 + $0xf8] sm:%s865] %v998
                %v1000 = vld [vmem:[%s872 + $0x27c] sm:%s865]
                %1001 = vst [vmem:[%s873 + $0xfc] sm:%s865] %v1000
              $region127: #{tpu_custom_call.1} parent=121 // loop_footer
                %s871 = sadd.s32 1, %s867
              $region128: #{tpu_custom_call.1} parent=121 // loop_footer_branch
                %866 = sbr.rel target = $region124
              $region129: #{tpu_custom_call.1} parent=121 // loop_exit
                _
            $region122: #{tpu_custom_call.1} parent=113 // pred_fallthru
              _
          $region114: #{tpu_custom_call.1} parent=109 // pred_fallthru
            _
          %1150 = vnop
        $region110: #{tpu_custom_call.1} parent=23 // pred_fallthru
          _
        // Predicated region
        $region148: #{tpu_custom_call.1} parent=23 // pred_check
          %p1151 = pneg %p135
        $region149: #{tpu_custom_call.1} parent=23 // pred_check_branch
          %1153 = sbr.rel (%p1151) target = $region151
        $region150: #{tpu_custom_call.1} parent=23 // pred_region
          %p1154 = scmp.lt.s32.totalorder %s21, 2
          %s1155 = scalar_select %p1154, %s21, 2
          %s1156 = scalar_lea.vmem %s3, %s1155
        $region151: #{tpu_custom_call.1} parent=23 // pred_fallthru
          _
      $region24: #{tpu_custom_call.1} parent=5 // pred_fallthru
        _
      %p1157 = scmp.le.s32.totalorder 1, %s12
      %p1158 = scmp.lt.s32.totalorder %s12, 19
      %p1159 = pnand %p1157, %p1158
      %p1160 = pneg %p1159
      // Predicated region
      $region152: #{tpu_custom_call.1} parent=5 // pred_check
        _
      $region153: #{tpu_custom_call.1} parent=5 // pred_check_branch
        %1162 = sbr.rel (%p1159) target = $region155
      $region154: #{tpu_custom_call.1} parent=5 // pred_region
        %s1163 = ssub.s32 %s12, 1
        %s1164 = sand.u32 %s46, 1
        %s1165 = sand.u32 %s46, 1
        %s1166 = smul.addr %s1165, 256
        %s1167 = scalar_lea.vmem [#allocation5], %s1166
        // Predicated region
        $region156: #{tpu_custom_call.1} parent=154 // pred_check
          %p1168 = pneg %p59
        $region157: #{tpu_custom_call.1} parent=154 // pred_check_branch
          %1170 = sbr.rel (%p1168) target = $region159
        $region158: #{tpu_custom_call.1} parent=154 // pred_region
          _
        $region159: #{tpu_custom_call.1} parent=154 // pred_fallthru
          _
        %s1171 = sand.u32 %s74, 1
        %s1172 = sand.u32 %s74, 1
        %s1173 = smul.addr %s1172, 256
        %s1174 = scalar_lea.vmem [#allocation6], %s1173
        // Predicated region
        $region160: #{tpu_custom_call.1} parent=154 // pred_check
          %p1175 = pneg %p87
        $region161: #{tpu_custom_call.1} parent=154 // pred_check_branch
          %1177 = sbr.rel (%p1175) target = $region163
        $region162: #{tpu_custom_call.1} parent=154 // pred_region
          _
        $region163: #{tpu_custom_call.1} parent=154 // pred_fallthru
          _
        %s1178 = sand.u32 %s102, 1
        %s1179 = sand.u32 %s102, 1
        %s1180 = smul.addr %s1179, 256
        %s1181 = scalar_lea.vmem [#allocation7], %s1180
        // Predicated region
        $region164: #{tpu_custom_call.1} parent=154 // pred_check
          %p1182 = pneg %p115
        $region165: #{tpu_custom_call.1} parent=154 // pred_check_branch
          %1184 = sbr.rel (%p1182) target = $region167
        $region166: #{tpu_custom_call.1} parent=154 // pred_region
          _
        $region167: #{tpu_custom_call.1} parent=154 // pred_fallthru
          _
        %s1185 = sand.u32 %s46, 1
        %s1186 = sand.u32 %s46, 1
        %s1187 = smul.addr %s1186, 256
        %s1188 = scalar_lea.vmem [#allocation5], %s1187
        %p1189 = pneg %p59
        %p1190 = pneg %p56
        %s1191 = sand.u32 %s74, 1
        %s1192 = sand.u32 %s74, 1
        %s1193 = smul.addr %s1192, 256
        %s1194 = scalar_lea.vmem [#allocation6], %s1193
        %p1195 = pneg %p87
        %p1196 = pneg %p84
        %s1197 = sand.u32 %s102, 1
        %s1198 = sand.u32 %s102, 1
        %s1199 = smul.addr %s1198, 256
        %s1200 = scalar_lea.vmem [#allocation7], %s1199
        %p1201 = pneg %p115
        %p1202 = pneg %p112
        %p1203 = scmp.lt.s32.totalorder %s24, 2
        %s1204 = scalar_select %p1203, %s24, 2
        %s1205 = scalar_lea.vmem %s3, %s1204
        %p1206 = pneg %p141
        %p1207 = pneg %p138
        %p1208 = pneg %p162
        %p1209 = pneg %p159
        %p1210 = pneg %p183
        %p1211 = pneg %p180
        %p1212 = pneg %p211
        %p1213 = pneg %p208
        %s1214 = smul.u32 16, %s23
        %p1215 = scmp.lt.s32.totalorder %s22, 1
        %s1216 = scalar_select %p1215, %s22, 1
        %p1217 = scmp.lt.s32.totalorder %s1214, 47
        %s1218 = scalar_select %p1217, %s1214, 47
        %s1219 = smul.addr %s1216, 48
        %s1220 = sadd.s32 %s1218, %s1219
        %s1221 = smul.addr %s1220, 8
        %s1222 = scalar_lea.vmem %s6, %s1221
        %s1223 = smul.u32 16, %s23
        %s1224 = smul.u32 16, %s24
        %s1225 = smul.u32 16, %s24
        %p1226 = scmp.lt.s32.totalorder %s24, 2
        %s1227 = scalar_select %p1226, %s24, 2
        %s1228 = scalar_lea.vmem %s3, %s1227
        %s1229 = smul.u32 16, %s23
        %p1230 = scmp.lt.s32.totalorder %s22, 1
        %s1231 = scalar_select %p1230, %s22, 1
        %p1232 = scmp.lt.s32.totalorder %s1229, 47
        %s1233 = scalar_select %p1232, %s1229, 47
        %s1234 = smul.addr %s1231, 48
        %s1235 = sadd.s32 %s1233, %s1234
        %s1236 = smul.addr %s1235, 8
        %s1237 = scalar_lea.vmem %s6, %s1236
        %s1238 = smul.u32 16, %s23
        %p1240 = scmp.eq.s32.totalorder %s24, 0
        // Predicated region
        $region168: #{tpu_custom_call.1} parent=154 // pred_check
          %p1241 = pneg %p1240
        $region169: #{tpu_custom_call.1} parent=154 // pred_check_branch
          %1243 = sbr.rel (%p1241) target = $region171
        $region170: #{tpu_custom_call.1} parent=154 // pred_region
          %vm1244 = vcmask 7168
          %1245 = vst.msk [vmem:[#allocation2] sm:$0xff] %vm1244, -inf
          %1246 = vst.msk [vmem:[#allocation2 + $0x8] sm:$0xff] %vm1244, -inf
          %1247 = vst.msk [vmem:[#allocation2 + $0x10] sm:$0xff] %vm1244, -inf
          %1248 = vst.msk [vmem:[#allocation2 + $0x18] sm:$0xff] %vm1244, -inf
          %1249 = vst.msk [vmem:[#allocation2 + $0x20] sm:$0xff] %vm1244, -inf
          %1250 = vst.msk [vmem:[#allocation2 + $0x28] sm:$0xff] %vm1244, -inf
          %1251 = vst.msk [vmem:[#allocation2 + $0x30] sm:$0xff] %vm1244, -inf
          %1252 = vst.msk [vmem:[#allocation2 + $0x38] sm:$0xff] %vm1244, -inf
          %1253 = vst.msk [vmem:[#allocation2 + $0x40] sm:$0xff] %vm1244, -inf
          %1254 = vst.msk [vmem:[#allocation2 + $0x48] sm:$0xff] %vm1244, -inf
          %1255 = vst.msk [vmem:[#allocation2 + $0x50] sm:$0xff] %vm1244, -inf
          %1256 = vst.msk [vmem:[#allocation2 + $0x58] sm:$0xff] %vm1244, -inf
          %1257 = vst.msk [vmem:[#allocation2 + $0x60] sm:$0xff] %vm1244, -inf
          %1258 = vst.msk [vmem:[#allocation2 + $0x68] sm:$0xff] %vm1244, -inf
          %1259 = vst.msk [vmem:[#allocation2 + $0x70] sm:$0xff] %vm1244, -inf
          %1260 = vst.msk [vmem:[#allocation2 + $0x78] sm:$0xff] %vm1244, -inf
          %1261 = vst.msk [vmem:[#allocation2 + $0x80] sm:$0xff] %vm1244, -inf
          %1262 = vst.msk [vmem:[#allocation2 + $0x88] sm:$0xff] %vm1244, -inf
          %1263 = vst.msk [vmem:[#allocation2 + $0x90] sm:$0xff] %vm1244, -inf
          %1264 = vst.msk [vmem:[#allocation2 + $0x98] sm:$0xff] %vm1244, -inf
          %1265 = vst.msk [vmem:[#allocation2 + $0xa0] sm:$0xff] %vm1244, -inf
          %1266 = vst.msk [vmem:[#allocation2 + $0xa8] sm:$0xff] %vm1244, -inf
          %1267 = vst.msk [vmem:[#allocation2 + $0xb0] sm:$0xff] %vm1244, -inf
          %1268 = vst.msk [vmem:[#allocation2 + $0xb8] sm:$0xff] %vm1244, -inf
          %1269 = vst.msk [vmem:[#allocation2 + $0xc0] sm:$0xff] %vm1244, -inf
          %1270 = vst.msk [vmem:[#allocation2 + $0xc8] sm:$0xff] %vm1244, -inf
          %1271 = vst.msk [vmem:[#allocation2 + $0xd0] sm:$0xff] %vm1244, -inf
          %1272 = vst.msk [vmem:[#allocation2 + $0xd8] sm:$0xff] %vm1244, -inf
          %1273 = vst.msk [vmem:[#allocation2 + $0xe0] sm:$0xff] %vm1244, -inf
          %1274 = vst.msk [vmem:[#allocation2 + $0xe8] sm:$0xff] %vm1244, -inf
          %1275 = vst.msk [vmem:[#allocation2 + $0xf0] sm:$0xff] %vm1244, -inf
          %1276 = vst.msk [vmem:[#allocation2 + $0xf8] sm:$0xff] %vm1244, -inf
          %1277 = vst.msk [vmem:[#allocation2 + $0x100] sm:$0xff] %vm1244, -inf
          %1278 = vst.msk [vmem:[#allocation2 + $0x108] sm:$0xff] %vm1244, -inf
          %1279 = vst.msk [vmem:[#allocation2 + $0x110] sm:$0xff] %vm1244, -inf
          %1280 = vst.msk [vmem:[#allocation2 + $0x118] sm:$0xff] %vm1244, -inf
          %1281 = vst.msk [vmem:[#allocation2 + $0x120] sm:$0xff] %vm1244, -inf
          %1282 = vst.msk [vmem:[#allocation2 + $0x128] sm:$0xff] %vm1244, -inf
          %1283 = vst.msk [vmem:[#allocation2 + $0x130] sm:$0xff] %vm1244, -inf
          %1284 = vst.msk [vmem:[#allocation2 + $0x138] sm:$0xff] %vm1244, -inf
          %1285 = vst.msk [vmem:[#allocation2 + $0x140] sm:$0xff] %vm1244, -inf
          %1286 = vst.msk [vmem:[#allocation2 + $0x148] sm:$0xff] %vm1244, -inf
          %1287 = vst.msk [vmem:[#allocation2 + $0x150] sm:$0xff] %vm1244, -inf
          %1288 = vst.msk [vmem:[#allocation2 + $0x158] sm:$0xff] %vm1244, -inf
          %1289 = vst.msk [vmem:[#allocation2 + $0x160] sm:$0xff] %vm1244, -inf
          %1290 = vst.msk [vmem:[#allocation2 + $0x168] sm:$0xff] %vm1244, -inf
          %1291 = vst.msk [vmem:[#allocation2 + $0x170] sm:$0xff] %vm1244, -inf
          %1292 = vst.msk [vmem:[#allocation2 + $0x178] sm:$0xff] %vm1244, -inf
          %1293 = vst.msk [vmem:[#allocation2 + $0x180] sm:$0xff] %vm1244, -inf
          %1294 = vst.msk [vmem:[#allocation2 + $0x188] sm:$0xff] %vm1244, -inf
          %1295 = vst.msk [vmem:[#allocation2 + $0x190] sm:$0xff] %vm1244, -inf
          %1296 = vst.msk [vmem:[#allocation2 + $0x198] sm:$0xff] %vm1244, -inf
          %1297 = vst.msk [vmem:[#allocation2 + $0x1a0] sm:$0xff] %vm1244, -inf
          %1298 = vst.msk [vmem:[#allocation2 + $0x1a8] sm:$0xff] %vm1244, -inf
          %1299 = vst.msk [vmem:[#allocation2 + $0x1b0] sm:$0xff] %vm1244, -inf
          %1300 = vst.msk [vmem:[#allocation2 + $0x1b8] sm:$0xff] %vm1244, -inf
          %1301 = vst.msk [vmem:[#allocation2 + $0x1c0] sm:$0xff] %vm1244, -inf
          %1302 = vst.msk [vmem:[#allocation2 + $0x1c8] sm:$0xff] %vm1244, -inf
          %1303 = vst.msk [vmem:[#allocation2 + $0x1d0] sm:$0xff] %vm1244, -inf
          %1304 = vst.msk [vmem:[#allocation2 + $0x1d8] sm:$0xff] %vm1244, -inf
          %1305 = vst.msk [vmem:[#allocation2 + $0x1e0] sm:$0xff] %vm1244, -inf
          %1306 = vst.msk [vmem:[#allocation2 + $0x1e8] sm:$0xff] %vm1244, -inf
          %1307 = vst.msk [vmem:[#allocation2 + $0x1f0] sm:$0xff] %vm1244, -inf
          %1308 = vst.msk [vmem:[#allocation2 + $0x1f8] sm:$0xff] %vm1244, -inf
          %1309 = vst.msk [vmem:[#allocation3] sm:$0xff] %vm1244, 0.0
          %1310 = vst.msk [vmem:[#allocation3 + $0x8] sm:$0xff] %vm1244, 0.0
          %1311 = vst.msk [vmem:[#allocation3 + $0x10] sm:$0xff] %vm1244, 0.0
          %1312 = vst.msk [vmem:[#allocation3 + $0x18] sm:$0xff] %vm1244, 0.0
          %1313 = vst.msk [vmem:[#allocation3 + $0x20] sm:$0xff] %vm1244, 0.0
          %1314 = vst.msk [vmem:[#allocation3 + $0x28] sm:$0xff] %vm1244, 0.0
          %1315 = vst.msk [vmem:[#allocation3 + $0x30] sm:$0xff] %vm1244, 0.0
          %1316 = vst.msk [vmem:[#allocation3 + $0x38] sm:$0xff] %vm1244, 0.0
          %1317 = vst.msk [vmem:[#allocation3 + $0x40] sm:$0xff] %vm1244, 0.0
          %1318 = vst.msk [vmem:[#allocation3 + $0x48] sm:$0xff] %vm1244, 0.0
          %1319 = vst.msk [vmem:[#allocation3 + $0x50] sm:$0xff] %vm1244, 0.0
          %1320 = vst.msk [vmem:[#allocation3 + $0x58] sm:$0xff] %vm1244, 0.0
          %1321 = vst.msk [vmem:[#allocation3 + $0x60] sm:$0xff] %vm1244, 0.0
          %1322 = vst.msk [vmem:[#allocation3 + $0x68] sm:$0xff] %vm1244, 0.0
          %1323 = vst.msk [vmem:[#allocation3 + $0x70] sm:$0xff] %vm1244, 0.0
          %1324 = vst.msk [vmem:[#allocation3 + $0x78] sm:$0xff] %vm1244, 0.0
          %1325 = vst.msk [vmem:[#allocation3 + $0x80] sm:$0xff] %vm1244, 0.0
          %1326 = vst.msk [vmem:[#allocation3 + $0x88] sm:$0xff] %vm1244, 0.0
          %1327 = vst.msk [vmem:[#allocation3 + $0x90] sm:$0xff] %vm1244, 0.0
          %1328 = vst.msk [vmem:[#allocation3 + $0x98] sm:$0xff] %vm1244, 0.0
          %1329 = vst.msk [vmem:[#allocation3 + $0xa0] sm:$0xff] %vm1244, 0.0
          %1330 = vst.msk [vmem:[#allocation3 + $0xa8] sm:$0xff] %vm1244, 0.0
          %1331 = vst.msk [vmem:[#allocation3 + $0xb0] sm:$0xff] %vm1244, 0.0
          %1332 = vst.msk [vmem:[#allocation3 + $0xb8] sm:$0xff] %vm1244, 0.0
          %1333 = vst.msk [vmem:[#allocation3 + $0xc0] sm:$0xff] %vm1244, 0.0
          %1334 = vst.msk [vmem:[#allocation3 + $0xc8] sm:$0xff] %vm1244, 0.0
          %1335 = vst.msk [vmem:[#allocation3 + $0xd0] sm:$0xff] %vm1244, 0.0
          %1336 = vst.msk [vmem:[#allocation3 + $0xd8] sm:$0xff] %vm1244, 0.0
          %1337 = vst.msk [vmem:[#allocation3 + $0xe0] sm:$0xff] %vm1244, 0.0
          %1338 = vst.msk [vmem:[#allocation3 + $0xe8] sm:$0xff] %vm1244, 0.0
          %1339 = vst.msk [vmem:[#allocation3 + $0xf0] sm:$0xff] %vm1244, 0.0
          %1340 = vst.msk [vmem:[#allocation3 + $0xf8] sm:$0xff] %vm1244, 0.0
          %1341 = vst.msk [vmem:[#allocation3 + $0x100] sm:$0xff] %vm1244, 0.0
          %1342 = vst.msk [vmem:[#allocation3 + $0x108] sm:$0xff] %vm1244, 0.0
          %1343 = vst.msk [vmem:[#allocation3 + $0x110] sm:$0xff] %vm1244, 0.0
          %1344 = vst.msk [vmem:[#allocation3 + $0x118] sm:$0xff] %vm1244, 0.0
          %1345 = vst.msk [vmem:[#allocation3 + $0x120] sm:$0xff] %vm1244, 0.0
          %1346 = vst.msk [vmem:[#allocation3 + $0x128] sm:$0xff] %vm1244, 0.0
          %1347 = vst.msk [vmem:[#allocation3 + $0x130] sm:$0xff] %vm1244, 0.0
          %1348 = vst.msk [vmem:[#allocation3 + $0x138] sm:$0xff] %vm1244, 0.0
          %1349 = vst.msk [vmem:[#allocation3 + $0x140] sm:$0xff] %vm1244, 0.0
          %1350 = vst.msk [vmem:[#allocation3 + $0x148] sm:$0xff] %vm1244, 0.0
          %1351 = vst.msk [vmem:[#allocation3 + $0x150] sm:$0xff] %vm1244, 0.0
          %1352 = vst.msk [vmem:[#allocation3 + $0x158] sm:$0xff] %vm1244, 0.0
          %1353 = vst.msk [vmem:[#allocation3 + $0x160] sm:$0xff] %vm1244, 0.0
          %1354 = vst.msk [vmem:[#allocation3 + $0x168] sm:$0xff] %vm1244, 0.0
          %1355 = vst.msk [vmem:[#allocation3 + $0x170] sm:$0xff] %vm1244, 0.0
          %1356 = vst.msk [vmem:[#allocation3 + $0x178] sm:$0xff] %vm1244, 0.0
          %1357 = vst.msk [vmem:[#allocation3 + $0x180] sm:$0xff] %vm1244, 0.0
          %1358 = vst.msk [vmem:[#allocation3 + $0x188] sm:$0xff] %vm1244, 0.0
          %1359 = vst.msk [vmem:[#allocation3 + $0x190] sm:$0xff] %vm1244, 0.0
          %1360 = vst.msk [vmem:[#allocation3 + $0x198] sm:$0xff] %vm1244, 0.0
          %1361 = vst.msk [vmem:[#allocation3 + $0x1a0] sm:$0xff] %vm1244, 0.0
          %1362 = vst.msk [vmem:[#allocation3 + $0x1a8] sm:$0xff] %vm1244, 0.0
          %1363 = vst.msk [vmem:[#allocation3 + $0x1b0] sm:$0xff] %vm1244, 0.0
          %1364 = vst.msk [vmem:[#allocation3 + $0x1b8] sm:$0xff] %vm1244, 0.0
          %1365 = vst.msk [vmem:[#allocation3 + $0x1c0] sm:$0xff] %vm1244, 0.0
          %1366 = vst.msk [vmem:[#allocation3 + $0x1c8] sm:$0xff] %vm1244, 0.0
          %1367 = vst.msk [vmem:[#allocation3 + $0x1d0] sm:$0xff] %vm1244, 0.0
          %1368 = vst.msk [vmem:[#allocation3 + $0x1d8] sm:$0xff] %vm1244, 0.0
          %1369 = vst.msk [vmem:[#allocation3 + $0x1e0] sm:$0xff] %vm1244, 0.0
          %1370 = vst.msk [vmem:[#allocation3 + $0x1e8] sm:$0xff] %vm1244, 0.0
          %1371 = vst.msk [vmem:[#allocation3 + $0x1f0] sm:$0xff] %vm1244, 0.0
          %1372 = vst.msk [vmem:[#allocation3 + $0x1f8] sm:$0xff] %vm1244, 0.0
          %vm1373 = vcmask 261120
          %1374 = vst.msk [vmem:[#allocation4] sm:$0xff] %vm1373, 0.0
          %1375 = vst.msk [vmem:[#allocation4 + $0x8] sm:$0xff] %vm1373, 0.0
          %1376 = vst.msk [vmem:[#allocation4 + $0x10] sm:$0xff] %vm1373, 0.0
          %1377 = vst.msk [vmem:[#allocation4 + $0x18] sm:$0xff] %vm1373, 0.0
          %1378 = vst.msk [vmem:[#allocation4 + $0x20] sm:$0xff] %vm1373, 0.0
          %1379 = vst.msk [vmem:[#allocation4 + $0x28] sm:$0xff] %vm1373, 0.0
          %1380 = vst.msk [vmem:[#allocation4 + $0x30] sm:$0xff] %vm1373, 0.0
          %1381 = vst.msk [vmem:[#allocation4 + $0x38] sm:$0xff] %vm1373, 0.0
          %1382 = vst.msk [vmem:[#allocation4 + $0x40] sm:$0xff] %vm1373, 0.0
          %1383 = vst.msk [vmem:[#allocation4 + $0x48] sm:$0xff] %vm1373, 0.0
          %1384 = vst.msk [vmem:[#allocation4 + $0x50] sm:$0xff] %vm1373, 0.0
          %1385 = vst.msk [vmem:[#allocation4 + $0x58] sm:$0xff] %vm1373, 0.0
          %1386 = vst.msk [vmem:[#allocation4 + $0x60] sm:$0xff] %vm1373, 0.0
          %1387 = vst.msk [vmem:[#allocation4 + $0x68] sm:$0xff] %vm1373, 0.0
          %1388 = vst.msk [vmem:[#allocation4 + $0x70] sm:$0xff] %vm1373, 0.0
          %1389 = vst.msk [vmem:[#allocation4 + $0x78] sm:$0xff] %vm1373, 0.0
          %1390 = vst.msk [vmem:[#allocation4 + $0x80] sm:$0xff] %vm1373, 0.0
          %1391 = vst.msk [vmem:[#allocation4 + $0x88] sm:$0xff] %vm1373, 0.0
          %1392 = vst.msk [vmem:[#allocation4 + $0x90] sm:$0xff] %vm1373, 0.0
          %1393 = vst.msk [vmem:[#allocation4 + $0x98] sm:$0xff] %vm1373, 0.0
          %1394 = vst.msk [vmem:[#allocation4 + $0xa0] sm:$0xff] %vm1373, 0.0
          %1395 = vst.msk [vmem:[#allocation4 + $0xa8] sm:$0xff] %vm1373, 0.0
          %1396 = vst.msk [vmem:[#allocation4 + $0xb0] sm:$0xff] %vm1373, 0.0
          %1397 = vst.msk [vmem:[#allocation4 + $0xb8] sm:$0xff] %vm1373, 0.0
          %1398 = vst.msk [vmem:[#allocation4 + $0xc0] sm:$0xff] %vm1373, 0.0
          %1399 = vst.msk [vmem:[#allocation4 + $0xc8] sm:$0xff] %vm1373, 0.0
          %1400 = vst.msk [vmem:[#allocation4 + $0xd0] sm:$0xff] %vm1373, 0.0
          %1401 = vst.msk [vmem:[#allocation4 + $0xd8] sm:$0xff] %vm1373, 0.0
          %1402 = vst.msk [vmem:[#allocation4 + $0xe0] sm:$0xff] %vm1373, 0.0
          %1403 = vst.msk [vmem:[#allocation4 + $0xe8] sm:$0xff] %vm1373, 0.0
          %1404 = vst.msk [vmem:[#allocation4 + $0xf0] sm:$0xff] %vm1373, 0.0
          %1405 = vst.msk [vmem:[#allocation4 + $0xf8] sm:$0xff] %vm1373, 0.0
          %1406 = vst.msk [vmem:[#allocation4 + $0x100] sm:$0xff] %vm1373, 0.0
          %1407 = vst.msk [vmem:[#allocation4 + $0x108] sm:$0xff] %vm1373, 0.0
          %1408 = vst.msk [vmem:[#allocation4 + $0x110] sm:$0xff] %vm1373, 0.0
          %1409 = vst.msk [vmem:[#allocation4 + $0x118] sm:$0xff] %vm1373, 0.0
          %1410 = vst.msk [vmem:[#allocation4 + $0x120] sm:$0xff] %vm1373, 0.0
          %1411 = vst.msk [vmem:[#allocation4 + $0x128] sm:$0xff] %vm1373, 0.0
          %1412 = vst.msk [vmem:[#allocation4 + $0x130] sm:$0xff] %vm1373, 0.0
          %1413 = vst.msk [vmem:[#allocation4 + $0x138] sm:$0xff] %vm1373, 0.0
          %1414 = vst.msk [vmem:[#allocation4 + $0x140] sm:$0xff] %vm1373, 0.0
          %1415 = vst.msk [vmem:[#allocation4 + $0x148] sm:$0xff] %vm1373, 0.0
          %1416 = vst.msk [vmem:[#allocation4 + $0x150] sm:$0xff] %vm1373, 0.0
          %1417 = vst.msk [vmem:[#allocation4 + $0x158] sm:$0xff] %vm1373, 0.0
          %1418 = vst.msk [vmem:[#allocation4 + $0x160] sm:$0xff] %vm1373, 0.0
          %1419 = vst.msk [vmem:[#allocation4 + $0x168] sm:$0xff] %vm1373, 0.0
          %1420 = vst.msk [vmem:[#allocation4 + $0x170] sm:$0xff] %vm1373, 0.0
          %1421 = vst.msk [vmem:[#allocation4 + $0x178] sm:$0xff] %vm1373, 0.0
          %1422 = vst.msk [vmem:[#allocation4 + $0x180] sm:$0xff] %vm1373, 0.0
          %1423 = vst.msk [vmem:[#allocation4 + $0x188] sm:$0xff] %vm1373, 0.0
          %1424 = vst.msk [vmem:[#allocation4 + $0x190] sm:$0xff] %vm1373, 0.0
          %1425 = vst.msk [vmem:[#allocation4 + $0x198] sm:$0xff] %vm1373, 0.0
          %1426 = vst.msk [vmem:[#allocation4 + $0x1a0] sm:$0xff] %vm1373, 0.0
          %1427 = vst.msk [vmem:[#allocation4 + $0x1a8] sm:$0xff] %vm1373, 0.0
          %1428 = vst.msk [vmem:[#allocation4 + $0x1b0] sm:$0xff] %vm1373, 0.0
          %1429 = vst.msk [vmem:[#allocation4 + $0x1b8] sm:$0xff] %vm1373, 0.0
          %1430 = vst.msk [vmem:[#allocation4 + $0x1c0] sm:$0xff] %vm1373, 0.0
          %1431 = vst.msk [vmem:[#allocation4 + $0x1c8] sm:$0xff] %vm1373, 0.0
          %1432 = vst.msk [vmem:[#allocation4 + $0x1d0] sm:$0xff] %vm1373, 0.0
          %1433 = vst.msk [vmem:[#allocation4 + $0x1d8] sm:$0xff] %vm1373, 0.0
          %1434 = vst.msk [vmem:[#allocation4 + $0x1e0] sm:$0xff] %vm1373, 0.0
          %1435 = vst.msk [vmem:[#allocation4 + $0x1e8] sm:$0xff] %vm1373, 0.0
          %1436 = vst.msk [vmem:[#allocation4 + $0x1f0] sm:$0xff] %vm1373, 0.0
          %1437 = vst.msk [vmem:[#allocation4 + $0x1f8] sm:$0xff] %vm1373, 0.0
        $region171: #{tpu_custom_call.1} parent=154 // pred_fallthru
          _
        %v1438 = vld [vmem:[%s1167] sm:$0xf]
        %v1439 = vld [vmem:[%s1167 + $0x4] sm:$0xf]
        %v1440 = vld [vmem:[%s1167 + $0x8] sm:$0xf]
        %v1441 = vld [vmem:[%s1167 + $0xc] sm:$0xf]
        %v1442 = vld [vmem:[%s1167 + $0x10] sm:$0xf]
        %v1443 = vld [vmem:[%s1167 + $0x14] sm:$0xf]
        %v1444 = vld [vmem:[%s1167 + $0x18] sm:$0xf]
        %v1445 = vld [vmem:[%s1167 + $0x1c] sm:$0xf]
        %v1446 = vld [vmem:[%s1167 + $0x20] sm:$0xf]
        %v1447 = vld [vmem:[%s1167 + $0x24] sm:$0xf]
        %v1448 = vld [vmem:[%s1167 + $0x28] sm:$0xf]
        %v1449 = vld [vmem:[%s1167 + $0x2c] sm:$0xf]
        %v1450 = vld [vmem:[%s1167 + $0x30] sm:$0xf]
        %v1451 = vld [vmem:[%s1167 + $0x34] sm:$0xf]
        %v1452 = vld [vmem:[%s1167 + $0x38] sm:$0xf]
        %v1453 = vld [vmem:[%s1167 + $0x3c] sm:$0xf]
        %v1454 = vld [vmem:[%s1167 + $0x40] sm:$0xf]
        %v1455 = vld [vmem:[%s1167 + $0x44] sm:$0xf]
        %v1456 = vld [vmem:[%s1167 + $0x48] sm:$0xf]
        %v1457 = vld [vmem:[%s1167 + $0x4c] sm:$0xf]
        %v1458 = vld [vmem:[%s1167 + $0x50] sm:$0xf]
        %v1459 = vld [vmem:[%s1167 + $0x54] sm:$0xf]
        %v1460 = vld [vmem:[%s1167 + $0x58] sm:$0xf]
        %v1461 = vld [vmem:[%s1167 + $0x5c] sm:$0xf]
        %v1462 = vld [vmem:[%s1167 + $0x60] sm:$0xf]
        %v1463 = vld [vmem:[%s1167 + $0x64] sm:$0xf]
        %v1464 = vld [vmem:[%s1167 + $0x68] sm:$0xf]
        %v1465 = vld [vmem:[%s1167 + $0x6c] sm:$0xf]
        %v1466 = vld [vmem:[%s1167 + $0x70] sm:$0xf]
        %v1467 = vld [vmem:[%s1167 + $0x74] sm:$0xf]
        %v1468 = vld [vmem:[%s1167 + $0x78] sm:$0xf]
        %v1469 = vld [vmem:[%s1167 + $0x7c] sm:$0xf]
        %v1470 = vld [vmem:[%s1167 + $0x80] sm:$0xf]
        %v1471 = vld [vmem:[%s1167 + $0x84] sm:$0xf]
        %v1472 = vld [vmem:[%s1167 + $0x88] sm:$0xf]
        %v1473 = vld [vmem:[%s1167 + $0x8c] sm:$0xf]
        %v1474 = vld [vmem:[%s1167 + $0x90] sm:$0xf]
        %v1475 = vld [vmem:[%s1167 + $0x94] sm:$0xf]
        %v1476 = vld [vmem:[%s1167 + $0x98] sm:$0xf]
        %v1477 = vld [vmem:[%s1167 + $0x9c] sm:$0xf]
        %v1478 = vld [vmem:[%s1167 + $0xa0] sm:$0xf]
        %v1479 = vld [vmem:[%s1167 + $0xa4] sm:$0xf]
        %v1480 = vld [vmem:[%s1167 + $0xa8] sm:$0xf]
        %v1481 = vld [vmem:[%s1167 + $0xac] sm:$0xf]
        %v1482 = vld [vmem:[%s1167 + $0xb0] sm:$0xf]
        %v1483 = vld [vmem:[%s1167 + $0xb4] sm:$0xf]
        %v1484 = vld [vmem:[%s1167 + $0xb8] sm:$0xf]
        %v1485 = vld [vmem:[%s1167 + $0xbc] sm:$0xf]
        %v1486 = vld [vmem:[%s1167 + $0xc0] sm:$0xf]
        %v1487 = vld [vmem:[%s1167 + $0xc4] sm:$0xf]
        %v1488 = vld [vmem:[%s1167 + $0xc8] sm:$0xf]
        %v1489 = vld [vmem:[%s1167 + $0xcc] sm:$0xf]
        %v1490 = vld [vmem:[%s1167 + $0xd0] sm:$0xf]
        %v1491 = vld [vmem:[%s1167 + $0xd4] sm:$0xf]
        %v1492 = vld [vmem:[%s1167 + $0xd8] sm:$0xf]
        %v1493 = vld [vmem:[%s1167 + $0xdc] sm:$0xf]
        %v1494 = vld [vmem:[%s1167 + $0xe0] sm:$0xf]
        %v1495 = vld [vmem:[%s1167 + $0xe4] sm:$0xf]
        %v1496 = vld [vmem:[%s1167 + $0xe8] sm:$0xf]
        %v1497 = vld [vmem:[%s1167 + $0xec] sm:$0xf]
        %v1498 = vld [vmem:[%s1167 + $0xf0] sm:$0xf]
        %v1499 = vld [vmem:[%s1167 + $0xf4] sm:$0xf]
        %v1500 = vld [vmem:[%s1167 + $0xf8] sm:$0xf]
        %v1501 = vld [vmem:[%s1167 + $0xfc] sm:$0xf]
        %v1502 = vld [vmem:[%s1174] sm:$0xf]
        %v1503 = vld [vmem:[%s1174 + $0x4] sm:$0xf]
        %v1504 = vld [vmem:[%s1174 + $0x8] sm:$0xf]
        %v1505 = vld [vmem:[%s1174 + $0xc] sm:$0xf]
        %v1506 = vld [vmem:[%s1174 + $0x10] sm:$0xf]
        %v1507 = vld [vmem:[%s1174 + $0x14] sm:$0xf]
        %v1508 = vld [vmem:[%s1174 + $0x18] sm:$0xf]
        %v1509 = vld [vmem:[%s1174 + $0x1c] sm:$0xf]
        %v1510 = vld [vmem:[%s1174 + $0x20] sm:$0xf]
        %v1511 = vld [vmem:[%s1174 + $0x24] sm:$0xf]
        %v1512 = vld [vmem:[%s1174 + $0x28] sm:$0xf]
        %v1513 = vld [vmem:[%s1174 + $0x2c] sm:$0xf]
        %v1514 = vld [vmem:[%s1174 + $0x30] sm:$0xf]
        %v1515 = vld [vmem:[%s1174 + $0x34] sm:$0xf]
        %v1516 = vld [vmem:[%s1174 + $0x38] sm:$0xf]
        %v1517 = vld [vmem:[%s1174 + $0x3c] sm:$0xf]
        %v1518 = vld [vmem:[%s1174 + $0x40] sm:$0xf]
        %v1519 = vld [vmem:[%s1174 + $0x44] sm:$0xf]
        %v1520 = vld [vmem:[%s1174 + $0x48] sm:$0xf]
        %v1521 = vld [vmem:[%s1174 + $0x4c] sm:$0xf]
        %v1522 = vld [vmem:[%s1174 + $0x50] sm:$0xf]
        %v1523 = vld [vmem:[%s1174 + $0x54] sm:$0xf]
        %v1524 = vld [vmem:[%s1174 + $0x58] sm:$0xf]
        %v1525 = vld [vmem:[%s1174 + $0x5c] sm:$0xf]
        %v1526 = vld [vmem:[%s1174 + $0x60] sm:$0xf]
        %v1527 = vld [vmem:[%s1174 + $0x64] sm:$0xf]
        %v1528 = vld [vmem:[%s1174 + $0x68] sm:$0xf]
        %v1529 = vld [vmem:[%s1174 + $0x6c] sm:$0xf]
        %v1530 = vld [vmem:[%s1174 + $0x70] sm:$0xf]
        %v1531 = vld [vmem:[%s1174 + $0x74] sm:$0xf]
        %v1532 = vld [vmem:[%s1174 + $0x78] sm:$0xf]
        %v1533 = vld [vmem:[%s1174 + $0x7c] sm:$0xf]
        %v1534 = vld [vmem:[%s1174 + $0x80] sm:$0xf]
        %v1535 = vld [vmem:[%s1174 + $0x84] sm:$0xf]
        %v1536 = vld [vmem:[%s1174 + $0x88] sm:$0xf]
        %v1537 = vld [vmem:[%s1174 + $0x8c] sm:$0xf]
        %v1538 = vld [vmem:[%s1174 + $0x90] sm:$0xf]
        %v1539 = vld [vmem:[%s1174 + $0x94] sm:$0xf]
        %v1540 = vld [vmem:[%s1174 + $0x98] sm:$0xf]
        %v1541 = vld [vmem:[%s1174 + $0x9c] sm:$0xf]
        %v1542 = vld [vmem:[%s1174 + $0xa0] sm:$0xf]
        %v1543 = vld [vmem:[%s1174 + $0xa4] sm:$0xf]
        %v1544 = vld [vmem:[%s1174 + $0xa8] sm:$0xf]
        %v1545 = vld [vmem:[%s1174 + $0xac] sm:$0xf]
        %v1546 = vld [vmem:[%s1174 + $0xb0] sm:$0xf]
        %v1547 = vld [vmem:[%s1174 + $0xb4] sm:$0xf]
        %v1548 = vld [vmem:[%s1174 + $0xb8] sm:$0xf]
        %v1549 = vld [vmem:[%s1174 + $0xbc] sm:$0xf]
        %v1550 = vld [vmem:[%s1174 + $0xc0] sm:$0xf]
        %v1551 = vld [vmem:[%s1174 + $0xc4] sm:$0xf]
        %v1552 = vld [vmem:[%s1174 + $0xc8] sm:$0xf]
        %v1553 = vld [vmem:[%s1174 + $0xcc] sm:$0xf]
        %v1554 = vld [vmem:[%s1174 + $0xd0] sm:$0xf]
        %v1555 = vld [vmem:[%s1174 + $0xd4] sm:$0xf]
        %v1556 = vld [vmem:[%s1174 + $0xd8] sm:$0xf]
        %v1557 = vld [vmem:[%s1174 + $0xdc] sm:$0xf]
        %v1558 = vld [vmem:[%s1174 + $0xe0] sm:$0xf]
        %v1559 = vld [vmem:[%s1174 + $0xe4] sm:$0xf]
        %v1560 = vld [vmem:[%s1174 + $0xe8] sm:$0xf]
        %v1561 = vld [vmem:[%s1174 + $0xec] sm:$0xf]
        %v1562 = vld [vmem:[%s1174 + $0xf0] sm:$0xf]
        %v1563 = vld [vmem:[%s1174 + $0xf4] sm:$0xf]
        %v1564 = vld [vmem:[%s1174 + $0xf8] sm:$0xf]
        %v1565 = vld [vmem:[%s1174 + $0xfc] sm:$0xf]
        %v1566 = vld [vmem:[%s1181] sm:$0xf]
        %v1567 = vld [vmem:[%s1181 + $0x4] sm:$0xf]
        %v1568 = vld [vmem:[%s1181 + $0x8] sm:$0xf]
        %v1569 = vld [vmem:[%s1181 + $0xc] sm:$0xf]
        %v1570 = vld [vmem:[%s1181 + $0x10] sm:$0xf]
        %v1571 = vld [vmem:[%s1181 + $0x14] sm:$0xf]
        %v1572 = vld [vmem:[%s1181 + $0x18] sm:$0xf]
        %v1573 = vld [vmem:[%s1181 + $0x1c] sm:$0xf]
        %v1574 = vld [vmem:[%s1181 + $0x20] sm:$0xf]
        %v1575 = vld [vmem:[%s1181 + $0x24] sm:$0xf]
        %v1576 = vld [vmem:[%s1181 + $0x28] sm:$0xf]
        %v1577 = vld [vmem:[%s1181 + $0x2c] sm:$0xf]
        %v1578 = vld [vmem:[%s1181 + $0x30] sm:$0xf]
        %v1579 = vld [vmem:[%s1181 + $0x34] sm:$0xf]
        %v1580 = vld [vmem:[%s1181 + $0x38] sm:$0xf]
        %v1581 = vld [vmem:[%s1181 + $0x3c] sm:$0xf]
        %v1582 = vld [vmem:[%s1181 + $0x40] sm:$0xf]
        %v1583 = vld [vmem:[%s1181 + $0x44] sm:$0xf]
        %v1584 = vld [vmem:[%s1181 + $0x48] sm:$0xf]
        %v1585 = vld [vmem:[%s1181 + $0x4c] sm:$0xf]
        %v1586 = vld [vmem:[%s1181 + $0x50] sm:$0xf]
        %v1587 = vld [vmem:[%s1181 + $0x54] sm:$0xf]
        %v1588 = vld [vmem:[%s1181 + $0x58] sm:$0xf]
        %v1589 = vld [vmem:[%s1181 + $0x5c] sm:$0xf]
        %v1590 = vld [vmem:[%s1181 + $0x60] sm:$0xf]
        %v1591 = vld [vmem:[%s1181 + $0x64] sm:$0xf]
        %v1592 = vld [vmem:[%s1181 + $0x68] sm:$0xf]
        %v1593 = vld [vmem:[%s1181 + $0x6c] sm:$0xf]
        %v1594 = vld [vmem:[%s1181 + $0x70] sm:$0xf]
        %v1595 = vld [vmem:[%s1181 + $0x74] sm:$0xf]
        %v1596 = vld [vmem:[%s1181 + $0x78] sm:$0xf]
        %v1597 = vld [vmem:[%s1181 + $0x7c] sm:$0xf]
        %v1598 = vld [vmem:[%s1181 + $0x80] sm:$0xf]
        %v1599 = vld [vmem:[%s1181 + $0x84] sm:$0xf]
        %v1600 = vld [vmem:[%s1181 + $0x88] sm:$0xf]
        %v1601 = vld [vmem:[%s1181 + $0x8c] sm:$0xf]
        %v1602 = vld [vmem:[%s1181 + $0x90] sm:$0xf]
        %v1603 = vld [vmem:[%s1181 + $0x94] sm:$0xf]
        %v1604 = vld [vmem:[%s1181 + $0x98] sm:$0xf]
        %v1605 = vld [vmem:[%s1181 + $0x9c] sm:$0xf]
        %v1606 = vld [vmem:[%s1181 + $0xa0] sm:$0xf]
        %v1607 = vld [vmem:[%s1181 + $0xa4] sm:$0xf]
        %v1608 = vld [vmem:[%s1181 + $0xa8] sm:$0xf]
        %v1609 = vld [vmem:[%s1181 + $0xac] sm:$0xf]
        %v1610 = vld [vmem:[%s1181 + $0xb0] sm:$0xf]
        %v1611 = vld [vmem:[%s1181 + $0xb4] sm:$0xf]
        %v1612 = vld [vmem:[%s1181 + $0xb8] sm:$0xf]
        %v1613 = vld [vmem:[%s1181 + $0xbc] sm:$0xf]
        %v1614 = vld [vmem:[%s1181 + $0xc0] sm:$0xf]
        %v1615 = vld [vmem:[%s1181 + $0xc4] sm:$0xf]
        %v1616 = vld [vmem:[%s1181 + $0xc8] sm:$0xf]
        %v1617 = vld [vmem:[%s1181 + $0xcc] sm:$0xf]
        %v1618 = vld [vmem:[%s1181 + $0xd0] sm:$0xf]
        %v1619 = vld [vmem:[%s1181 + $0xd4] sm:$0xf]
        %v1620 = vld [vmem:[%s1181 + $0xd8] sm:$0xf]
        %v1621 = vld [vmem:[%s1181 + $0xdc] sm:$0xf]
        %v1622 = vld [vmem:[%s1181 + $0xe0] sm:$0xf]
        %v1623 = vld [vmem:[%s1181 + $0xe4] sm:$0xf]
        %v1624 = vld [vmem:[%s1181 + $0xe8] sm:$0xf]
        %v1625 = vld [vmem:[%s1181 + $0xec] sm:$0xf]
        %v1626 = vld [vmem:[%s1181 + $0xf0] sm:$0xf]
        %v1627 = vld [vmem:[%s1181 + $0xf4] sm:$0xf]
        %v1628 = vld [vmem:[%s1181 + $0xf8] sm:$0xf]
        %v1629 = vld [vmem:[%s1181 + $0xfc] sm:$0xf]
        %v1646 = vunpack.c.l.b16 %v1438
        %v1647 = vunpack.c.l.b16 %v1439
        %v1648 = vunpack.c.l.b16 %v1440
        %v1649 = vunpack.c.l.b16 %v1441
        %v1650 = vunpack.c.l.b16 %v1442
        %v1651 = vunpack.c.l.b16 %v1443
        %v1652 = vunpack.c.l.b16 %v1444
        %v1653 = vunpack.c.l.b16 %v1445
        %v1654 = vunpack.c.l.b16 %v1446
        %v1655 = vunpack.c.l.b16 %v1447
        %v1656 = vunpack.c.l.b16 %v1448
        %v1657 = vunpack.c.l.b16 %v1449
        %v1658 = vunpack.c.l.b16 %v1450
        %v1659 = vunpack.c.l.b16 %v1451
        %v1660 = vunpack.c.l.b16 %v1452
        %v1661 = vunpack.c.l.b16 %v1453
        %v1662 = vpack.c.b16 %v1647, %v1646
        %v1663 = vpack.c.b16 %v1649, %v1648
        %v1664 = vpack.c.b16 %v1651, %v1650
        %v1665 = vpack.c.b16 %v1653, %v1652
        %v1666 = vpack.c.b16 %v1655, %v1654
        %v1667 = vpack.c.b16 %v1657, %v1656
        %v1668 = vpack.c.b16 %v1659, %v1658
        %v1669 = vpack.c.b16 %v1661, %v1660
        %v1686 = vunpack.c.l.b16 %v1502
        %v1687 = vunpack.c.l.b16 %v1503
        %v1688 = vunpack.c.l.b16 %v1504
        %v1689 = vunpack.c.l.b16 %v1505
        %v1690 = vunpack.c.l.b16 %v1506
        %v1691 = vunpack.c.l.b16 %v1507
        %v1692 = vunpack.c.l.b16 %v1508
        %v1693 = vunpack.c.l.b16 %v1509
        %v1694 = vunpack.c.l.b16 %v1510
        %v1695 = vunpack.c.l.b16 %v1511
        %v1696 = vunpack.c.l.b16 %v1512
        %v1697 = vunpack.c.l.b16 %v1513
        %v1698 = vunpack.c.l.b16 %v1514
        %v1699 = vunpack.c.l.b16 %v1515
        %v1700 = vunpack.c.l.b16 %v1516
        %v1701 = vunpack.c.l.b16 %v1517
        %v1702 = vpack.c.b16 %v1687, %v1686
        %v1703 = vpack.c.b16 %v1689, %v1688
        %v1704 = vpack.c.b16 %v1691, %v1690
        %v1705 = vpack.c.b16 %v1693, %v1692
        %v1706 = vpack.c.b16 %v1695, %v1694
        %v1707 = vpack.c.b16 %v1697, %v1696
        %v1708 = vpack.c.b16 %v1699, %v1698
        %v1709 = vpack.c.b16 %v1701, %v1700
        %vm1710 = vcmask 261120
        %v1712 = vsel %vm1710, %v1662, 0
        %v1715 = vsel %vm1710, %v1663, 0
        %v1718 = vsel %vm1710, %v1664, 0
        %v1721 = vsel %vm1710, %v1665, 0
        %v1724 = vsel %vm1710, %v1666, 0
        %v1727 = vsel %vm1710, %v1667, 0
        %v1730 = vsel %vm1710, %v1668, 0
        %v1733 = vsel %vm1710, %v1669, 0
        %v1736 = vsel %vm1710, %v1702, 0
        %v1739 = vsel %vm1710, %v1703, 0
        %v1742 = vsel %vm1710, %v1704, 0
        %v1745 = vsel %vm1710, %v1705, 0
        %v1748 = vsel %vm1710, %v1706, 0
        %v1751 = vsel %vm1710, %v1707, 0
        %v1754 = vsel %vm1710, %v1708, 0
        %v1757 = vsel %vm1710, %v1709, 0
        %1759 = vmatpush.bf16.xpose.msra.mxu0 %v1757
        %1760 = vmatpush.bf16.xpose.msra.mxu0 %v1754
        %1761 = vmatpush.bf16.xpose.msra.mxu0 %v1751
        %1762 = vmatpush.bf16.xpose.msra.mxu0 %v1748
        %1763 = vmatpush.bf16.xpose.msra.mxu0 %v1745
        %1764 = vmatpush.bf16.xpose.msra.mxu0 %v1742
        %1765 = vmatpush.bf16.xpose.msra.mxu0 %v1739
        %1766 = vmatpush.bf16.xpose.msra.mxu0 %v1736
        %1767 = vmatmul.bf16.gmra.mxu0 %v1712
        %v1768 = vpop.f32.mrf.mxu0
        %v1769 = vadd.f32 0.0, %v1768
        %v1770 = vpop.f32.mrf.mxu0
        %v1771 = vadd.f32 0.0, %v1770
        %1772 = vmatmul.bf16.gmra.mxu0 %v1715
        %v1773 = vpop.f32.mrf.mxu0
        %v1774 = vadd.f32 0.0, %v1773
        %v1775 = vpop.f32.mrf.mxu0
        %v1776 = vadd.f32 0.0, %v1775
        %1777 = vmatmul.bf16.gmra.mxu0 %v1718
        %v1778 = vpop.f32.mrf.mxu0
        %v1779 = vadd.f32 0.0, %v1778
        %v1780 = vpop.f32.mrf.mxu0
        %v1781 = vadd.f32 0.0, %v1780
        %1782 = vmatmul.bf16.gmra.mxu0 %v1721
        %v1783 = vpop.f32.mrf.mxu0
        %v1784 = vadd.f32 0.0, %v1783
        %v1785 = vpop.f32.mrf.mxu0
        %v1786 = vadd.f32 0.0, %v1785
        %1787 = vmatmul.bf16.gmra.mxu0 %v1724
        %v1788 = vpop.f32.mrf.mxu0
        %v1789 = vadd.f32 0.0, %v1788
        %v1790 = vpop.f32.mrf.mxu0
        %v1791 = vadd.f32 0.0, %v1790
        %1792 = vmatmul.bf16.gmra.mxu0 %v1727
        %v1793 = vpop.f32.mrf.mxu0
        %v1794 = vadd.f32 0.0, %v1793
        %v1795 = vpop.f32.mrf.mxu0
        %v1796 = vadd.f32 0.0, %v1795
        %1797 = vmatmul.bf16.gmra.mxu0 %v1730
        %v1798 = vpop.f32.mrf.mxu0
        %v1799 = vadd.f32 0.0, %v1798
        %v1800 = vpop.f32.mrf.mxu0
        %v1801 = vadd.f32 0.0, %v1800
        %1802 = vmatmul.bf16.gmra.mxu0 %v1733
        %v1803 = vpop.f32.mrf.mxu0
        %v1804 = vadd.f32 0.0, %v1803
        %v1805 = vpop.f32.mrf.mxu0
        %v1806 = vadd.f32 0.0, %v1805
        %1807 = vdwg.mxu0
        %v1824 = vunpack.c.l.b16 %v1454
        %v1825 = vunpack.c.l.b16 %v1455
        %v1826 = vunpack.c.l.b16 %v1456
        %v1827 = vunpack.c.l.b16 %v1457
        %v1828 = vunpack.c.l.b16 %v1458
        %v1829 = vunpack.c.l.b16 %v1459
        %v1830 = vunpack.c.l.b16 %v1460
        %v1831 = vunpack.c.l.b16 %v1461
        %v1832 = vunpack.c.l.b16 %v1462
        %v1833 = vunpack.c.l.b16 %v1463
        %v1834 = vunpack.c.l.b16 %v1464
        %v1835 = vunpack.c.l.b16 %v1465
        %v1836 = vunpack.c.l.b16 %v1466
        %v1837 = vunpack.c.l.b16 %v1467
        %v1838 = vunpack.c.l.b16 %v1468
        %v1839 = vunpack.c.l.b16 %v1469
        %v1840 = vpack.c.b16 %v1825, %v1824
        %v1841 = vpack.c.b16 %v1827, %v1826
        %v1842 = vpack.c.b16 %v1829, %v1828
        %v1843 = vpack.c.b16 %v1831, %v1830
        %v1844 = vpack.c.b16 %v1833, %v1832
        %v1845 = vpack.c.b16 %v1835, %v1834
        %v1846 = vpack.c.b16 %v1837, %v1836
        %v1847 = vpack.c.b16 %v1839, %v1838
        %v1864 = vunpack.c.l.b16 %v1518
        %v1865 = vunpack.c.l.b16 %v1519
        %v1866 = vunpack.c.l.b16 %v1520
        %v1867 = vunpack.c.l.b16 %v1521
        %v1868 = vunpack.c.l.b16 %v1522
        %v1869 = vunpack.c.l.b16 %v1523
        %v1870 = vunpack.c.l.b16 %v1524
        %v1871 = vunpack.c.l.b16 %v1525
        %v1872 = vunpack.c.l.b16 %v1526
        %v1873 = vunpack.c.l.b16 %v1527
        %v1874 = vunpack.c.l.b16 %v1528
        %v1875 = vunpack.c.l.b16 %v1529
        %v1876 = vunpack.c.l.b16 %v1530
        %v1877 = vunpack.c.l.b16 %v1531
        %v1878 = vunpack.c.l.b16 %v1532
        %v1879 = vunpack.c.l.b16 %v1533
        %v1880 = vpack.c.b16 %v1865, %v1864
        %v1881 = vpack.c.b16 %v1867, %v1866
        %v1882 = vpack.c.b16 %v1869, %v1868
        %v1883 = vpack.c.b16 %v1871, %v1870
        %v1884 = vpack.c.b16 %v1873, %v1872
        %v1885 = vpack.c.b16 %v1875, %v1874
        %v1886 = vpack.c.b16 %v1877, %v1876
        %v1887 = vpack.c.b16 %v1879, %v1878
        %v1889 = vsel %vm1710, %v1840, 0
        %v1892 = vsel %vm1710, %v1841, 0
        %v1895 = vsel %vm1710, %v1842, 0
        %v1898 = vsel %vm1710, %v1843, 0
        %v1901 = vsel %vm1710, %v1844, 0
        %v1904 = vsel %vm1710, %v1845, 0
        %v1907 = vsel %vm1710, %v1846, 0
        %v1910 = vsel %vm1710, %v1847, 0
        %v1913 = vsel %vm1710, %v1880, 0
        %v1916 = vsel %vm1710, %v1881, 0
        %v1919 = vsel %vm1710, %v1882, 0
        %v1922 = vsel %vm1710, %v1883, 0
        %v1925 = vsel %vm1710, %v1884, 0
        %v1928 = vsel %vm1710, %v1885, 0
        %v1931 = vsel %vm1710, %v1886, 0
        %v1934 = vsel %vm1710, %v1887, 0
        %1936 = vmatpush.bf16.xpose.msra.mxu0 %v1934
        %1937 = vmatpush.bf16.xpose.msra.mxu0 %v1931
        %1938 = vmatpush.bf16.xpose.msra.mxu0 %v1928
        %1939 = vmatpush.bf16.xpose.msra.mxu0 %v1925
        %1940 = vmatpush.bf16.xpose.msra.mxu0 %v1922
        %1941 = vmatpush.bf16.xpose.msra.mxu0 %v1919
        %1942 = vmatpush.bf16.xpose.msra.mxu0 %v1916
        %1943 = vmatpush.bf16.xpose.msra.mxu0 %v1913
        %1944 = vmatmul.bf16.gmra.mxu0 %v1889
        %v1945 = vpop.f32.mrf.mxu0
        %v1946 = vadd.f32 0.0, %v1945
        %v1947 = vpop.f32.mrf.mxu0
        %v1948 = vadd.f32 0.0, %v1947
        %1949 = vmatmul.bf16.gmra.mxu0 %v1892
        %v1950 = vpop.f32.mrf.mxu0
        %v1951 = vadd.f32 0.0, %v1950
        %v1952 = vpop.f32.mrf.mxu0
        %v1953 = vadd.f32 0.0, %v1952
        %1954 = vmatmul.bf16.gmra.mxu0 %v1895
        %v1955 = vpop.f32.mrf.mxu0
        %v1956 = vadd.f32 0.0, %v1955
        %v1957 = vpop.f32.mrf.mxu0
        %v1958 = vadd.f32 0.0, %v1957
        %1959 = vmatmul.bf16.gmra.mxu0 %v1898
        %v1960 = vpop.f32.mrf.mxu0
        %v1961 = vadd.f32 0.0, %v1960
        %v1962 = vpop.f32.mrf.mxu0
        %v1963 = vadd.f32 0.0, %v1962
        %1964 = vmatmul.bf16.gmra.mxu0 %v1901
        %v1965 = vpop.f32.mrf.mxu0
        %v1966 = vadd.f32 0.0, %v1965
        %v1967 = vpop.f32.mrf.mxu0
        %v1968 = vadd.f32 0.0, %v1967
        %1969 = vmatmul.bf16.gmra.mxu0 %v1904
        %v1970 = vpop.f32.mrf.mxu0
        %v1971 = vadd.f32 0.0, %v1970
        %v1972 = vpop.f32.mrf.mxu0
        %v1973 = vadd.f32 0.0, %v1972
        %1974 = vmatmul.bf16.gmra.mxu0 %v1907
        %v1975 = vpop.f32.mrf.mxu0
        %v1976 = vadd.f32 0.0, %v1975
        %v1977 = vpop.f32.mrf.mxu0
        %v1978 = vadd.f32 0.0, %v1977
        %1979 = vmatmul.bf16.gmra.mxu0 %v1910
        %v1980 = vpop.f32.mrf.mxu0
        %v1981 = vadd.f32 0.0, %v1980
        %v1982 = vpop.f32.mrf.mxu0
        %v1983 = vadd.f32 0.0, %v1982
        %1984 = vdwg.mxu0
        %v2001 = vunpack.c.l.b16 %v1470
        %v2002 = vunpack.c.l.b16 %v1471
        %v2003 = vunpack.c.l.b16 %v1472
        %v2004 = vunpack.c.l.b16 %v1473
        %v2005 = vunpack.c.l.b16 %v1474
        %v2006 = vunpack.c.l.b16 %v1475
        %v2007 = vunpack.c.l.b16 %v1476
        %v2008 = vunpack.c.l.b16 %v1477
        %v2009 = vunpack.c.l.b16 %v1478
        %v2010 = vunpack.c.l.b16 %v1479
        %v2011 = vunpack.c.l.b16 %v1480
        %v2012 = vunpack.c.l.b16 %v1481
        %v2013 = vunpack.c.l.b16 %v1482
        %v2014 = vunpack.c.l.b16 %v1483
        %v2015 = vunpack.c.l.b16 %v1484
        %v2016 = vunpack.c.l.b16 %v1485
        %v2017 = vpack.c.b16 %v2002, %v2001
        %v2018 = vpack.c.b16 %v2004, %v2003
        %v2019 = vpack.c.b16 %v2006, %v2005
        %v2020 = vpack.c.b16 %v2008, %v2007
        %v2021 = vpack.c.b16 %v2010, %v2009
        %v2022 = vpack.c.b16 %v2012, %v2011
        %v2023 = vpack.c.b16 %v2014, %v2013
        %v2024 = vpack.c.b16 %v2016, %v2015
        %v2041 = vunpack.c.l.b16 %v1534
        %v2042 = vunpack.c.l.b16 %v1535
        %v2043 = vunpack.c.l.b16 %v1536
        %v2044 = vunpack.c.l.b16 %v1537
        %v2045 = vunpack.c.l.b16 %v1538
        %v2046 = vunpack.c.l.b16 %v1539
        %v2047 = vunpack.c.l.b16 %v1540
        %v2048 = vunpack.c.l.b16 %v1541
        %v2049 = vunpack.c.l.b16 %v1542
        %v2050 = vunpack.c.l.b16 %v1543
        %v2051 = vunpack.c.l.b16 %v1544
        %v2052 = vunpack.c.l.b16 %v1545
        %v2053 = vunpack.c.l.b16 %v1546
        %v2054 = vunpack.c.l.b16 %v1547
        %v2055 = vunpack.c.l.b16 %v1548
        %v2056 = vunpack.c.l.b16 %v1549
        %v2057 = vpack.c.b16 %v2042, %v2041
        %v2058 = vpack.c.b16 %v2044, %v2043
        %v2059 = vpack.c.b16 %v2046, %v2045
        %v2060 = vpack.c.b16 %v2048, %v2047
        %v2061 = vpack.c.b16 %v2050, %v2049
        %v2062 = vpack.c.b16 %v2052, %v2051
        %v2063 = vpack.c.b16 %v2054, %v2053
        %v2064 = vpack.c.b16 %v2056, %v2055
        %v2066 = vsel %vm1710, %v2017, 0
        %v2069 = vsel %vm1710, %v2018, 0
        %v2072 = vsel %vm1710, %v2019, 0
        %v2075 = vsel %vm1710, %v2020, 0
        %v2078 = vsel %vm1710, %v2021, 0
        %v2081 = vsel %vm1710, %v2022, 0
        %v2084 = vsel %vm1710, %v2023, 0
        %v2087 = vsel %vm1710, %v2024, 0
        %v2090 = vsel %vm1710, %v2057, 0
        %v2093 = vsel %vm1710, %v2058, 0
        %v2096 = vsel %vm1710, %v2059, 0
        %v2099 = vsel %vm1710, %v2060, 0
        %v2102 = vsel %vm1710, %v2061, 0
        %v2105 = vsel %vm1710, %v2062, 0
        %v2108 = vsel %vm1710, %v2063, 0
        %v2111 = vsel %vm1710, %v2064, 0
        %2113 = vmatpush.bf16.xpose.msra.mxu0 %v2111
        %2114 = vmatpush.bf16.xpose.msra.mxu0 %v2108
        %2115 = vmatpush.bf16.xpose.msra.mxu0 %v2105
        %2116 = vmatpush.bf16.xpose.msra.mxu0 %v2102
        %2117 = vmatpush.bf16.xpose.msra.mxu0 %v2099
        %2118 = vmatpush.bf16.xpose.msra.mxu0 %v2096
        %2119 = vmatpush.bf16.xpose.msra.mxu0 %v2093
        %2120 = vmatpush.bf16.xpose.msra.mxu0 %v2090
        %2121 = vmatmul.bf16.gmra.mxu0 %v2066
        %v2122 = vpop.f32.mrf.mxu0
        %v2123 = vadd.f32 0.0, %v2122
        %v2124 = vpop.f32.mrf.mxu0
        %v2125 = vadd.f32 0.0, %v2124
        %2126 = vmatmul.bf16.gmra.mxu0 %v2069
        %v2127 = vpop.f32.mrf.mxu0
        %v2128 = vadd.f32 0.0, %v2127
        %v2129 = vpop.f32.mrf.mxu0
        %v2130 = vadd.f32 0.0, %v2129
        %2131 = vmatmul.bf16.gmra.mxu0 %v2072
        %v2132 = vpop.f32.mrf.mxu0
        %v2133 = vadd.f32 0.0, %v2132
        %v2134 = vpop.f32.mrf.mxu0
        %v2135 = vadd.f32 0.0, %v2134
        %2136 = vmatmul.bf16.gmra.mxu0 %v2075
        %v2137 = vpop.f32.mrf.mxu0
        %v2138 = vadd.f32 0.0, %v2137
        %v2139 = vpop.f32.mrf.mxu0
        %v2140 = vadd.f32 0.0, %v2139
        %2141 = vmatmul.bf16.gmra.mxu0 %v2078
        %v2142 = vpop.f32.mrf.mxu0
        %v2143 = vadd.f32 0.0, %v2142
        %v2144 = vpop.f32.mrf.mxu0
        %v2145 = vadd.f32 0.0, %v2144
        %2146 = vmatmul.bf16.gmra.mxu0 %v2081
        %v2147 = vpop.f32.mrf.mxu0
        %v2148 = vadd.f32 0.0, %v2147
        %v2149 = vpop.f32.mrf.mxu0
        %v2150 = vadd.f32 0.0, %v2149
        %2151 = vmatmul.bf16.gmra.mxu0 %v2084
        %v2152 = vpop.f32.mrf.mxu0
        %v2153 = vadd.f32 0.0, %v2152
        %v2154 = vpop.f32.mrf.mxu0
        %v2155 = vadd.f32 0.0, %v2154
        %2156 = vmatmul.bf16.gmra.mxu0 %v2087
        %v2157 = vpop.f32.mrf.mxu0
        %v2158 = vadd.f32 0.0, %v2157
        %v2159 = vpop.f32.mrf.mxu0
        %v2160 = vadd.f32 0.0, %v2159
        %2161 = vdwg.mxu0
        %v2178 = vunpack.c.l.b16 %v1486
        %v2179 = vunpack.c.l.b16 %v1487
        %v2180 = vunpack.c.l.b16 %v1488
        %v2181 = vunpack.c.l.b16 %v1489
        %v2182 = vunpack.c.l.b16 %v1490
        %v2183 = vunpack.c.l.b16 %v1491
        %v2184 = vunpack.c.l.b16 %v1492
        %v2185 = vunpack.c.l.b16 %v1493
        %v2186 = vunpack.c.l.b16 %v1494
        %v2187 = vunpack.c.l.b16 %v1495
        %v2188 = vunpack.c.l.b16 %v1496
        %v2189 = vunpack.c.l.b16 %v1497
        %v2190 = vunpack.c.l.b16 %v1498
        %v2191 = vunpack.c.l.b16 %v1499
        %v2192 = vunpack.c.l.b16 %v1500
        %v2193 = vunpack.c.l.b16 %v1501
        %v2194 = vpack.c.b16 %v2179, %v2178
        %v2195 = vpack.c.b16 %v2181, %v2180
        %v2196 = vpack.c.b16 %v2183, %v2182
        %v2197 = vpack.c.b16 %v2185, %v2184
        %v2198 = vpack.c.b16 %v2187, %v2186
        %v2199 = vpack.c.b16 %v2189, %v2188
        %v2200 = vpack.c.b16 %v2191, %v2190
        %v2201 = vpack.c.b16 %v2193, %v2192
        %v2218 = vunpack.c.l.b16 %v1550
        %v2219 = vunpack.c.l.b16 %v1551
        %v2220 = vunpack.c.l.b16 %v1552
        %v2221 = vunpack.c.l.b16 %v1553
        %v2222 = vunpack.c.l.b16 %v1554
        %v2223 = vunpack.c.l.b16 %v1555
        %v2224 = vunpack.c.l.b16 %v1556
        %v2225 = vunpack.c.l.b16 %v1557
        %v2226 = vunpack.c.l.b16 %v1558
        %v2227 = vunpack.c.l.b16 %v1559
        %v2228 = vunpack.c.l.b16 %v1560
        %v2229 = vunpack.c.l.b16 %v1561
        %v2230 = vunpack.c.l.b16 %v1562
        %v2231 = vunpack.c.l.b16 %v1563
        %v2232 = vunpack.c.l.b16 %v1564
        %v2233 = vunpack.c.l.b16 %v1565
        %v2234 = vpack.c.b16 %v2219, %v2218
        %v2235 = vpack.c.b16 %v2221, %v2220
        %v2236 = vpack.c.b16 %v2223, %v2222
        %v2237 = vpack.c.b16 %v2225, %v2224
        %v2238 = vpack.c.b16 %v2227, %v2226
        %v2239 = vpack.c.b16 %v2229, %v2228
        %v2240 = vpack.c.b16 %v2231, %v2230
        %v2241 = vpack.c.b16 %v2233, %v2232
        %v2243 = vsel %vm1710, %v2194, 0
        %v2246 = vsel %vm1710, %v2195, 0
        %v2249 = vsel %vm1710, %v2196, 0
        %v2252 = vsel %vm1710, %v2197, 0
        %v2255 = vsel %vm1710, %v2198, 0
        %v2258 = vsel %vm1710, %v2199, 0
        %v2261 = vsel %vm1710, %v2200, 0
        %v2264 = vsel %vm1710, %v2201, 0
        %v2267 = vsel %vm1710, %v2234, 0
        %v2270 = vsel %vm1710, %v2235, 0
        %v2273 = vsel %vm1710, %v2236, 0
        %v2276 = vsel %vm1710, %v2237, 0
        %v2279 = vsel %vm1710, %v2238, 0
        %v2282 = vsel %vm1710, %v2239, 0
        %v2285 = vsel %vm1710, %v2240, 0
        %v2288 = vsel %vm1710, %v2241, 0
        %2290 = vmatpush.bf16.xpose.msra.mxu0 %v2288
        %2291 = vmatpush.bf16.xpose.msra.mxu0 %v2285
        %2292 = vmatpush.bf16.xpose.msra.mxu0 %v2282
        %2293 = vmatpush.bf16.xpose.msra.mxu0 %v2279
        %2294 = vmatpush.bf16.xpose.msra.mxu0 %v2276
        %2295 = vmatpush.bf16.xpose.msra.mxu0 %v2273
        %2296 = vmatpush.bf16.xpose.msra.mxu0 %v2270
        %2297 = vmatpush.bf16.xpose.msra.mxu0 %v2267
        %2298 = vmatmul.bf16.gmra.mxu0 %v2243
        %v2299 = vpop.f32.mrf.mxu0
        %v2300 = vadd.f32 0.0, %v2299
        %v2301 = vpop.f32.mrf.mxu0
        %v2302 = vadd.f32 0.0, %v2301
        %2303 = vmatmul.bf16.gmra.mxu0 %v2246
        %v2304 = vpop.f32.mrf.mxu0
        %v2305 = vadd.f32 0.0, %v2304
        %v2306 = vpop.f32.mrf.mxu0
        %v2307 = vadd.f32 0.0, %v2306
        %2308 = vmatmul.bf16.gmra.mxu0 %v2249
        %v2309 = vpop.f32.mrf.mxu0
        %v2310 = vadd.f32 0.0, %v2309
        %v2311 = vpop.f32.mrf.mxu0
        %v2312 = vadd.f32 0.0, %v2311
        %2313 = vmatmul.bf16.gmra.mxu0 %v2252
        %v2314 = vpop.f32.mrf.mxu0
        %v2315 = vadd.f32 0.0, %v2314
        %v2316 = vpop.f32.mrf.mxu0
        %v2317 = vadd.f32 0.0, %v2316
        %2318 = vmatmul.bf16.gmra.mxu0 %v2255
        %v2319 = vpop.f32.mrf.mxu0
        %v2320 = vadd.f32 0.0, %v2319
        %v2321 = vpop.f32.mrf.mxu0
        %v2322 = vadd.f32 0.0, %v2321
        %2323 = vmatmul.bf16.gmra.mxu0 %v2258
        %v2324 = vpop.f32.mrf.mxu0
        %v2325 = vadd.f32 0.0, %v2324
        %v2326 = vpop.f32.mrf.mxu0
        %v2327 = vadd.f32 0.0, %v2326
        %2328 = vmatmul.bf16.gmra.mxu0 %v2261
        %v2329 = vpop.f32.mrf.mxu0
        %v2330 = vadd.f32 0.0, %v2329
        %v2331 = vpop.f32.mrf.mxu0
        %v2332 = vadd.f32 0.0, %v2331
        %2333 = vmatmul.bf16.gmra.mxu0 %v2264
        %v2334 = vpop.f32.mrf.mxu0
        %v2335 = vadd.f32 0.0, %v2334
        %v2336 = vpop.f32.mrf.mxu0
        %v2337 = vadd.f32 0.0, %v2336
        %2338 = vdwg.mxu0
        %v2339 = vld [vmem:[#allocation2] sm:$0xff]
        %v2340 = vld [vmem:[#allocation2 + $0x8] sm:$0xff]
        %v2341 = vld [vmem:[#allocation2 + $0x10] sm:$0xff]
        %v2342 = vld [vmem:[#allocation2 + $0x18] sm:$0xff]
        %v2343 = vld [vmem:[#allocation2 + $0x20] sm:$0xff]
        %v2344 = vld [vmem:[#allocation2 + $0x28] sm:$0xff]
        %v2345 = vld [vmem:[#allocation2 + $0x30] sm:$0xff]
        %v2346 = vld [vmem:[#allocation2 + $0x38] sm:$0xff]
        %v2347 = vld [vmem:[#allocation2 + $0x40] sm:$0xff]
        %v2348 = vld [vmem:[#allocation2 + $0x48] sm:$0xff]
        %v2349 = vld [vmem:[#allocation2 + $0x50] sm:$0xff]
        %v2350 = vld [vmem:[#allocation2 + $0x58] sm:$0xff]
        %v2351 = vld [vmem:[#allocation2 + $0x60] sm:$0xff]
        %v2352 = vld [vmem:[#allocation2 + $0x68] sm:$0xff]
        %v2353 = vld [vmem:[#allocation2 + $0x70] sm:$0xff]
        %v2354 = vld [vmem:[#allocation2 + $0x78] sm:$0xff]
        %v2355 = vld [vmem:[#allocation2 + $0x80] sm:$0xff]
        %v2356 = vld [vmem:[#allocation2 + $0x88] sm:$0xff]
        %v2357 = vld [vmem:[#allocation2 + $0x90] sm:$0xff]
        %v2358 = vld [vmem:[#allocation2 + $0x98] sm:$0xff]
        %v2359 = vld [vmem:[#allocation2 + $0xa0] sm:$0xff]
        %v2360 = vld [vmem:[#allocation2 + $0xa8] sm:$0xff]
        %v2361 = vld [vmem:[#allocation2 + $0xb0] sm:$0xff]
        %v2362 = vld [vmem:[#allocation2 + $0xb8] sm:$0xff]
        %v2363 = vld [vmem:[#allocation2 + $0xc0] sm:$0xff]
        %v2364 = vld [vmem:[#allocation2 + $0xc8] sm:$0xff]
        %v2365 = vld [vmem:[#allocation2 + $0xd0] sm:$0xff]
        %v2366 = vld [vmem:[#allocation2 + $0xd8] sm:$0xff]
        %v2367 = vld [vmem:[#allocation2 + $0xe0] sm:$0xff]
        %v2368 = vld [vmem:[#allocation2 + $0xe8] sm:$0xff]
        %v2369 = vld [vmem:[#allocation2 + $0xf0] sm:$0xff]
        %v2370 = vld [vmem:[#allocation2 + $0xf8] sm:$0xff]
        %v2371 = vld [vmem:[#allocation2 + $0x100] sm:$0xff]
        %v2372 = vld [vmem:[#allocation2 + $0x108] sm:$0xff]
        %v2373 = vld [vmem:[#allocation2 + $0x110] sm:$0xff]
        %v2374 = vld [vmem:[#allocation2 + $0x118] sm:$0xff]
        %v2375 = vld [vmem:[#allocation2 + $0x120] sm:$0xff]
        %v2376 = vld [vmem:[#allocation2 + $0x128] sm:$0xff]
        %v2377 = vld [vmem:[#allocation2 + $0x130] sm:$0xff]
        %v2378 = vld [vmem:[#allocation2 + $0x138] sm:$0xff]
        %v2379 = vld [vmem:[#allocation2 + $0x140] sm:$0xff]
        %v2380 = vld [vmem:[#allocation2 + $0x148] sm:$0xff]
        %v2381 = vld [vmem:[#allocation2 + $0x150] sm:$0xff]
        %v2382 = vld [vmem:[#allocation2 + $0x158] sm:$0xff]
        %v2383 = vld [vmem:[#allocation2 + $0x160] sm:$0xff]
        %v2384 = vld [vmem:[#allocation2 + $0x168] sm:$0xff]
        %v2385 = vld [vmem:[#allocation2 + $0x170] sm:$0xff]
        %v2386 = vld [vmem:[#allocation2 + $0x178] sm:$0xff]
        %v2387 = vld [vmem:[#allocation2 + $0x180] sm:$0xff]
        %v2388 = vld [vmem:[#allocation2 + $0x188] sm:$0xff]
        %v2389 = vld [vmem:[#allocation2 + $0x190] sm:$0xff]
        %v2390 = vld [vmem:[#allocation2 + $0x198] sm:$0xff]
        %v2391 = vld [vmem:[#allocation2 + $0x1a0] sm:$0xff]
        %v2392 = vld [vmem:[#allocation2 + $0x1a8] sm:$0xff]
        %v2393 = vld [vmem:[#allocation2 + $0x1b0] sm:$0xff]
        %v2394 = vld [vmem:[#allocation2 + $0x1b8] sm:$0xff]
        %v2395 = vld [vmem:[#allocation2 + $0x1c0] sm:$0xff]
        %v2396 = vld [vmem:[#allocation2 + $0x1c8] sm:$0xff]
        %v2397 = vld [vmem:[#allocation2 + $0x1d0] sm:$0xff]
        %v2398 = vld [vmem:[#allocation2 + $0x1d8] sm:$0xff]
        %v2399 = vld [vmem:[#allocation2 + $0x1e0] sm:$0xff]
        %v2400 = vld [vmem:[#allocation2 + $0x1e8] sm:$0xff]
        %v2401 = vld [vmem:[#allocation2 + $0x1f0] sm:$0xff]
        %v2402 = vld [vmem:[#allocation2 + $0x1f8] sm:$0xff]
        %2403 = vmax.xlane.f32.xlu0 %v1769
        %v2404 = vpop.xlane.xlu0 %2403
        %2405 = vmax.xlane.f32.xlu0 %v1771
        %v2406 = vpop.xlane.xlu0 %2405
        %2407 = vmax.xlane.f32.xlu0 %v1774
        %v2408 = vpop.xlane.xlu0 %2407
        %2409 = vmax.xlane.f32.xlu0 %v1776
        %v2410 = vpop.xlane.xlu0 %2409
        %2411 = vmax.xlane.f32.xlu0 %v1779
        %v2412 = vpop.xlane.xlu0 %2411
        %2413 = vmax.xlane.f32.xlu0 %v1781
        %v2414 = vpop.xlane.xlu0 %2413
        %2415 = vmax.xlane.f32.xlu0 %v1784
        %v2416 = vpop.xlane.xlu0 %2415
        %2417 = vmax.xlane.f32.xlu0 %v1786
        %v2418 = vpop.xlane.xlu0 %2417
        %2419 = vmax.xlane.f32.xlu0 %v1789
        %v2420 = vpop.xlane.xlu0 %2419
        %2421 = vmax.xlane.f32.xlu0 %v1791
        %v2422 = vpop.xlane.xlu0 %2421
        %2423 = vmax.xlane.f32.xlu0 %v1794
        %v2424 = vpop.xlane.xlu0 %2423
        %2425 = vmax.xlane.f32.xlu0 %v1796
        %v2426 = vpop.xlane.xlu0 %2425
        %2427 = vmax.xlane.f32.xlu0 %v1799
        %v2428 = vpop.xlane.xlu0 %2427
        %2429 = vmax.xlane.f32.xlu0 %v1801
        %v2430 = vpop.xlane.xlu0 %2429
        %2431 = vmax.xlane.f32.xlu0 %v1804
        %v2432 = vpop.xlane.xlu0 %2431
        %2433 = vmax.xlane.f32.xlu0 %v1806
        %v2434 = vpop.xlane.xlu0 %2433
        %2435 = vmax.xlane.f32.xlu0 %v1946
        %v2436 = vpop.xlane.xlu0 %2435
        %2437 = vmax.xlane.f32.xlu0 %v1948
        %v2438 = vpop.xlane.xlu0 %2437
        %2439 = vmax.xlane.f32.xlu0 %v1951
        %v2440 = vpop.xlane.xlu0 %2439
        %2441 = vmax.xlane.f32.xlu0 %v1953
        %v2442 = vpop.xlane.xlu0 %2441
        %2443 = vmax.xlane.f32.xlu0 %v1956
        %v2444 = vpop.xlane.xlu0 %2443
        %2445 = vmax.xlane.f32.xlu0 %v1958
        %v2446 = vpop.xlane.xlu0 %2445
        %2447 = vmax.xlane.f32.xlu0 %v1961
        %v2448 = vpop.xlane.xlu0 %2447
        %2449 = vmax.xlane.f32.xlu0 %v1963
        %v2450 = vpop.xlane.xlu0 %2449
        %2451 = vmax.xlane.f32.xlu0 %v1966
        %v2452 = vpop.xlane.xlu0 %2451
        %2453 = vmax.xlane.f32.xlu0 %v1968
        %v2454 = vpop.xlane.xlu0 %2453
        %2455 = vmax.xlane.f32.xlu0 %v1971
        %v2456 = vpop.xlane.xlu0 %2455
        %2457 = vmax.xlane.f32.xlu0 %v1973
        %v2458 = vpop.xlane.xlu0 %2457
        %2459 = vmax.xlane.f32.xlu0 %v1976
        %v2460 = vpop.xlane.xlu0 %2459
        %2461 = vmax.xlane.f32.xlu0 %v1978
        %v2462 = vpop.xlane.xlu0 %2461
        %2463 = vmax.xlane.f32.xlu0 %v1981
        %v2464 = vpop.xlane.xlu0 %2463
        %2465 = vmax.xlane.f32.xlu0 %v1983
        %v2466 = vpop.xlane.xlu0 %2465
        %2467 = vmax.xlane.f32.xlu0 %v2123
        %v2468 = vpop.xlane.xlu0 %2467
        %2469 = vmax.xlane.f32.xlu0 %v2125
        %v2470 = vpop.xlane.xlu0 %2469
        %2471 = vmax.xlane.f32.xlu0 %v2128
        %v2472 = vpop.xlane.xlu0 %2471
        %2473 = vmax.xlane.f32.xlu0 %v2130
        %v2474 = vpop.xlane.xlu0 %2473
        %2475 = vmax.xlane.f32.xlu0 %v2133
        %v2476 = vpop.xlane.xlu0 %2475
        %2477 = vmax.xlane.f32.xlu0 %v2135
        %v2478 = vpop.xlane.xlu0 %2477
        %2479 = vmax.xlane.f32.xlu0 %v2138
        %v2480 = vpop.xlane.xlu0 %2479
        %2481 = vmax.xlane.f32.xlu0 %v2140
        %v2482 = vpop.xlane.xlu0 %2481
        %2483 = vmax.xlane.f32.xlu0 %v2143
        %v2484 = vpop.xlane.xlu0 %2483
        %2485 = vmax.xlane.f32.xlu0 %v2145
        %v2486 = vpop.xlane.xlu0 %2485
        %2487 = vmax.xlane.f32.xlu0 %v2148
        %v2488 = vpop.xlane.xlu0 %2487
        %2489 = vmax.xlane.f32.xlu0 %v2150
        %v2490 = vpop.xlane.xlu0 %2489
        %2491 = vmax.xlane.f32.xlu0 %v2153
        %v2492 = vpop.xlane.xlu0 %2491
        %2493 = vmax.xlane.f32.xlu0 %v2155
        %v2494 = vpop.xlane.xlu0 %2493
        %2495 = vmax.xlane.f32.xlu0 %v2158
        %v2496 = vpop.xlane.xlu0 %2495
        %2497 = vmax.xlane.f32.xlu0 %v2160
        %v2498 = vpop.xlane.xlu0 %2497
        %2499 = vmax.xlane.f32.xlu0 %v2300
        %v2500 = vpop.xlane.xlu0 %2499
        %2501 = vmax.xlane.f32.xlu0 %v2302
        %v2502 = vpop.xlane.xlu0 %2501
        %2503 = vmax.xlane.f32.xlu0 %v2305
        %v2504 = vpop.xlane.xlu0 %2503
        %2505 = vmax.xlane.f32.xlu0 %v2307
        %v2506 = vpop.xlane.xlu0 %2505
        %2507 = vmax.xlane.f32.xlu0 %v2310
        %v2508 = vpop.xlane.xlu0 %2507
        %2509 = vmax.xlane.f32.xlu0 %v2312
        %v2510 = vpop.xlane.xlu0 %2509
        %2511 = vmax.xlane.f32.xlu0 %v2315
        %v2512 = vpop.xlane.xlu0 %2511
        %2513 = vmax.xlane.f32.xlu0 %v2317
        %v2514 = vpop.xlane.xlu0 %2513
        %2515 = vmax.xlane.f32.xlu0 %v2320
        %v2516 = vpop.xlane.xlu0 %2515
        %2517 = vmax.xlane.f32.xlu0 %v2322
        %v2518 = vpop.xlane.xlu0 %2517
        %2519 = vmax.xlane.f32.xlu0 %v2325
        %v2520 = vpop.xlane.xlu0 %2519
        %2521 = vmax.xlane.f32.xlu0 %v2327
        %v2522 = vpop.xlane.xlu0 %2521
        %2523 = vmax.xlane.f32.xlu0 %v2330
        %v2524 = vpop.xlane.xlu0 %2523
        %2525 = vmax.xlane.f32.xlu0 %v2332
        %v2526 = vpop.xlane.xlu0 %2525
        %2527 = vmax.xlane.f32.xlu0 %v2335
        %v2528 = vpop.xlane.xlu0 %2527
        %2529 = vmax.xlane.f32.xlu0 %v2337
        %v2530 = vpop.xlane.xlu0 %2529
        %v2531 = vmax.f32 %v2339, %v2404
        %v2532 = vmax.f32 %v2340, %v2406
        %v2533 = vmax.f32 %v2341, %v2408
        %v2534 = vmax.f32 %v2342, %v2410
        %v2535 = vmax.f32 %v2343, %v2412
        %v2536 = vmax.f32 %v2344, %v2414
        %v2537 = vmax.f32 %v2345, %v2416
        %v2538 = vmax.f32 %v2346, %v2418
        %v2539 = vmax.f32 %v2347, %v2420
        %v2540 = vmax.f32 %v2348, %v2422
        %v2541 = vmax.f32 %v2349, %v2424
        %v2542 = vmax.f32 %v2350, %v2426
        %v2543 = vmax.f32 %v2351, %v2428
        %v2544 = vmax.f32 %v2352, %v2430
        %v2545 = vmax.f32 %v2353, %v2432
        %v2546 = vmax.f32 %v2354, %v2434
        %v2547 = vmax.f32 %v2355, %v2436
        %v2548 = vmax.f32 %v2356, %v2438
        %v2549 = vmax.f32 %v2357, %v2440
        %v2550 = vmax.f32 %v2358, %v2442
        %v2551 = vmax.f32 %v2359, %v2444
        %v2552 = vmax.f32 %v2360, %v2446
        %v2553 = vmax.f32 %v2361, %v2448
        %v2554 = vmax.f32 %v2362, %v2450
        %v2555 = vmax.f32 %v2363, %v2452
        %v2556 = vmax.f32 %v2364, %v2454
        %v2557 = vmax.f32 %v2365, %v2456
        %v2558 = vmax.f32 %v2366, %v2458
        %v2559 = vmax.f32 %v2367, %v2460
        %v2560 = vmax.f32 %v2368, %v2462
        %v2561 = vmax.f32 %v2369, %v2464
        %v2562 = vmax.f32 %v2370, %v2466
        %v2563 = vmax.f32 %v2371, %v2468
        %v2564 = vmax.f32 %v2372, %v2470
        %v2565 = vmax.f32 %v2373, %v2472
        %v2566 = vmax.f32 %v2374, %v2474
        %v2567 = vmax.f32 %v2375, %v2476
        %v2568 = vmax.f32 %v2376, %v2478
        %v2569 = vmax.f32 %v2377, %v2480
        %v2570 = vmax.f32 %v2378, %v2482
        %v2571 = vmax.f32 %v2379, %v2484
        %v2572 = vmax.f32 %v2380, %v2486
        %v2573 = vmax.f32 %v2381, %v2488
        %v2574 = vmax.f32 %v2382, %v2490
        %v2575 = vmax.f32 %v2383, %v2492
        %v2576 = vmax.f32 %v2384, %v2494
        %v2577 = vmax.f32 %v2385, %v2496
        %v2578 = vmax.f32 %v2386, %v2498
        %v2579 = vmax.f32 %v2387, %v2500
        %v2580 = vmax.f32 %v2388, %v2502
        %v2581 = vmax.f32 %v2389, %v2504
        %v2582 = vmax.f32 %v2390, %v2506
        %v2583 = vmax.f32 %v2391, %v2508
        %v2584 = vmax.f32 %v2392, %v2510
        %v2585 = vmax.f32 %v2393, %v2512
        %v2586 = vmax.f32 %v2394, %v2514
        %v2587 = vmax.f32 %v2395, %v2516
        %v2588 = vmax.f32 %v2396, %v2518
        %v2589 = vmax.f32 %v2397, %v2520
        %v2590 = vmax.f32 %v2398, %v2522
        %v2591 = vmax.f32 %v2399, %v2524
        %v2592 = vmax.f32 %v2400, %v2526
        %v2593 = vmax.f32 %v2401, %v2528
        %v2594 = vmax.f32 %v2402, %v2530
        %v2595 = vsub.f32 %v2339, %v2531
        %v2596 = vsub.f32 %v2340, %v2532
        %v2597 = vsub.f32 %v2341, %v2533
        %v2598 = vsub.f32 %v2342, %v2534
        %v2599 = vsub.f32 %v2343, %v2535
        %v2600 = vsub.f32 %v2344, %v2536
        %v2601 = vsub.f32 %v2345, %v2537
        %v2602 = vsub.f32 %v2346, %v2538
        %v2603 = vsub.f32 %v2347, %v2539
        %v2604 = vsub.f32 %v2348, %v2540
        %v2605 = vsub.f32 %v2349, %v2541
        %v2606 = vsub.f32 %v2350, %v2542
        %v2607 = vsub.f32 %v2351, %v2543
        %v2608 = vsub.f32 %v2352, %v2544
        %v2609 = vsub.f32 %v2353, %v2545
        %v2610 = vsub.f32 %v2354, %v2546
        %v2611 = vsub.f32 %v2355, %v2547
        %v2612 = vsub.f32 %v2356, %v2548
        %v2613 = vsub.f32 %v2357, %v2549
        %v2614 = vsub.f32 %v2358, %v2550
        %v2615 = vsub.f32 %v2359, %v2551
        %v2616 = vsub.f32 %v2360, %v2552
        %v2617 = vsub.f32 %v2361, %v2553
        %v2618 = vsub.f32 %v2362, %v2554
        %v2619 = vsub.f32 %v2363, %v2555
        %v2620 = vsub.f32 %v2364, %v2556
        %v2621 = vsub.f32 %v2365, %v2557
        %v2622 = vsub.f32 %v2366, %v2558
        %v2623 = vsub.f32 %v2367, %v2559
        %v2624 = vsub.f32 %v2368, %v2560
        %v2625 = vsub.f32 %v2369, %v2561
        %v2626 = vsub.f32 %v2370, %v2562
        %v2627 = vsub.f32 %v2371, %v2563
        %v2628 = vsub.f32 %v2372, %v2564
        %v2629 = vsub.f32 %v2373, %v2565
        %v2630 = vsub.f32 %v2374, %v2566
        %v2631 = vsub.f32 %v2375, %v2567
        %v2632 = vsub.f32 %v2376, %v2568
        %v2633 = vsub.f32 %v2377, %v2569
        %v2634 = vsub.f32 %v2378, %v2570
        %v2635 = vsub.f32 %v2379, %v2571
        %v2636 = vsub.f32 %v2380, %v2572
        %v2637 = vsub.f32 %v2381, %v2573
        %v2638 = vsub.f32 %v2382, %v2574
        %v2639 = vsub.f32 %v2383, %v2575
        %v2640 = vsub.f32 %v2384, %v2576
        %v2641 = vsub.f32 %v2385, %v2577
        %v2642 = vsub.f32 %v2386, %v2578
        %v2643 = vsub.f32 %v2387, %v2579
        %v2644 = vsub.f32 %v2388, %v2580
        %v2645 = vsub.f32 %v2389, %v2581
        %v2646 = vsub.f32 %v2390, %v2582
        %v2647 = vsub.f32 %v2391, %v2583
        %v2648 = vsub.f32 %v2392, %v2584
        %v2649 = vsub.f32 %v2393, %v2585
        %v2650 = vsub.f32 %v2394, %v2586
        %v2651 = vsub.f32 %v2395, %v2587
        %v2652 = vsub.f32 %v2396, %v2588
        %v2653 = vsub.f32 %v2397, %v2589
        %v2654 = vsub.f32 %v2398, %v2590
        %v2655 = vsub.f32 %v2399, %v2591
        %v2656 = vsub.f32 %v2400, %v2592
        %v2657 = vsub.f32 %v2401, %v2593
        %v2658 = vsub.f32 %v2402, %v2594
        %v2659 = vmul.f32 %v2595, 1.442695
        %v2660 = vpow.pop %v2659
        %v2661 = vmul.f32 %v2596, 1.442695
        %v2662 = vpow.pop %v2661
        %v2663 = vmul.f32 %v2597, 1.442695
        %v2664 = vpow.pop %v2663
        %v2665 = vmul.f32 %v2598, 1.442695
        %v2666 = vpow.pop %v2665
        %v2667 = vmul.f32 %v2599, 1.442695
        %v2668 = vpow.pop %v2667
        %v2669 = vmul.f32 %v2600, 1.442695
        %v2670 = vpow.pop %v2669
        %v2671 = vmul.f32 %v2601, 1.442695
        %v2672 = vpow.pop %v2671
        %v2673 = vmul.f32 %v2602, 1.442695
        %v2674 = vpow.pop %v2673
        %v2675 = vmul.f32 %v2603, 1.442695
        %v2676 = vpow.pop %v2675
        %v2677 = vmul.f32 %v2604, 1.442695
        %v2678 = vpow.pop %v2677
        %v2679 = vmul.f32 %v2605, 1.442695
        %v2680 = vpow.pop %v2679
        %v2681 = vmul.f32 %v2606, 1.442695
        %v2682 = vpow.pop %v2681
        %v2683 = vmul.f32 %v2607, 1.442695
        %v2684 = vpow.pop %v2683
        %v2685 = vmul.f32 %v2608, 1.442695
        %v2686 = vpow.pop %v2685
        %v2687 = vmul.f32 %v2609, 1.442695
        %v2688 = vpow.pop %v2687
        %v2689 = vmul.f32 %v2610, 1.442695
        %v2690 = vpow.pop %v2689
        %v2691 = vmul.f32 %v2611, 1.442695
        %v2692 = vpow.pop %v2691
        %v2693 = vmul.f32 %v2612, 1.442695
        %v2694 = vpow.pop %v2693
        %v2695 = vmul.f32 %v2613, 1.442695
        %v2696 = vpow.pop %v2695
        %v2697 = vmul.f32 %v2614, 1.442695
        %v2698 = vpow.pop %v2697
        %v2699 = vmul.f32 %v2615, 1.442695
        %v2700 = vpow.pop %v2699
        %v2701 = vmul.f32 %v2616, 1.442695
        %v2702 = vpow.pop %v2701
        %v2703 = vmul.f32 %v2617, 1.442695
        %v2704 = vpow.pop %v2703
        %v2705 = vmul.f32 %v2618, 1.442695
        %v2706 = vpow.pop %v2705
        %v2707 = vmul.f32 %v2619, 1.442695
        %v2708 = vpow.pop %v2707
        %v2709 = vmul.f32 %v2620, 1.442695
        %v2710 = vpow.pop %v2709
        %v2711 = vmul.f32 %v2621, 1.442695
        %v2712 = vpow.pop %v2711
        %v2713 = vmul.f32 %v2622, 1.442695
        %v2714 = vpow.pop %v2713
        %v2715 = vmul.f32 %v2623, 1.442695
        %v2716 = vpow.pop %v2715
        %v2717 = vmul.f32 %v2624, 1.442695
        %v2718 = vpow.pop %v2717
        %v2719 = vmul.f32 %v2625, 1.442695
        %v2720 = vpow.pop %v2719
        %v2721 = vmul.f32 %v2626, 1.442695
        %v2722 = vpow.pop %v2721
        %v2723 = vmul.f32 %v2627, 1.442695
        %v2724 = vpow.pop %v2723
        %v2725 = vmul.f32 %v2628, 1.442695
        %v2726 = vpow.pop %v2725
        %v2727 = vmul.f32 %v2629, 1.442695
        %v2728 = vpow.pop %v2727
        %v2729 = vmul.f32 %v2630, 1.442695
        %v2730 = vpow.pop %v2729
        %v2731 = vmul.f32 %v2631, 1.442695
        %v2732 = vpow.pop %v2731
        %v2733 = vmul.f32 %v2632, 1.442695
        %v2734 = vpow.pop %v2733
        %v2735 = vmul.f32 %v2633, 1.442695
        %v2736 = vpow.pop %v2735
        %v2737 = vmul.f32 %v2634, 1.442695
        %v2738 = vpow.pop %v2737
        %v2739 = vmul.f32 %v2635, 1.442695
        %v2740 = vpow.pop %v2739
        %v2741 = vmul.f32 %v2636, 1.442695
        %v2742 = vpow.pop %v2741
        %v2743 = vmul.f32 %v2637, 1.442695
        %v2744 = vpow.pop %v2743
        %v2745 = vmul.f32 %v2638, 1.442695
        %v2746 = vpow.pop %v2745
        %v2747 = vmul.f32 %v2639, 1.442695
        %v2748 = vpow.pop %v2747
        %v2749 = vmul.f32 %v2640, 1.442695
        %v2750 = vpow.pop %v2749
        %v2751 = vmul.f32 %v2641, 1.442695
        %v2752 = vpow.pop %v2751
        %v2753 = vmul.f32 %v2642, 1.442695
        %v2754 = vpow.pop %v2753
        %v2755 = vmul.f32 %v2643, 1.442695
        %v2756 = vpow.pop %v2755
        %v2757 = vmul.f32 %v2644, 1.442695
        %v2758 = vpow.pop %v2757
        %v2759 = vmul.f32 %v2645, 1.442695
        %v2760 = vpow.pop %v2759
        %v2761 = vmul.f32 %v2646, 1.442695
        %v2762 = vpow.pop %v2761
        %v2763 = vmul.f32 %v2647, 1.442695
        %v2764 = vpow.pop %v2763
        %v2765 = vmul.f32 %v2648, 1.442695
        %v2766 = vpow.pop %v2765
        %v2767 = vmul.f32 %v2649, 1.442695
        %v2768 = vpow.pop %v2767
        %v2769 = vmul.f32 %v2650, 1.442695
        %v2770 = vpow.pop %v2769
        %v2771 = vmul.f32 %v2651, 1.442695
        %v2772 = vpow.pop %v2771
        %v2773 = vmul.f32 %v2652, 1.442695
        %v2774 = vpow.pop %v2773
        %v2775 = vmul.f32 %v2653, 1.442695
        %v2776 = vpow.pop %v2775
        %v2777 = vmul.f32 %v2654, 1.442695
        %v2778 = vpow.pop %v2777
        %v2779 = vmul.f32 %v2655, 1.442695
        %v2780 = vpow.pop %v2779
        %v2781 = vmul.f32 %v2656, 1.442695
        %v2782 = vpow.pop %v2781
        %v2783 = vmul.f32 %v2657, 1.442695
        %v2784 = vpow.pop %v2783
        %v2785 = vmul.f32 %v2658, 1.442695
        %v2786 = vpow.pop %v2785
        %2788 = vset.pattern.permute.xlu0 0
        %2789 = vperm.xlu0 %2788, %v2531
        %v2790 = vpop.permute.xlu0 %2789
        %2793 = vset.pattern.permute.xlu0 0
        %2794 = vperm.xlu0 %2793, %v2532
        %v2795 = vpop.permute.xlu0 %2794
        %2798 = vset.pattern.permute.xlu0 0
        %2799 = vperm.xlu0 %2798, %v2533
        %v2800 = vpop.permute.xlu0 %2799
        %2803 = vset.pattern.permute.xlu0 0
        %2804 = vperm.xlu0 %2803, %v2534
        %v2805 = vpop.permute.xlu0 %2804
        %2808 = vset.pattern.permute.xlu0 0
        %2809 = vperm.xlu0 %2808, %v2535
        %v2810 = vpop.permute.xlu0 %2809
        %2813 = vset.pattern.permute.xlu0 0
        %2814 = vperm.xlu0 %2813, %v2536
        %v2815 = vpop.permute.xlu0 %2814
        %2818 = vset.pattern.permute.xlu0 0
        %2819 = vperm.xlu0 %2818, %v2537
        %v2820 = vpop.permute.xlu0 %2819
        %2823 = vset.pattern.permute.xlu0 0
        %2824 = vperm.xlu0 %2823, %v2538
        %v2825 = vpop.permute.xlu0 %2824
        %2828 = vset.pattern.permute.xlu0 0
        %2829 = vperm.xlu0 %2828, %v2539
        %v2830 = vpop.permute.xlu0 %2829
        %2833 = vset.pattern.permute.xlu0 0
        %2834 = vperm.xlu0 %2833, %v2540
        %v2835 = vpop.permute.xlu0 %2834
        %2838 = vset.pattern.permute.xlu0 0
        %2839 = vperm.xlu0 %2838, %v2541
        %v2840 = vpop.permute.xlu0 %2839
        %2843 = vset.pattern.permute.xlu0 0
        %2844 = vperm.xlu0 %2843, %v2542
        %v2845 = vpop.permute.xlu0 %2844
        %2848 = vset.pattern.permute.xlu0 0
        %2849 = vperm.xlu0 %2848, %v2543
        %v2850 = vpop.permute.xlu0 %2849
        %2853 = vset.pattern.permute.xlu0 0
        %2854 = vperm.xlu0 %2853, %v2544
        %v2855 = vpop.permute.xlu0 %2854
        %2858 = vset.pattern.permute.xlu0 0
        %2859 = vperm.xlu0 %2858, %v2545
        %v2860 = vpop.permute.xlu0 %2859
        %2863 = vset.pattern.permute.xlu0 0
        %2864 = vperm.xlu0 %2863, %v2546
        %v2865 = vpop.permute.xlu0 %2864
        %2868 = vset.pattern.permute.xlu0 0
        %2869 = vperm.xlu0 %2868, %v2547
        %v2870 = vpop.permute.xlu0 %2869
        %2873 = vset.pattern.permute.xlu0 0
        %2874 = vperm.xlu0 %2873, %v2548
        %v2875 = vpop.permute.xlu0 %2874
        %2878 = vset.pattern.permute.xlu0 0
        %2879 = vperm.xlu0 %2878, %v2549
        %v2880 = vpop.permute.xlu0 %2879
        %2883 = vset.pattern.permute.xlu0 0
        %2884 = vperm.xlu0 %2883, %v2550
        %v2885 = vpop.permute.xlu0 %2884
        %2888 = vset.pattern.permute.xlu0 0
        %2889 = vperm.xlu0 %2888, %v2551
        %v2890 = vpop.permute.xlu0 %2889
        %2893 = vset.pattern.permute.xlu0 0
        %2894 = vperm.xlu0 %2893, %v2552
        %v2895 = vpop.permute.xlu0 %2894
        %2898 = vset.pattern.permute.xlu0 0
        %2899 = vperm.xlu0 %2898, %v2553
        %v2900 = vpop.permute.xlu0 %2899
        %2903 = vset.pattern.permute.xlu0 0
        %2904 = vperm.xlu0 %2903, %v2554
        %v2905 = vpop.permute.xlu0 %2904
        %2908 = vset.pattern.permute.xlu0 0
        %2909 = vperm.xlu0 %2908, %v2555
        %v2910 = vpop.permute.xlu0 %2909
        %2913 = vset.pattern.permute.xlu0 0
        %2914 = vperm.xlu0 %2913, %v2556
        %v2915 = vpop.permute.xlu0 %2914
        %2918 = vset.pattern.permute.xlu0 0
        %2919 = vperm.xlu0 %2918, %v2557
        %v2920 = vpop.permute.xlu0 %2919
        %2923 = vset.pattern.permute.xlu0 0
        %2924 = vperm.xlu0 %2923, %v2558
        %v2925 = vpop.permute.xlu0 %2924
        %2928 = vset.pattern.permute.xlu0 0
        %2929 = vperm.xlu0 %2928, %v2559
        %v2930 = vpop.permute.xlu0 %2929
        %2933 = vset.pattern.permute.xlu0 0
        %2934 = vperm.xlu0 %2933, %v2560
        %v2935 = vpop.permute.xlu0 %2934
        %2938 = vset.pattern.permute.xlu0 0
        %2939 = vperm.xlu0 %2938, %v2561
        %v2940 = vpop.permute.xlu0 %2939
        %2943 = vset.pattern.permute.xlu0 0
        %2944 = vperm.xlu0 %2943, %v2562
        %v2945 = vpop.permute.xlu0 %2944
        %2948 = vset.pattern.permute.xlu0 0
        %2949 = vperm.xlu0 %2948, %v2563
        %v2950 = vpop.permute.xlu0 %2949
        %2953 = vset.pattern.permute.xlu0 0
        %2954 = vperm.xlu0 %2953, %v2564
        %v2955 = vpop.permute.xlu0 %2954
        %2958 = vset.pattern.permute.xlu0 0
        %2959 = vperm.xlu0 %2958, %v2565
        %v2960 = vpop.permute.xlu0 %2959
        %2963 = vset.pattern.permute.xlu0 0
        %2964 = vperm.xlu0 %2963, %v2566
        %v2965 = vpop.permute.xlu0 %2964
        %2968 = vset.pattern.permute.xlu0 0
        %2969 = vperm.xlu0 %2968, %v2567
        %v2970 = vpop.permute.xlu0 %2969
        %2973 = vset.pattern.permute.xlu0 0
        %2974 = vperm.xlu0 %2973, %v2568
        %v2975 = vpop.permute.xlu0 %2974
        %2978 = vset.pattern.permute.xlu0 0
        %2979 = vperm.xlu0 %2978, %v2569
        %v2980 = vpop.permute.xlu0 %2979
        %2983 = vset.pattern.permute.xlu0 0
        %2984 = vperm.xlu0 %2983, %v2570
        %v2985 = vpop.permute.xlu0 %2984
        %2988 = vset.pattern.permute.xlu0 0
        %2989 = vperm.xlu0 %2988, %v2571
        %v2990 = vpop.permute.xlu0 %2989
        %2993 = vset.pattern.permute.xlu0 0
        %2994 = vperm.xlu0 %2993, %v2572
        %v2995 = vpop.permute.xlu0 %2994
        %2998 = vset.pattern.permute.xlu0 0
        %2999 = vperm.xlu0 %2998, %v2573
        %v3000 = vpop.permute.xlu0 %2999
        %3003 = vset.pattern.permute.xlu0 0
        %3004 = vperm.xlu0 %3003, %v2574
        %v3005 = vpop.permute.xlu0 %3004
        %3008 = vset.pattern.permute.xlu0 0
        %3009 = vperm.xlu0 %3008, %v2575
        %v3010 = vpop.permute.xlu0 %3009
        %3013 = vset.pattern.permute.xlu0 0
        %3014 = vperm.xlu0 %3013, %v2576
        %v3015 = vpop.permute.xlu0 %3014
        %3018 = vset.pattern.permute.xlu0 0
        %3019 = vperm.xlu0 %3018, %v2577
        %v3020 = vpop.permute.xlu0 %3019
        %3023 = vset.pattern.permute.xlu0 0
        %3024 = vperm.xlu0 %3023, %v2578
        %v3025 = vpop.permute.xlu0 %3024
        %3028 = vset.pattern.permute.xlu0 0
        %3029 = vperm.xlu0 %3028, %v2579
        %v3030 = vpop.permute.xlu0 %3029
        %3033 = vset.pattern.permute.xlu0 0
        %3034 = vperm.xlu0 %3033, %v2580
        %v3035 = vpop.permute.xlu0 %3034
        %3038 = vset.pattern.permute.xlu0 0
        %3039 = vperm.xlu0 %3038, %v2581
        %v3040 = vpop.permute.xlu0 %3039
        %3043 = vset.pattern.permute.xlu0 0
        %3044 = vperm.xlu0 %3043, %v2582
        %v3045 = vpop.permute.xlu0 %3044
        %3048 = vset.pattern.permute.xlu0 0
        %3049 = vperm.xlu0 %3048, %v2583
        %v3050 = vpop.permute.xlu0 %3049
        %3053 = vset.pattern.permute.xlu0 0
        %3054 = vperm.xlu0 %3053, %v2584
        %v3055 = vpop.permute.xlu0 %3054
        %3058 = vset.pattern.permute.xlu0 0
        %3059 = vperm.xlu0 %3058, %v2585
        %v3060 = vpop.permute.xlu0 %3059
        %3063 = vset.pattern.permute.xlu0 0
        %3064 = vperm.xlu0 %3063, %v2586
        %v3065 = vpop.permute.xlu0 %3064
        %3068 = vset.pattern.permute.xlu0 0
        %3069 = vperm.xlu0 %3068, %v2587
        %v3070 = vpop.permute.xlu0 %3069
        %3073 = vset.pattern.permute.xlu0 0
        %3074 = vperm.xlu0 %3073, %v2588
        %v3075 = vpop.permute.xlu0 %3074
        %3078 = vset.pattern.permute.xlu0 0
        %3079 = vperm.xlu0 %3078, %v2589
        %v3080 = vpop.permute.xlu0 %3079
        %3083 = vset.pattern.permute.xlu0 0
        %3084 = vperm.xlu0 %3083, %v2590
        %v3085 = vpop.permute.xlu0 %3084
        %3088 = vset.pattern.permute.xlu0 0
        %3089 = vperm.xlu0 %3088, %v2591
        %v3090 = vpop.permute.xlu0 %3089
        %3093 = vset.pattern.permute.xlu0 0
        %3094 = vperm.xlu0 %3093, %v2592
        %v3095 = vpop.permute.xlu0 %3094
        %3098 = vset.pattern.permute.xlu0 0
        %3099 = vperm.xlu0 %3098, %v2593
        %v3100 = vpop.permute.xlu0 %3099
        %3103 = vset.pattern.permute.xlu0 0
        %3104 = vperm.xlu0 %3103, %v2594
        %v3105 = vpop.permute.xlu0 %3104
        %v3107 = vsub.f32 %v1769, %v2790
        %v3108 = vsub.f32 %v1771, %v2795
        %v3109 = vsub.f32 %v1774, %v2800
        %v3110 = vsub.f32 %v1776, %v2805
        %v3111 = vsub.f32 %v1779, %v2810
        %v3112 = vsub.f32 %v1781, %v2815
        %v3113 = vsub.f32 %v1784, %v2820
        %v3114 = vsub.f32 %v1786, %v2825
        %v3115 = vsub.f32 %v1789, %v2830
        %v3116 = vsub.f32 %v1791, %v2835
        %v3117 = vsub.f32 %v1794, %v2840
        %v3118 = vsub.f32 %v1796, %v2845
        %v3119 = vsub.f32 %v1799, %v2850
        %v3120 = vsub.f32 %v1801, %v2855
        %v3121 = vsub.f32 %v1804, %v2860
        %v3122 = vsub.f32 %v1806, %v2865
        %v3123 = vsub.f32 %v1946, %v2870
        %v3124 = vsub.f32 %v1948, %v2875
        %v3125 = vsub.f32 %v1951, %v2880
        %v3126 = vsub.f32 %v1953, %v2885
        %v3127 = vsub.f32 %v1956, %v2890
        %v3128 = vsub.f32 %v1958, %v2895
        %v3129 = vsub.f32 %v1961, %v2900
        %v3130 = vsub.f32 %v1963, %v2905
        %v3131 = vsub.f32 %v1966, %v2910
        %v3132 = vsub.f32 %v1968, %v2915
        %v3133 = vsub.f32 %v1971, %v2920
        %v3134 = vsub.f32 %v1973, %v2925
        %v3135 = vsub.f32 %v1976, %v2930
        %v3136 = vsub.f32 %v1978, %v2935
        %v3137 = vsub.f32 %v1981, %v2940
        %v3138 = vsub.f32 %v1983, %v2945
        %v3139 = vsub.f32 %v2123, %v2950
        %v3140 = vsub.f32 %v2125, %v2955
        %v3141 = vsub.f32 %v2128, %v2960
        %v3142 = vsub.f32 %v2130, %v2965
        %v3143 = vsub.f32 %v2133, %v2970
        %v3144 = vsub.f32 %v2135, %v2975
        %v3145 = vsub.f32 %v2138, %v2980
        %v3146 = vsub.f32 %v2140, %v2985
        %v3147 = vsub.f32 %v2143, %v2990
        %v3148 = vsub.f32 %v2145, %v2995
        %v3149 = vsub.f32 %v2148, %v3000
        %v3150 = vsub.f32 %v2150, %v3005
        %v3151 = vsub.f32 %v2153, %v3010
        %v3152 = vsub.f32 %v2155, %v3015
        %v3153 = vsub.f32 %v2158, %v3020
        %v3154 = vsub.f32 %v2160, %v3025
        %v3155 = vsub.f32 %v2300, %v3030
        %v3156 = vsub.f32 %v2302, %v3035
        %v3157 = vsub.f32 %v2305, %v3040
        %v3158 = vsub.f32 %v2307, %v3045
        %v3159 = vsub.f32 %v2310, %v3050
        %v3160 = vsub.f32 %v2312, %v3055
        %v3161 = vsub.f32 %v2315, %v3060
        %v3162 = vsub.f32 %v2317, %v3065
        %v3163 = vsub.f32 %v2320, %v3070
        %v3164 = vsub.f32 %v2322, %v3075
        %v3165 = vsub.f32 %v2325, %v3080
        %v3166 = vsub.f32 %v2327, %v3085
        %v3167 = vsub.f32 %v2330, %v3090
        %v3168 = vsub.f32 %v2332, %v3095
        %v3169 = vsub.f32 %v2335, %v3100
        %v3170 = vsub.f32 %v2337, %v3105
        %v3171 = vmul.f32 %v3107, 1.442695
        %v3172 = vpow.pop %v3171
        %v3173 = vmul.f32 %v3108, 1.442695
        %v3174 = vpow.pop %v3173
        %v3175 = vmul.f32 %v3109, 1.442695
        %v3176 = vpow.pop %v3175
        %v3177 = vmul.f32 %v3110, 1.442695
        %v3178 = vpow.pop %v3177
        %v3179 = vmul.f32 %v3111, 1.442695
        %v3180 = vpow.pop %v3179
        %v3181 = vmul.f32 %v3112, 1.442695
        %v3182 = vpow.pop %v3181
        %v3183 = vmul.f32 %v3113, 1.442695
        %v3184 = vpow.pop %v3183
        %v3185 = vmul.f32 %v3114, 1.442695
        %v3186 = vpow.pop %v3185
        %v3187 = vmul.f32 %v3115, 1.442695
        %v3188 = vpow.pop %v3187
        %v3189 = vmul.f32 %v3116, 1.442695
        %v3190 = vpow.pop %v3189
        %v3191 = vmul.f32 %v3117, 1.442695
        %v3192 = vpow.pop %v3191
        %v3193 = vmul.f32 %v3118, 1.442695
        %v3194 = vpow.pop %v3193
        %v3195 = vmul.f32 %v3119, 1.442695
        %v3196 = vpow.pop %v3195
        %v3197 = vmul.f32 %v3120, 1.442695
        %v3198 = vpow.pop %v3197
        %v3199 = vmul.f32 %v3121, 1.442695
        %v3200 = vpow.pop %v3199
        %v3201 = vmul.f32 %v3122, 1.442695
        %v3202 = vpow.pop %v3201
        %v3203 = vmul.f32 %v3123, 1.442695
        %v3204 = vpow.pop %v3203
        %v3205 = vmul.f32 %v3124, 1.442695
        %v3206 = vpow.pop %v3205
        %v3207 = vmul.f32 %v3125, 1.442695
        %v3208 = vpow.pop %v3207
        %v3209 = vmul.f32 %v3126, 1.442695
        %v3210 = vpow.pop %v3209
        %v3211 = vmul.f32 %v3127, 1.442695
        %v3212 = vpow.pop %v3211
        %v3213 = vmul.f32 %v3128, 1.442695
        %v3214 = vpow.pop %v3213
        %v3215 = vmul.f32 %v3129, 1.442695
        %v3216 = vpow.pop %v3215
        %v3217 = vmul.f32 %v3130, 1.442695
        %v3218 = vpow.pop %v3217
        %v3219 = vmul.f32 %v3131, 1.442695
        %v3220 = vpow.pop %v3219
        %v3221 = vmul.f32 %v3132, 1.442695
        %v3222 = vpow.pop %v3221
        %v3223 = vmul.f32 %v3133, 1.442695
        %v3224 = vpow.pop %v3223
        %v3225 = vmul.f32 %v3134, 1.442695
        %v3226 = vpow.pop %v3225
        %v3227 = vmul.f32 %v3135, 1.442695
        %v3228 = vpow.pop %v3227
        %v3229 = vmul.f32 %v3136, 1.442695
        %v3230 = vpow.pop %v3229
        %v3231 = vmul.f32 %v3137, 1.442695
        %v3232 = vpow.pop %v3231
        %v3233 = vmul.f32 %v3138, 1.442695
        %v3234 = vpow.pop %v3233
        %v3235 = vmul.f32 %v3139, 1.442695
        %v3236 = vpow.pop %v3235
        %v3237 = vmul.f32 %v3140, 1.442695
        %v3238 = vpow.pop %v3237
        %v3239 = vmul.f32 %v3141, 1.442695
        %v3240 = vpow.pop %v3239
        %v3241 = vmul.f32 %v3142, 1.442695
        %v3242 = vpow.pop %v3241
        %v3243 = vmul.f32 %v3143, 1.442695
        %v3244 = vpow.pop %v3243
        %v3245 = vmul.f32 %v3144, 1.442695
        %v3246 = vpow.pop %v3245
        %v3247 = vmul.f32 %v3145, 1.442695
        %v3248 = vpow.pop %v3247
        %v3249 = vmul.f32 %v3146, 1.442695
        %v3250 = vpow.pop %v3249
        %v3251 = vmul.f32 %v3147, 1.442695
        %v3252 = vpow.pop %v3251
        %v3253 = vmul.f32 %v3148, 1.442695
        %v3254 = vpow.pop %v3253
        %v3255 = vmul.f32 %v3149, 1.442695
        %v3256 = vpow.pop %v3255
        %v3257 = vmul.f32 %v3150, 1.442695
        %v3258 = vpow.pop %v3257
        %v3259 = vmul.f32 %v3151, 1.442695
        %v3260 = vpow.pop %v3259
        %v3261 = vmul.f32 %v3152, 1.442695
        %v3262 = vpow.pop %v3261
        %v3263 = vmul.f32 %v3153, 1.442695
        %v3264 = vpow.pop %v3263
        %v3265 = vmul.f32 %v3154, 1.442695
        %v3266 = vpow.pop %v3265
        %v3267 = vmul.f32 %v3155, 1.442695
        %v3268 = vpow.pop %v3267
        %v3269 = vmul.f32 %v3156, 1.442695
        %v3270 = vpow.pop %v3269
        %v3271 = vmul.f32 %v3157, 1.442695
        %v3272 = vpow.pop %v3271
        %v3273 = vmul.f32 %v3158, 1.442695
        %v3274 = vpow.pop %v3273
        %v3275 = vmul.f32 %v3159, 1.442695
        %v3276 = vpow.pop %v3275
        %v3277 = vmul.f32 %v3160, 1.442695
        %v3278 = vpow.pop %v3277
        %v3279 = vmul.f32 %v3161, 1.442695
        %v3280 = vpow.pop %v3279
        %v3281 = vmul.f32 %v3162, 1.442695
        %v3282 = vpow.pop %v3281
        %v3283 = vmul.f32 %v3163, 1.442695
        %v3284 = vpow.pop %v3283
        %v3285 = vmul.f32 %v3164, 1.442695
        %v3286 = vpow.pop %v3285
        %v3287 = vmul.f32 %v3165, 1.442695
        %v3288 = vpow.pop %v3287
        %v3289 = vmul.f32 %v3166, 1.442695
        %v3290 = vpow.pop %v3289
        %v3291 = vmul.f32 %v3167, 1.442695
        %v3292 = vpow.pop %v3291
        %v3293 = vmul.f32 %v3168, 1.442695
        %v3294 = vpow.pop %v3293
        %v3295 = vmul.f32 %v3169, 1.442695
        %v3296 = vpow.pop %v3295
        %v3297 = vmul.f32 %v3170, 1.442695
        %v3298 = vpow.pop %v3297
        %v3299 = vld [vmem:[#allocation3] sm:$0xff]
        %v3300 = vld [vmem:[#allocation3 + $0x8] sm:$0xff]
        %v3301 = vld [vmem:[#allocation3 + $0x10] sm:$0xff]
        %v3302 = vld [vmem:[#allocation3 + $0x18] sm:$0xff]
        %v3303 = vld [vmem:[#allocation3 + $0x20] sm:$0xff]
        %v3304 = vld [vmem:[#allocation3 + $0x28] sm:$0xff]
        %v3305 = vld [vmem:[#allocation3 + $0x30] sm:$0xff]
        %v3306 = vld [vmem:[#allocation3 + $0x38] sm:$0xff]
        %v3307 = vld [vmem:[#allocation3 + $0x40] sm:$0xff]
        %v3308 = vld [vmem:[#allocation3 + $0x48] sm:$0xff]
        %v3309 = vld [vmem:[#allocation3 + $0x50] sm:$0xff]
        %v3310 = vld [vmem:[#allocation3 + $0x58] sm:$0xff]
        %v3311 = vld [vmem:[#allocation3 + $0x60] sm:$0xff]
        %v3312 = vld [vmem:[#allocation3 + $0x68] sm:$0xff]
        %v3313 = vld [vmem:[#allocation3 + $0x70] sm:$0xff]
        %v3314 = vld [vmem:[#allocation3 + $0x78] sm:$0xff]
        %v3315 = vld [vmem:[#allocation3 + $0x80] sm:$0xff]
        %v3316 = vld [vmem:[#allocation3 + $0x88] sm:$0xff]
        %v3317 = vld [vmem:[#allocation3 + $0x90] sm:$0xff]
        %v3318 = vld [vmem:[#allocation3 + $0x98] sm:$0xff]
        %v3319 = vld [vmem:[#allocation3 + $0xa0] sm:$0xff]
        %v3320 = vld [vmem:[#allocation3 + $0xa8] sm:$0xff]
        %v3321 = vld [vmem:[#allocation3 + $0xb0] sm:$0xff]
        %v3322 = vld [vmem:[#allocation3 + $0xb8] sm:$0xff]
        %v3323 = vld [vmem:[#allocation3 + $0xc0] sm:$0xff]
        %v3324 = vld [vmem:[#allocation3 + $0xc8] sm:$0xff]
        %v3325 = vld [vmem:[#allocation3 + $0xd0] sm:$0xff]
        %v3326 = vld [vmem:[#allocation3 + $0xd8] sm:$0xff]
        %v3327 = vld [vmem:[#allocation3 + $0xe0] sm:$0xff]
        %v3328 = vld [vmem:[#allocation3 + $0xe8] sm:$0xff]
        %v3329 = vld [vmem:[#allocation3 + $0xf0] sm:$0xff]
        %v3330 = vld [vmem:[#allocation3 + $0xf8] sm:$0xff]
        %v3331 = vld [vmem:[#allocation3 + $0x100] sm:$0xff]
        %v3332 = vld [vmem:[#allocation3 + $0x108] sm:$0xff]
        %v3333 = vld [vmem:[#allocation3 + $0x110] sm:$0xff]
        %v3334 = vld [vmem:[#allocation3 + $0x118] sm:$0xff]
        %v3335 = vld [vmem:[#allocation3 + $0x120] sm:$0xff]
        %v3336 = vld [vmem:[#allocation3 + $0x128] sm:$0xff]
        %v3337 = vld [vmem:[#allocation3 + $0x130] sm:$0xff]
        %v3338 = vld [vmem:[#allocation3 + $0x138] sm:$0xff]
        %v3339 = vld [vmem:[#allocation3 + $0x140] sm:$0xff]
        %v3340 = vld [vmem:[#allocation3 + $0x148] sm:$0xff]
        %v3341 = vld [vmem:[#allocation3 + $0x150] sm:$0xff]
        %v3342 = vld [vmem:[#allocation3 + $0x158] sm:$0xff]
        %v3343 = vld [vmem:[#allocation3 + $0x160] sm:$0xff]
        %v3344 = vld [vmem:[#allocation3 + $0x168] sm:$0xff]
        %v3345 = vld [vmem:[#allocation3 + $0x170] sm:$0xff]
        %v3346 = vld [vmem:[#allocation3 + $0x178] sm:$0xff]
        %v3347 = vld [vmem:[#allocation3 + $0x180] sm:$0xff]
        %v3348 = vld [vmem:[#allocation3 + $0x188] sm:$0xff]
        %v3349 = vld [vmem:[#allocation3 + $0x190] sm:$0xff]
        %v3350 = vld [vmem:[#allocation3 + $0x198] sm:$0xff]
        %v3351 = vld [vmem:[#allocation3 + $0x1a0] sm:$0xff]
        %v3352 = vld [vmem:[#allocation3 + $0x1a8] sm:$0xff]
        %v3353 = vld [vmem:[#allocation3 + $0x1b0] sm:$0xff]
        %v3354 = vld [vmem:[#allocation3 + $0x1b8] sm:$0xff]
        %v3355 = vld [vmem:[#allocation3 + $0x1c0] sm:$0xff]
        %v3356 = vld [vmem:[#allocation3 + $0x1c8] sm:$0xff]
        %v3357 = vld [vmem:[#allocation3 + $0x1d0] sm:$0xff]
        %v3358 = vld [vmem:[#allocation3 + $0x1d8] sm:$0xff]
        %v3359 = vld [vmem:[#allocation3 + $0x1e0] sm:$0xff]
        %v3360 = vld [vmem:[#allocation3 + $0x1e8] sm:$0xff]
        %v3361 = vld [vmem:[#allocation3 + $0x1f0] sm:$0xff]
        %v3362 = vld [vmem:[#allocation3 + $0x1f8] sm:$0xff]
        %v3363 = vmul.f32 %v2660, %v3299
        %v3364 = vmul.f32 %v2662, %v3300
        %v3365 = vmul.f32 %v2664, %v3301
        %v3366 = vmul.f32 %v2666, %v3302
        %v3367 = vmul.f32 %v2668, %v3303
        %v3368 = vmul.f32 %v2670, %v3304
        %v3369 = vmul.f32 %v2672, %v3305
        %v3370 = vmul.f32 %v2674, %v3306
        %v3371 = vmul.f32 %v2676, %v3307
        %v3372 = vmul.f32 %v2678, %v3308
        %v3373 = vmul.f32 %v2680, %v3309
        %v3374 = vmul.f32 %v2682, %v3310
        %v3375 = vmul.f32 %v2684, %v3311
        %v3376 = vmul.f32 %v2686, %v3312
        %v3377 = vmul.f32 %v2688, %v3313
        %v3378 = vmul.f32 %v2690, %v3314
        %v3379 = vmul.f32 %v2692, %v3315
        %v3380 = vmul.f32 %v2694, %v3316
        %v3381 = vmul.f32 %v2696, %v3317
        %v3382 = vmul.f32 %v2698, %v3318
        %v3383 = vmul.f32 %v2700, %v3319
        %v3384 = vmul.f32 %v2702, %v3320
        %v3385 = vmul.f32 %v2704, %v3321
        %v3386 = vmul.f32 %v2706, %v3322
        %v3387 = vmul.f32 %v2708, %v3323
        %v3388 = vmul.f32 %v2710, %v3324
        %v3389 = vmul.f32 %v2712, %v3325
        %v3390 = vmul.f32 %v2714, %v3326
        %v3391 = vmul.f32 %v2716, %v3327
        %v3392 = vmul.f32 %v2718, %v3328
        %v3393 = vmul.f32 %v2720, %v3329
        %v3394 = vmul.f32 %v2722, %v3330
        %v3395 = vmul.f32 %v2724, %v3331
        %v3396 = vmul.f32 %v2726, %v3332
        %v3397 = vmul.f32 %v2728, %v3333
        %v3398 = vmul.f32 %v2730, %v3334
        %v3399 = vmul.f32 %v2732, %v3335
        %v3400 = vmul.f32 %v2734, %v3336
        %v3401 = vmul.f32 %v2736, %v3337
        %v3402 = vmul.f32 %v2738, %v3338
        %v3403 = vmul.f32 %v2740, %v3339
        %v3404 = vmul.f32 %v2742, %v3340
        %v3405 = vmul.f32 %v2744, %v3341
        %v3406 = vmul.f32 %v2746, %v3342
        %v3407 = vmul.f32 %v2748, %v3343
        %v3408 = vmul.f32 %v2750, %v3344
        %v3409 = vmul.f32 %v2752, %v3345
        %v3410 = vmul.f32 %v2754, %v3346
        %v3411 = vmul.f32 %v2756, %v3347
        %v3412 = vmul.f32 %v2758, %v3348
        %v3413 = vmul.f32 %v2760, %v3349
        %v3414 = vmul.f32 %v2762, %v3350
        %v3415 = vmul.f32 %v2764, %v3351
        %v3416 = vmul.f32 %v2766, %v3352
        %v3417 = vmul.f32 %v2768, %v3353
        %v3418 = vmul.f32 %v2770, %v3354
        %v3419 = vmul.f32 %v2772, %v3355
        %v3420 = vmul.f32 %v2774, %v3356
        %v3421 = vmul.f32 %v2776, %v3357
        %v3422 = vmul.f32 %v2778, %v3358
        %v3423 = vmul.f32 %v2780, %v3359
        %v3424 = vmul.f32 %v2782, %v3360
        %v3425 = vmul.f32 %v2784, %v3361
        %v3426 = vmul.f32 %v2786, %v3362
        %3427 = vadd.xlane.f32.xlu0 %v3172
        %v3428 = vpop.xlane.xlu0 %3427
        %3429 = vadd.xlane.f32.xlu0 %v3174
        %v3430 = vpop.xlane.xlu0 %3429
        %3431 = vadd.xlane.f32.xlu0 %v3176
        %v3432 = vpop.xlane.xlu0 %3431
        %3433 = vadd.xlane.f32.xlu0 %v3178
        %v3434 = vpop.xlane.xlu0 %3433
        %3435 = vadd.xlane.f32.xlu0 %v3180
        %v3436 = vpop.xlane.xlu0 %3435
        %3437 = vadd.xlane.f32.xlu0 %v3182
        %v3438 = vpop.xlane.xlu0 %3437
        %3439 = vadd.xlane.f32.xlu0 %v3184
        %v3440 = vpop.xlane.xlu0 %3439
        %3441 = vadd.xlane.f32.xlu0 %v3186
        %v3442 = vpop.xlane.xlu0 %3441
        %3443 = vadd.xlane.f32.xlu0 %v3188
        %v3444 = vpop.xlane.xlu0 %3443
        %3445 = vadd.xlane.f32.xlu0 %v3190
        %v3446 = vpop.xlane.xlu0 %3445
        %3447 = vadd.xlane.f32.xlu0 %v3192
        %v3448 = vpop.xlane.xlu0 %3447
        %3449 = vadd.xlane.f32.xlu0 %v3194
        %v3450 = vpop.xlane.xlu0 %3449
        %3451 = vadd.xlane.f32.xlu0 %v3196
        %v3452 = vpop.xlane.xlu0 %3451
        %3453 = vadd.xlane.f32.xlu0 %v3198
        %v3454 = vpop.xlane.xlu0 %3453
        %3455 = vadd.xlane.f32.xlu0 %v3200
        %v3456 = vpop.xlane.xlu0 %3455
        %3457 = vadd.xlane.f32.xlu0 %v3202
        %v3458 = vpop.xlane.xlu0 %3457
        %3459 = vadd.xlane.f32.xlu0 %v3204
        %v3460 = vpop.xlane.xlu0 %3459
        %3461 = vadd.xlane.f32.xlu0 %v3206
        %v3462 = vpop.xlane.xlu0 %3461
        %3463 = vadd.xlane.f32.xlu0 %v3208
        %v3464 = vpop.xlane.xlu0 %3463
        %3465 = vadd.xlane.f32.xlu0 %v3210
        %v3466 = vpop.xlane.xlu0 %3465
        %3467 = vadd.xlane.f32.xlu0 %v3212
        %v3468 = vpop.xlane.xlu0 %3467
        %3469 = vadd.xlane.f32.xlu0 %v3214
        %v3470 = vpop.xlane.xlu0 %3469
        %3471 = vadd.xlane.f32.xlu0 %v3216
        %v3472 = vpop.xlane.xlu0 %3471
        %3473 = vadd.xlane.f32.xlu0 %v3218
        %v3474 = vpop.xlane.xlu0 %3473
        %3475 = vadd.xlane.f32.xlu0 %v3220
        %v3476 = vpop.xlane.xlu0 %3475
        %3477 = vadd.xlane.f32.xlu0 %v3222
        %v3478 = vpop.xlane.xlu0 %3477
        %3479 = vadd.xlane.f32.xlu0 %v3224
        %v3480 = vpop.xlane.xlu0 %3479
        %3481 = vadd.xlane.f32.xlu0 %v3226
        %v3482 = vpop.xlane.xlu0 %3481
        %3483 = vadd.xlane.f32.xlu0 %v3228
        %v3484 = vpop.xlane.xlu0 %3483
        %3485 = vadd.xlane.f32.xlu0 %v3230
        %v3486 = vpop.xlane.xlu0 %3485
        %3487 = vadd.xlane.f32.xlu0 %v3232
        %v3488 = vpop.xlane.xlu0 %3487
        %3489 = vadd.xlane.f32.xlu0 %v3234
        %v3490 = vpop.xlane.xlu0 %3489
        %3491 = vadd.xlane.f32.xlu0 %v3236
        %v3492 = vpop.xlane.xlu0 %3491
        %3493 = vadd.xlane.f32.xlu0 %v3238
        %v3494 = vpop.xlane.xlu0 %3493
        %3495 = vadd.xlane.f32.xlu0 %v3240
        %v3496 = vpop.xlane.xlu0 %3495
        %3497 = vadd.xlane.f32.xlu0 %v3242
        %v3498 = vpop.xlane.xlu0 %3497
        %3499 = vadd.xlane.f32.xlu0 %v3244
        %v3500 = vpop.xlane.xlu0 %3499
        %3501 = vadd.xlane.f32.xlu0 %v3246
        %v3502 = vpop.xlane.xlu0 %3501
        %3503 = vadd.xlane.f32.xlu0 %v3248
        %v3504 = vpop.xlane.xlu0 %3503
        %3505 = vadd.xlane.f32.xlu0 %v3250
        %v3506 = vpop.xlane.xlu0 %3505
        %3507 = vadd.xlane.f32.xlu0 %v3252
        %v3508 = vpop.xlane.xlu0 %3507
        %3509 = vadd.xlane.f32.xlu0 %v3254
        %v3510 = vpop.xlane.xlu0 %3509
        %3511 = vadd.xlane.f32.xlu0 %v3256
        %v3512 = vpop.xlane.xlu0 %3511
        %3513 = vadd.xlane.f32.xlu0 %v3258
        %v3514 = vpop.xlane.xlu0 %3513
        %3515 = vadd.xlane.f32.xlu0 %v3260
        %v3516 = vpop.xlane.xlu0 %3515
        %3517 = vadd.xlane.f32.xlu0 %v3262
        %v3518 = vpop.xlane.xlu0 %3517
        %3519 = vadd.xlane.f32.xlu0 %v3264
        %v3520 = vpop.xlane.xlu0 %3519
        %3521 = vadd.xlane.f32.xlu0 %v3266
        %v3522 = vpop.xlane.xlu0 %3521
        %3523 = vadd.xlane.f32.xlu0 %v3268
        %v3524 = vpop.xlane.xlu0 %3523
        %3525 = vadd.xlane.f32.xlu0 %v3270
        %v3526 = vpop.xlane.xlu0 %3525
        %3527 = vadd.xlane.f32.xlu0 %v3272
        %v3528 = vpop.xlane.xlu0 %3527
        %3529 = vadd.xlane.f32.xlu0 %v3274
        %v3530 = vpop.xlane.xlu0 %3529
        %3531 = vadd.xlane.f32.xlu0 %v3276
        %v3532 = vpop.xlane.xlu0 %3531
        %3533 = vadd.xlane.f32.xlu0 %v3278
        %v3534 = vpop.xlane.xlu0 %3533
        %3535 = vadd.xlane.f32.xlu0 %v3280
        %v3536 = vpop.xlane.xlu0 %3535
        %3537 = vadd.xlane.f32.xlu0 %v3282
        %v3538 = vpop.xlane.xlu0 %3537
        %3539 = vadd.xlane.f32.xlu0 %v3284
        %v3540 = vpop.xlane.xlu0 %3539
        %3541 = vadd.xlane.f32.xlu0 %v3286
        %v3542 = vpop.xlane.xlu0 %3541
        %3543 = vadd.xlane.f32.xlu0 %v3288
        %v3544 = vpop.xlane.xlu0 %3543
        %3545 = vadd.xlane.f32.xlu0 %v3290
        %v3546 = vpop.xlane.xlu0 %3545
        %3547 = vadd.xlane.f32.xlu0 %v3292
        %v3548 = vpop.xlane.xlu0 %3547
        %3549 = vadd.xlane.f32.xlu0 %v3294
        %v3550 = vpop.xlane.xlu0 %3549
        %3551 = vadd.xlane.f32.xlu0 %v3296
        %v3552 = vpop.xlane.xlu0 %3551
        %3553 = vadd.xlane.f32.xlu0 %v3298
        %v3554 = vpop.xlane.xlu0 %3553
        %v3555 = vadd.f32 %v3363, %v3428
        %v3556 = vadd.f32 %v3364, %v3430
        %v3557 = vadd.f32 %v3365, %v3432
        %v3558 = vadd.f32 %v3366, %v3434
        %v3559 = vadd.f32 %v3367, %v3436
        %v3560 = vadd.f32 %v3368, %v3438
        %v3561 = vadd.f32 %v3369, %v3440
        %v3562 = vadd.f32 %v3370, %v3442
        %v3563 = vadd.f32 %v3371, %v3444
        %v3564 = vadd.f32 %v3372, %v3446
        %v3565 = vadd.f32 %v3373, %v3448
        %v3566 = vadd.f32 %v3374, %v3450
        %v3567 = vadd.f32 %v3375, %v3452
        %v3568 = vadd.f32 %v3376, %v3454
        %v3569 = vadd.f32 %v3377, %v3456
        %v3570 = vadd.f32 %v3378, %v3458
        %v3571 = vadd.f32 %v3379, %v3460
        %v3572 = vadd.f32 %v3380, %v3462
        %v3573 = vadd.f32 %v3381, %v3464
        %v3574 = vadd.f32 %v3382, %v3466
        %v3575 = vadd.f32 %v3383, %v3468
        %v3576 = vadd.f32 %v3384, %v3470
        %v3577 = vadd.f32 %v3385, %v3472
        %v3578 = vadd.f32 %v3386, %v3474
        %v3579 = vadd.f32 %v3387, %v3476
        %v3580 = vadd.f32 %v3388, %v3478
        %v3581 = vadd.f32 %v3389, %v3480
        %v3582 = vadd.f32 %v3390, %v3482
        %v3583 = vadd.f32 %v3391, %v3484
        %v3584 = vadd.f32 %v3392, %v3486
        %v3585 = vadd.f32 %v3393, %v3488
        %v3586 = vadd.f32 %v3394, %v3490
        %v3587 = vadd.f32 %v3395, %v3492
        %v3588 = vadd.f32 %v3396, %v3494
        %v3589 = vadd.f32 %v3397, %v3496
        %v3590 = vadd.f32 %v3398, %v3498
        %v3591 = vadd.f32 %v3399, %v3500
        %v3592 = vadd.f32 %v3400, %v3502
        %v3593 = vadd.f32 %v3401, %v3504
        %v3594 = vadd.f32 %v3402, %v3506
        %v3595 = vadd.f32 %v3403, %v3508
        %v3596 = vadd.f32 %v3404, %v3510
        %v3597 = vadd.f32 %v3405, %v3512
        %v3598 = vadd.f32 %v3406, %v3514
        %v3599 = vadd.f32 %v3407, %v3516
        %v3600 = vadd.f32 %v3408, %v3518
        %v3601 = vadd.f32 %v3409, %v3520
        %v3602 = vadd.f32 %v3410, %v3522
        %v3603 = vadd.f32 %v3411, %v3524
        %v3604 = vadd.f32 %v3412, %v3526
        %v3605 = vadd.f32 %v3413, %v3528
        %v3606 = vadd.f32 %v3414, %v3530
        %v3607 = vadd.f32 %v3415, %v3532
        %v3608 = vadd.f32 %v3416, %v3534
        %v3609 = vadd.f32 %v3417, %v3536
        %v3610 = vadd.f32 %v3418, %v3538
        %v3611 = vadd.f32 %v3419, %v3540
        %v3612 = vadd.f32 %v3420, %v3542
        %v3613 = vadd.f32 %v3421, %v3544
        %v3614 = vadd.f32 %v3422, %v3546
        %v3615 = vadd.f32 %v3423, %v3548
        %v3616 = vadd.f32 %v3424, %v3550
        %v3617 = vadd.f32 %v3425, %v3552
        %v3618 = vadd.f32 %v3426, %v3554
        %vm3619 = vcmask 7168
        %3620 = vst.msk [vmem:[#allocation3] sm:$0xff] %vm3619, %v3555
        %3621 = vst.msk [vmem:[#allocation3 + $0x8] sm:$0xff] %vm3619, %v3556
        %3622 = vst.msk [vmem:[#allocation3 + $0x10] sm:$0xff] %vm3619, %v3557
        %3623 = vst.msk [vmem:[#allocation3 + $0x18] sm:$0xff] %vm3619, %v3558
        %3624 = vst.msk [vmem:[#allocation3 + $0x20] sm:$0xff] %vm3619, %v3559
        %3625 = vst.msk [vmem:[#allocation3 + $0x28] sm:$0xff] %vm3619, %v3560
        %3626 = vst.msk [vmem:[#allocation3 + $0x30] sm:$0xff] %vm3619, %v3561
        %3627 = vst.msk [vmem:[#allocation3 + $0x38] sm:$0xff] %vm3619, %v3562
        %3628 = vst.msk [vmem:[#allocation3 + $0x40] sm:$0xff] %vm3619, %v3563
        %3629 = vst.msk [vmem:[#allocation3 + $0x48] sm:$0xff] %vm3619, %v3564
        %3630 = vst.msk [vmem:[#allocation3 + $0x50] sm:$0xff] %vm3619, %v3565
        %3631 = vst.msk [vmem:[#allocation3 + $0x58] sm:$0xff] %vm3619, %v3566
        %3632 = vst.msk [vmem:[#allocation3 + $0x60] sm:$0xff] %vm3619, %v3567
        %3633 = vst.msk [vmem:[#allocation3 + $0x68] sm:$0xff] %vm3619, %v3568
        %3634 = vst.msk [vmem:[#allocation3 + $0x70] sm:$0xff] %vm3619, %v3569
        %3635 = vst.msk [vmem:[#allocation3 + $0x78] sm:$0xff] %vm3619, %v3570
        %3636 = vst.msk [vmem:[#allocation3 + $0x80] sm:$0xff] %vm3619, %v3571
        %3637 = vst.msk [vmem:[#allocation3 + $0x88] sm:$0xff] %vm3619, %v3572
        %3638 = vst.msk [vmem:[#allocation3 + $0x90] sm:$0xff] %vm3619, %v3573
        %3639 = vst.msk [vmem:[#allocation3 + $0x98] sm:$0xff] %vm3619, %v3574
        %3640 = vst.msk [vmem:[#allocation3 + $0xa0] sm:$0xff] %vm3619, %v3575
        %3641 = vst.msk [vmem:[#allocation3 + $0xa8] sm:$0xff] %vm3619, %v3576
        %3642 = vst.msk [vmem:[#allocation3 + $0xb0] sm:$0xff] %vm3619, %v3577
        %3643 = vst.msk [vmem:[#allocation3 + $0xb8] sm:$0xff] %vm3619, %v3578
        %3644 = vst.msk [vmem:[#allocation3 + $0xc0] sm:$0xff] %vm3619, %v3579
        %3645 = vst.msk [vmem:[#allocation3 + $0xc8] sm:$0xff] %vm3619, %v3580
        %3646 = vst.msk [vmem:[#allocation3 + $0xd0] sm:$0xff] %vm3619, %v3581
        %3647 = vst.msk [vmem:[#allocation3 + $0xd8] sm:$0xff] %vm3619, %v3582
        %3648 = vst.msk [vmem:[#allocation3 + $0xe0] sm:$0xff] %vm3619, %v3583
        %3649 = vst.msk [vmem:[#allocation3 + $0xe8] sm:$0xff] %vm3619, %v3584
        %3650 = vst.msk [vmem:[#allocation3 + $0xf0] sm:$0xff] %vm3619, %v3585
        %3651 = vst.msk [vmem:[#allocation3 + $0xf8] sm:$0xff] %vm3619, %v3586
        %3652 = vst.msk [vmem:[#allocation3 + $0x100] sm:$0xff] %vm3619, %v3587
        %3653 = vst.msk [vmem:[#allocation3 + $0x108] sm:$0xff] %vm3619, %v3588
        %3654 = vst.msk [vmem:[#allocation3 + $0x110] sm:$0xff] %vm3619, %v3589
        %3655 = vst.msk [vmem:[#allocation3 + $0x118] sm:$0xff] %vm3619, %v3590
        %3656 = vst.msk [vmem:[#allocation3 + $0x120] sm:$0xff] %vm3619, %v3591
        %3657 = vst.msk [vmem:[#allocation3 + $0x128] sm:$0xff] %vm3619, %v3592
        %3658 = vst.msk [vmem:[#allocation3 + $0x130] sm:$0xff] %vm3619, %v3593
        %3659 = vst.msk [vmem:[#allocation3 + $0x138] sm:$0xff] %vm3619, %v3594
        %3660 = vst.msk [vmem:[#allocation3 + $0x140] sm:$0xff] %vm3619, %v3595
        %3661 = vst.msk [vmem:[#allocation3 + $0x148] sm:$0xff] %vm3619, %v3596
        %3662 = vst.msk [vmem:[#allocation3 + $0x150] sm:$0xff] %vm3619, %v3597
        %3663 = vst.msk [vmem:[#allocation3 + $0x158] sm:$0xff] %vm3619, %v3598
        %3664 = vst.msk [vmem:[#allocation3 + $0x160] sm:$0xff] %vm3619, %v3599
        %3665 = vst.msk [vmem:[#allocation3 + $0x168] sm:$0xff] %vm3619, %v3600
        %3666 = vst.msk [vmem:[#allocation3 + $0x170] sm:$0xff] %vm3619, %v3601
        %3667 = vst.msk [vmem:[#allocation3 + $0x178] sm:$0xff] %vm3619, %v3602
        %3668 = vst.msk [vmem:[#allocation3 + $0x180] sm:$0xff] %vm3619, %v3603
        %3669 = vst.msk [vmem:[#allocation3 + $0x188] sm:$0xff] %vm3619, %v3604
        %3670 = vst.msk [vmem:[#allocation3 + $0x190] sm:$0xff] %vm3619, %v3605
        %3671 = vst.msk [vmem:[#allocation3 + $0x198] sm:$0xff] %vm3619, %v3606
        %3672 = vst.msk [vmem:[#allocation3 + $0x1a0] sm:$0xff] %vm3619, %v3607
        %3673 = vst.msk [vmem:[#allocation3 + $0x1a8] sm:$0xff] %vm3619, %v3608
        %3674 = vst.msk [vmem:[#allocation3 + $0x1b0] sm:$0xff] %vm3619, %v3609
        %3675 = vst.msk [vmem:[#allocation3 + $0x1b8] sm:$0xff] %vm3619, %v3610
        %3676 = vst.msk [vmem:[#allocation3 + $0x1c0] sm:$0xff] %vm3619, %v3611
        %3677 = vst.msk [vmem:[#allocation3 + $0x1c8] sm:$0xff] %vm3619, %v3612
        %3678 = vst.msk [vmem:[#allocation3 + $0x1d0] sm:$0xff] %vm3619, %v3613
        %3679 = vst.msk [vmem:[#allocation3 + $0x1d8] sm:$0xff] %vm3619, %v3614
        %3680 = vst.msk [vmem:[#allocation3 + $0x1e0] sm:$0xff] %vm3619, %v3615
        %3681 = vst.msk [vmem:[#allocation3 + $0x1e8] sm:$0xff] %vm3619, %v3616
        %3682 = vst.msk [vmem:[#allocation3 + $0x1f0] sm:$0xff] %vm3619, %v3617
        %3683 = vst.msk [vmem:[#allocation3 + $0x1f8] sm:$0xff] %vm3619, %v3618
        %v3684 = vld [vmem:[#allocation4] sm:$0xff]
        %v3685 = vld [vmem:[#allocation4 + $0x8] sm:$0xff]
        %v3686 = vld [vmem:[#allocation4 + $0x10] sm:$0xff]
        %v3687 = vld [vmem:[#allocation4 + $0x18] sm:$0xff]
        %v3688 = vld [vmem:[#allocation4 + $0x20] sm:$0xff]
        %v3689 = vld [vmem:[#allocation4 + $0x28] sm:$0xff]
        %v3690 = vld [vmem:[#allocation4 + $0x30] sm:$0xff]
        %v3691 = vld [vmem:[#allocation4 + $0x38] sm:$0xff]
        %v3692 = vld [vmem:[#allocation4 + $0x40] sm:$0xff]
        %v3693 = vld [vmem:[#allocation4 + $0x48] sm:$0xff]
        %v3694 = vld [vmem:[#allocation4 + $0x50] sm:$0xff]
        %v3695 = vld [vmem:[#allocation4 + $0x58] sm:$0xff]
        %v3696 = vld [vmem:[#allocation4 + $0x60] sm:$0xff]
        %v3697 = vld [vmem:[#allocation4 + $0x68] sm:$0xff]
        %v3698 = vld [vmem:[#allocation4 + $0x70] sm:$0xff]
        %v3699 = vld [vmem:[#allocation4 + $0x78] sm:$0xff]
        %v3700 = vld [vmem:[#allocation4 + $0x80] sm:$0xff]
        %v3701 = vld [vmem:[#allocation4 + $0x88] sm:$0xff]
        %v3702 = vld [vmem:[#allocation4 + $0x90] sm:$0xff]
        %v3703 = vld [vmem:[#allocation4 + $0x98] sm:$0xff]
        %v3704 = vld [vmem:[#allocation4 + $0xa0] sm:$0xff]
        %v3705 = vld [vmem:[#allocation4 + $0xa8] sm:$0xff]
        %v3706 = vld [vmem:[#allocation4 + $0xb0] sm:$0xff]
        %v3707 = vld [vmem:[#allocation4 + $0xb8] sm:$0xff]
        %v3708 = vld [vmem:[#allocation4 + $0xc0] sm:$0xff]
        %v3709 = vld [vmem:[#allocation4 + $0xc8] sm:$0xff]
        %v3710 = vld [vmem:[#allocation4 + $0xd0] sm:$0xff]
        %v3711 = vld [vmem:[#allocation4 + $0xd8] sm:$0xff]
        %v3712 = vld [vmem:[#allocation4 + $0xe0] sm:$0xff]
        %v3713 = vld [vmem:[#allocation4 + $0xe8] sm:$0xff]
        %v3714 = vld [vmem:[#allocation4 + $0xf0] sm:$0xff]
        %v3715 = vld [vmem:[#allocation4 + $0xf8] sm:$0xff]
        %v3716 = vld [vmem:[#allocation4 + $0x100] sm:$0xff]
        %v3717 = vld [vmem:[#allocation4 + $0x108] sm:$0xff]
        %v3718 = vld [vmem:[#allocation4 + $0x110] sm:$0xff]
        %v3719 = vld [vmem:[#allocation4 + $0x118] sm:$0xff]
        %v3720 = vld [vmem:[#allocation4 + $0x120] sm:$0xff]
        %v3721 = vld [vmem:[#allocation4 + $0x128] sm:$0xff]
        %v3722 = vld [vmem:[#allocation4 + $0x130] sm:$0xff]
        %v3723 = vld [vmem:[#allocation4 + $0x138] sm:$0xff]
        %v3724 = vld [vmem:[#allocation4 + $0x140] sm:$0xff]
        %v3725 = vld [vmem:[#allocation4 + $0x148] sm:$0xff]
        %v3726 = vld [vmem:[#allocation4 + $0x150] sm:$0xff]
        %v3727 = vld [vmem:[#allocation4 + $0x158] sm:$0xff]
        %v3728 = vld [vmem:[#allocation4 + $0x160] sm:$0xff]
        %v3729 = vld [vmem:[#allocation4 + $0x168] sm:$0xff]
        %v3730 = vld [vmem:[#allocation4 + $0x170] sm:$0xff]
        %v3731 = vld [vmem:[#allocation4 + $0x178] sm:$0xff]
        %v3732 = vld [vmem:[#allocation4 + $0x180] sm:$0xff]
        %v3733 = vld [vmem:[#allocation4 + $0x188] sm:$0xff]
        %v3734 = vld [vmem:[#allocation4 + $0x190] sm:$0xff]
        %v3735 = vld [vmem:[#allocation4 + $0x198] sm:$0xff]
        %v3736 = vld [vmem:[#allocation4 + $0x1a0] sm:$0xff]
        %v3737 = vld [vmem:[#allocation4 + $0x1a8] sm:$0xff]
        %v3738 = vld [vmem:[#allocation4 + $0x1b0] sm:$0xff]
        %v3739 = vld [vmem:[#allocation4 + $0x1b8] sm:$0xff]
        %v3740 = vld [vmem:[#allocation4 + $0x1c0] sm:$0xff]
        %v3741 = vld [vmem:[#allocation4 + $0x1c8] sm:$0xff]
        %v3742 = vld [vmem:[#allocation4 + $0x1d0] sm:$0xff]
        %v3743 = vld [vmem:[#allocation4 + $0x1d8] sm:$0xff]
        %v3744 = vld [vmem:[#allocation4 + $0x1e0] sm:$0xff]
        %v3745 = vld [vmem:[#allocation4 + $0x1e8] sm:$0xff]
        %v3746 = vld [vmem:[#allocation4 + $0x1f0] sm:$0xff]
        %v3747 = vld [vmem:[#allocation4 + $0x1f8] sm:$0xff]
        %3749 = vset.pattern.permute.xlu0 0
        %3750 = vperm.xlu0 %3749, %v2660
        %v3751 = vpop.permute.xlu0 %3750
        %3754 = vset.pattern.permute.xlu0 0
        %3755 = vperm.xlu0 %3754, %v2662
        %v3756 = vpop.permute.xlu0 %3755
        %3759 = vset.pattern.permute.xlu0 0
        %3760 = vperm.xlu0 %3759, %v2664
        %v3761 = vpop.permute.xlu0 %3760
        %3764 = vset.pattern.permute.xlu0 0
        %3765 = vperm.xlu0 %3764, %v2666
        %v3766 = vpop.permute.xlu0 %3765
        %3769 = vset.pattern.permute.xlu0 0
        %3770 = vperm.xlu0 %3769, %v2668
        %v3771 = vpop.permute.xlu0 %3770
        %3774 = vset.pattern.permute.xlu0 0
        %3775 = vperm.xlu0 %3774, %v2670
        %v3776 = vpop.permute.xlu0 %3775
        %3779 = vset.pattern.permute.xlu0 0
        %3780 = vperm.xlu0 %3779, %v2672
        %v3781 = vpop.permute.xlu0 %3780
        %3784 = vset.pattern.permute.xlu0 0
        %3785 = vperm.xlu0 %3784, %v2674
        %v3786 = vpop.permute.xlu0 %3785
        %3789 = vset.pattern.permute.xlu0 0
        %3790 = vperm.xlu0 %3789, %v2676
        %v3791 = vpop.permute.xlu0 %3790
        %3794 = vset.pattern.permute.xlu0 0
        %3795 = vperm.xlu0 %3794, %v2678
        %v3796 = vpop.permute.xlu0 %3795
        %3799 = vset.pattern.permute.xlu0 0
        %3800 = vperm.xlu0 %3799, %v2680
        %v3801 = vpop.permute.xlu0 %3800
        %3804 = vset.pattern.permute.xlu0 0
        %3805 = vperm.xlu0 %3804, %v2682
        %v3806 = vpop.permute.xlu0 %3805
        %3809 = vset.pattern.permute.xlu0 0
        %3810 = vperm.xlu0 %3809, %v2684
        %v3811 = vpop.permute.xlu0 %3810
        %3814 = vset.pattern.permute.xlu0 0
        %3815 = vperm.xlu0 %3814, %v2686
        %v3816 = vpop.permute.xlu0 %3815
        %3819 = vset.pattern.permute.xlu0 0
        %3820 = vperm.xlu0 %3819, %v2688
        %v3821 = vpop.permute.xlu0 %3820
        %3824 = vset.pattern.permute.xlu0 0
        %3825 = vperm.xlu0 %3824, %v2690
        %v3826 = vpop.permute.xlu0 %3825
        %3829 = vset.pattern.permute.xlu0 0
        %3830 = vperm.xlu0 %3829, %v2692
        %v3831 = vpop.permute.xlu0 %3830
        %3834 = vset.pattern.permute.xlu0 0
        %3835 = vperm.xlu0 %3834, %v2694
        %v3836 = vpop.permute.xlu0 %3835
        %3839 = vset.pattern.permute.xlu0 0
        %3840 = vperm.xlu0 %3839, %v2696
        %v3841 = vpop.permute.xlu0 %3840
        %3844 = vset.pattern.permute.xlu0 0
        %3845 = vperm.xlu0 %3844, %v2698
        %v3846 = vpop.permute.xlu0 %3845
        %3849 = vset.pattern.permute.xlu0 0
        %3850 = vperm.xlu0 %3849, %v2700
        %v3851 = vpop.permute.xlu0 %3850
        %3854 = vset.pattern.permute.xlu0 0
        %3855 = vperm.xlu0 %3854, %v2702
        %v3856 = vpop.permute.xlu0 %3855
        %3859 = vset.pattern.permute.xlu0 0
        %3860 = vperm.xlu0 %3859, %v2704
        %v3861 = vpop.permute.xlu0 %3860
        %3864 = vset.pattern.permute.xlu0 0
        %3865 = vperm.xlu0 %3864, %v2706
        %v3866 = vpop.permute.xlu0 %3865
        %3869 = vset.pattern.permute.xlu0 0
        %3870 = vperm.xlu0 %3869, %v2708
        %v3871 = vpop.permute.xlu0 %3870
        %3874 = vset.pattern.permute.xlu0 0
        %3875 = vperm.xlu0 %3874, %v2710
        %v3876 = vpop.permute.xlu0 %3875
        %3879 = vset.pattern.permute.xlu0 0
        %3880 = vperm.xlu0 %3879, %v2712
        %v3881 = vpop.permute.xlu0 %3880
        %3884 = vset.pattern.permute.xlu0 0
        %3885 = vperm.xlu0 %3884, %v2714
        %v3886 = vpop.permute.xlu0 %3885
        %3889 = vset.pattern.permute.xlu0 0
        %3890 = vperm.xlu0 %3889, %v2716
        %v3891 = vpop.permute.xlu0 %3890
        %3894 = vset.pattern.permute.xlu0 0
        %3895 = vperm.xlu0 %3894, %v2718
        %v3896 = vpop.permute.xlu0 %3895
        %3899 = vset.pattern.permute.xlu0 0
        %3900 = vperm.xlu0 %3899, %v2720
        %v3901 = vpop.permute.xlu0 %3900
        %3904 = vset.pattern.permute.xlu0 0
        %3905 = vperm.xlu0 %3904, %v2722
        %v3906 = vpop.permute.xlu0 %3905
        %3909 = vset.pattern.permute.xlu0 0
        %3910 = vperm.xlu0 %3909, %v2724
        %v3911 = vpop.permute.xlu0 %3910
        %3914 = vset.pattern.permute.xlu0 0
        %3915 = vperm.xlu0 %3914, %v2726
        %v3916 = vpop.permute.xlu0 %3915
        %3919 = vset.pattern.permute.xlu0 0
        %3920 = vperm.xlu0 %3919, %v2728
        %v3921 = vpop.permute.xlu0 %3920
        %3924 = vset.pattern.permute.xlu0 0
        %3925 = vperm.xlu0 %3924, %v2730
        %v3926 = vpop.permute.xlu0 %3925
        %3929 = vset.pattern.permute.xlu0 0
        %3930 = vperm.xlu0 %3929, %v2732
        %v3931 = vpop.permute.xlu0 %3930
        %3934 = vset.pattern.permute.xlu0 0
        %3935 = vperm.xlu0 %3934, %v2734
        %v3936 = vpop.permute.xlu0 %3935
        %3939 = vset.pattern.permute.xlu0 0
        %3940 = vperm.xlu0 %3939, %v2736
        %v3941 = vpop.permute.xlu0 %3940
        %3944 = vset.pattern.permute.xlu0 0
        %3945 = vperm.xlu0 %3944, %v2738
        %v3946 = vpop.permute.xlu0 %3945
        %3949 = vset.pattern.permute.xlu0 0
        %3950 = vperm.xlu0 %3949, %v2740
        %v3951 = vpop.permute.xlu0 %3950
        %3954 = vset.pattern.permute.xlu0 0
        %3955 = vperm.xlu0 %3954, %v2742
        %v3956 = vpop.permute.xlu0 %3955
        %3959 = vset.pattern.permute.xlu0 0
        %3960 = vperm.xlu0 %3959, %v2744
        %v3961 = vpop.permute.xlu0 %3960
        %3964 = vset.pattern.permute.xlu0 0
        %3965 = vperm.xlu0 %3964, %v2746
        %v3966 = vpop.permute.xlu0 %3965
        %3969 = vset.pattern.permute.xlu0 0
        %3970 = vperm.xlu0 %3969, %v2748
        %v3971 = vpop.permute.xlu0 %3970
        %3974 = vset.pattern.permute.xlu0 0
        %3975 = vperm.xlu0 %3974, %v2750
        %v3976 = vpop.permute.xlu0 %3975
        %3979 = vset.pattern.permute.xlu0 0
        %3980 = vperm.xlu0 %3979, %v2752
        %v3981 = vpop.permute.xlu0 %3980
        %3984 = vset.pattern.permute.xlu0 0
        %3985 = vperm.xlu0 %3984, %v2754
        %v3986 = vpop.permute.xlu0 %3985
        %3989 = vset.pattern.permute.xlu0 0
        %3990 = vperm.xlu0 %3989, %v2756
        %v3991 = vpop.permute.xlu0 %3990
        %3994 = vset.pattern.permute.xlu0 0
        %3995 = vperm.xlu0 %3994, %v2758
        %v3996 = vpop.permute.xlu0 %3995
        %3999 = vset.pattern.permute.xlu0 0
        %4000 = vperm.xlu0 %3999, %v2760
        %v4001 = vpop.permute.xlu0 %4000
        %4004 = vset.pattern.permute.xlu0 0
        %4005 = vperm.xlu0 %4004, %v2762
        %v4006 = vpop.permute.xlu0 %4005
        %4009 = vset.pattern.permute.xlu0 0
        %4010 = vperm.xlu0 %4009, %v2764
        %v4011 = vpop.permute.xlu0 %4010
        %4014 = vset.pattern.permute.xlu0 0
        %4015 = vperm.xlu0 %4014, %v2766
        %v4016 = vpop.permute.xlu0 %4015
        %4019 = vset.pattern.permute.xlu0 0
        %4020 = vperm.xlu0 %4019, %v2768
        %v4021 = vpop.permute.xlu0 %4020
        %4024 = vset.pattern.permute.xlu0 0
        %4025 = vperm.xlu0 %4024, %v2770
        %v4026 = vpop.permute.xlu0 %4025
        %4029 = vset.pattern.permute.xlu0 0
        %4030 = vperm.xlu0 %4029, %v2772
        %v4031 = vpop.permute.xlu0 %4030
        %4034 = vset.pattern.permute.xlu0 0
        %4035 = vperm.xlu0 %4034, %v2774
        %v4036 = vpop.permute.xlu0 %4035
        %4039 = vset.pattern.permute.xlu0 0
        %4040 = vperm.xlu0 %4039, %v2776
        %v4041 = vpop.permute.xlu0 %4040
        %4044 = vset.pattern.permute.xlu0 0
        %4045 = vperm.xlu0 %4044, %v2778
        %v4046 = vpop.permute.xlu0 %4045
        %4049 = vset.pattern.permute.xlu0 0
        %4050 = vperm.xlu0 %4049, %v2780
        %v4051 = vpop.permute.xlu0 %4050
        %4054 = vset.pattern.permute.xlu0 0
        %4055 = vperm.xlu0 %4054, %v2782
        %v4056 = vpop.permute.xlu0 %4055
        %4059 = vset.pattern.permute.xlu0 0
        %4060 = vperm.xlu0 %4059, %v2784
        %v4061 = vpop.permute.xlu0 %4060
        %4064 = vset.pattern.permute.xlu0 0
        %4065 = vperm.xlu0 %4064, %v2786
        %v4066 = vpop.permute.xlu0 %4065
        %v4068 = vmul.f32 %v3751, %v3684
        %v4069 = vmul.f32 %v3756, %v3685
        %v4070 = vmul.f32 %v3761, %v3686
        %v4071 = vmul.f32 %v3766, %v3687
        %v4072 = vmul.f32 %v3771, %v3688
        %v4073 = vmul.f32 %v3776, %v3689
        %v4074 = vmul.f32 %v3781, %v3690
        %v4075 = vmul.f32 %v3786, %v3691
        %v4076 = vmul.f32 %v3791, %v3692
        %v4077 = vmul.f32 %v3796, %v3693
        %v4078 = vmul.f32 %v3801, %v3694
        %v4079 = vmul.f32 %v3806, %v3695
        %v4080 = vmul.f32 %v3811, %v3696
        %v4081 = vmul.f32 %v3816, %v3697
        %v4082 = vmul.f32 %v3821, %v3698
        %v4083 = vmul.f32 %v3826, %v3699
        %v4084 = vmul.f32 %v3831, %v3700
        %v4085 = vmul.f32 %v3836, %v3701
        %v4086 = vmul.f32 %v3841, %v3702
        %v4087 = vmul.f32 %v3846, %v3703
        %v4088 = vmul.f32 %v3851, %v3704
        %v4089 = vmul.f32 %v3856, %v3705
        %v4090 = vmul.f32 %v3861, %v3706
        %v4091 = vmul.f32 %v3866, %v3707
        %v4092 = vmul.f32 %v3871, %v3708
        %v4093 = vmul.f32 %v3876, %v3709
        %v4094 = vmul.f32 %v3881, %v3710
        %v4095 = vmul.f32 %v3886, %v3711
        %v4096 = vmul.f32 %v3891, %v3712
        %v4097 = vmul.f32 %v3896, %v3713
        %v4098 = vmul.f32 %v3901, %v3714
        %v4099 = vmul.f32 %v3906, %v3715
        %v4100 = vmul.f32 %v3911, %v3716
        %v4101 = vmul.f32 %v3916, %v3717
        %v4102 = vmul.f32 %v3921, %v3718
        %v4103 = vmul.f32 %v3926, %v3719
        %v4104 = vmul.f32 %v3931, %v3720
        %v4105 = vmul.f32 %v3936, %v3721
        %v4106 = vmul.f32 %v3941, %v3722
        %v4107 = vmul.f32 %v3946, %v3723
        %v4108 = vmul.f32 %v3951, %v3724
        %v4109 = vmul.f32 %v3956, %v3725
        %v4110 = vmul.f32 %v3961, %v3726
        %v4111 = vmul.f32 %v3966, %v3727
        %v4112 = vmul.f32 %v3971, %v3728
        %v4113 = vmul.f32 %v3976, %v3729
        %v4114 = vmul.f32 %v3981, %v3730
        %v4115 = vmul.f32 %v3986, %v3731
        %v4116 = vmul.f32 %v3991, %v3732
        %v4117 = vmul.f32 %v3996, %v3733
        %v4118 = vmul.f32 %v4001, %v3734
        %v4119 = vmul.f32 %v4006, %v3735
        %v4120 = vmul.f32 %v4011, %v3736
        %v4121 = vmul.f32 %v4016, %v3737
        %v4122 = vmul.f32 %v4021, %v3738
        %v4123 = vmul.f32 %v4026, %v3739
        %v4124 = vmul.f32 %v4031, %v3740
        %v4125 = vmul.f32 %v4036, %v3741
        %v4126 = vmul.f32 %v4041, %v3742
        %v4127 = vmul.f32 %v4046, %v3743
        %v4128 = vmul.f32 %v4051, %v3744
        %v4129 = vmul.f32 %v4056, %v3745
        %v4130 = vmul.f32 %v4061, %v3746
        %v4131 = vmul.f32 %v4066, %v3747
        %v4132 = vpack.c.bf16 %v3172, %v3172
        %v4133 = vpack.c.bf16 %v3174, %v3174
        %v4134 = vpack.c.bf16 %v3176, %v3176
        %v4135 = vpack.c.bf16 %v3178, %v3178
        %v4136 = vpack.c.bf16 %v3180, %v3180
        %v4137 = vpack.c.bf16 %v3182, %v3182
        %v4138 = vpack.c.bf16 %v3184, %v3184
        %v4139 = vpack.c.bf16 %v3186, %v3186
        %v4140 = vpack.c.bf16 %v3188, %v3188
        %v4141 = vpack.c.bf16 %v3190, %v3190
        %v4142 = vpack.c.bf16 %v3192, %v3192
        %v4143 = vpack.c.bf16 %v3194, %v3194
        %v4144 = vpack.c.bf16 %v3196, %v3196
        %v4145 = vpack.c.bf16 %v3198, %v3198
        %v4146 = vpack.c.bf16 %v3200, %v3200
        %v4147 = vpack.c.bf16 %v3202, %v3202
        %v4148 = vpack.c.bf16 %v3204, %v3204
        %v4149 = vpack.c.bf16 %v3206, %v3206
        %v4150 = vpack.c.bf16 %v3208, %v3208
        %v4151 = vpack.c.bf16 %v3210, %v3210
        %v4152 = vpack.c.bf16 %v3212, %v3212
        %v4153 = vpack.c.bf16 %v3214, %v3214
        %v4154 = vpack.c.bf16 %v3216, %v3216
        %v4155 = vpack.c.bf16 %v3218, %v3218
        %v4156 = vpack.c.bf16 %v3220, %v3220
        %v4157 = vpack.c.bf16 %v3222, %v3222
        %v4158 = vpack.c.bf16 %v3224, %v3224
        %v4159 = vpack.c.bf16 %v3226, %v3226
        %v4160 = vpack.c.bf16 %v3228, %v3228
        %v4161 = vpack.c.bf16 %v3230, %v3230
        %v4162 = vpack.c.bf16 %v3232, %v3232
        %v4163 = vpack.c.bf16 %v3234, %v3234
        %v4164 = vpack.c.bf16 %v3236, %v3236
        %v4165 = vpack.c.bf16 %v3238, %v3238
        %v4166 = vpack.c.bf16 %v3240, %v3240
        %v4167 = vpack.c.bf16 %v3242, %v3242
        %v4168 = vpack.c.bf16 %v3244, %v3244
        %v4169 = vpack.c.bf16 %v3246, %v3246
        %v4170 = vpack.c.bf16 %v3248, %v3248
        %v4171 = vpack.c.bf16 %v3250, %v3250
        %v4172 = vpack.c.bf16 %v3252, %v3252
        %v4173 = vpack.c.bf16 %v3254, %v3254
        %v4174 = vpack.c.bf16 %v3256, %v3256
        %v4175 = vpack.c.bf16 %v3258, %v3258
        %v4176 = vpack.c.bf16 %v3260, %v3260
        %v4177 = vpack.c.bf16 %v3262, %v3262
        %v4178 = vpack.c.bf16 %v3264, %v3264
        %v4179 = vpack.c.bf16 %v3266, %v3266
        %v4180 = vpack.c.bf16 %v3268, %v3268
        %v4181 = vpack.c.bf16 %v3270, %v3270
        %v4182 = vpack.c.bf16 %v3272, %v3272
        %v4183 = vpack.c.bf16 %v3274, %v3274
        %v4184 = vpack.c.bf16 %v3276, %v3276
        %v4185 = vpack.c.bf16 %v3278, %v3278
        %v4186 = vpack.c.bf16 %v3280, %v3280
        %v4187 = vpack.c.bf16 %v3282, %v3282
        %v4188 = vpack.c.bf16 %v3284, %v3284
        %v4189 = vpack.c.bf16 %v3286, %v3286
        %v4190 = vpack.c.bf16 %v3288, %v3288
        %v4191 = vpack.c.bf16 %v3290, %v3290
        %v4192 = vpack.c.bf16 %v3292, %v3292
        %v4193 = vpack.c.bf16 %v3294, %v3294
        %v4194 = vpack.c.bf16 %v3296, %v3296
        %v4195 = vpack.c.bf16 %v3298, %v3298
        %v4212 = vunpack.c.l.b16 %v4132
        %v4213 = vunpack.c.l.b16 %v4133
        %v4214 = vunpack.c.l.b16 %v4134
        %v4215 = vunpack.c.l.b16 %v4135
        %v4216 = vunpack.c.l.b16 %v4136
        %v4217 = vunpack.c.l.b16 %v4137
        %v4218 = vunpack.c.l.b16 %v4138
        %v4219 = vunpack.c.l.b16 %v4139
        %v4220 = vunpack.c.l.b16 %v4140
        %v4221 = vunpack.c.l.b16 %v4141
        %v4222 = vunpack.c.l.b16 %v4142
        %v4223 = vunpack.c.l.b16 %v4143
        %v4224 = vunpack.c.l.b16 %v4144
        %v4225 = vunpack.c.l.b16 %v4145
        %v4226 = vunpack.c.l.b16 %v4146
        %v4227 = vunpack.c.l.b16 %v4147
        %v4228 = vpack.c.b16 %v4213, %v4212
        %v4229 = vpack.c.b16 %v4215, %v4214
        %v4230 = vpack.c.b16 %v4217, %v4216
        %v4231 = vpack.c.b16 %v4219, %v4218
        %v4232 = vpack.c.b16 %v4221, %v4220
        %v4233 = vpack.c.b16 %v4223, %v4222
        %v4234 = vpack.c.b16 %v4225, %v4224
        %v4235 = vpack.c.b16 %v4227, %v4226
        %v4260 = vunpack.c.l.b16 %v1566
        %v4261 = vunpack.c.l.b16 %v1567
        %v4262 = vunpack.c.l.b16 %v1568
        %v4263 = vunpack.c.l.b16 %v1569
        %v4264 = vunpack.c.l.b16 %v1570
        %v4265 = vunpack.c.l.b16 %v1571
        %v4266 = vunpack.c.l.b16 %v1572
        %v4267 = vunpack.c.l.b16 %v1573
        %v4268 = vunpack.c.l.b16 %v1574
        %v4269 = vunpack.c.l.b16 %v1575
        %v4270 = vunpack.c.l.b16 %v1576
        %v4271 = vunpack.c.l.b16 %v1577
        %v4272 = vunpack.c.l.b16 %v1578
        %v4273 = vunpack.c.l.b16 %v1579
        %v4274 = vunpack.c.l.b16 %v1580
        %v4275 = vunpack.c.l.b16 %v1581
        %v4276 = vpack.c.b16 %v4261, %v4260
        %v4277 = vpack.c.b16 %v4263, %v4262
        %v4278 = vpack.c.b16 %v4265, %v4264
        %v4279 = vpack.c.b16 %v4267, %v4266
        %v4280 = vpack.c.b16 %v4269, %v4268
        %v4281 = vpack.c.b16 %v4271, %v4270
        %v4282 = vpack.c.b16 %v4273, %v4272
        %v4283 = vpack.c.b16 %v4275, %v4274
        %4292 = vmatpush.bf16.msra.mxu0 %v4283
        %4293 = vmatpush.bf16.msra.mxu0 %v4282
        %4294 = vmatpush.bf16.msra.mxu0 %v4281
        %4295 = vmatpush.bf16.msra.mxu0 %v4280
        %4296 = vmatpush.bf16.msra.mxu0 %v4279
        %4297 = vmatpush.bf16.msra.mxu0 %v4278
        %4298 = vmatpush.bf16.msra.mxu0 %v4277
        %4299 = vmatpush.bf16.msra.mxu0 %v4276
        %4300 = vmatmul.bf16.gmra.mxu0 %v4228
        %v4301 = vpop.f32.mrf.mxu0
        %v4302 = vadd.f32 0.0, %v4301
        %v4303 = vpop.f32.mrf.mxu0
        %v4304 = vadd.f32 0.0, %v4303
        %4305 = vmatmul.bf16.gmra.mxu0 %v4229
        %v4306 = vpop.f32.mrf.mxu0
        %v4307 = vadd.f32 0.0, %v4306
        %v4308 = vpop.f32.mrf.mxu0
        %v4309 = vadd.f32 0.0, %v4308
        %4310 = vmatmul.bf16.gmra.mxu0 %v4230
        %v4311 = vpop.f32.mrf.mxu0
        %v4312 = vadd.f32 0.0, %v4311
        %v4313 = vpop.f32.mrf.mxu0
        %v4314 = vadd.f32 0.0, %v4313
        %4315 = vmatmul.bf16.gmra.mxu0 %v4231
        %v4316 = vpop.f32.mrf.mxu0
        %v4317 = vadd.f32 0.0, %v4316
        %v4318 = vpop.f32.mrf.mxu0
        %v4319 = vadd.f32 0.0, %v4318
        %4320 = vmatmul.bf16.gmra.mxu0 %v4232
        %v4321 = vpop.f32.mrf.mxu0
        %v4322 = vadd.f32 0.0, %v4321
        %v4323 = vpop.f32.mrf.mxu0
        %v4324 = vadd.f32 0.0, %v4323
        %4325 = vmatmul.bf16.gmra.mxu0 %v4233
        %v4326 = vpop.f32.mrf.mxu0
        %v4327 = vadd.f32 0.0, %v4326
        %v4328 = vpop.f32.mrf.mxu0
        %v4329 = vadd.f32 0.0, %v4328
        %4330 = vmatmul.bf16.gmra.mxu0 %v4234
        %v4331 = vpop.f32.mrf.mxu0
        %v4332 = vadd.f32 0.0, %v4331
        %v4333 = vpop.f32.mrf.mxu0
        %v4334 = vadd.f32 0.0, %v4333
        %4335 = vmatmul.bf16.gmra.mxu0 %v4235
        %v4336 = vpop.f32.mrf.mxu0
        %v4337 = vadd.f32 0.0, %v4336
        %v4338 = vpop.f32.mrf.mxu0
        %v4339 = vadd.f32 0.0, %v4338
        %4340 = vdwg.mxu0
        %v4357 = vunpack.c.l.b16 %v4148
        %v4358 = vunpack.c.l.b16 %v4149
        %v4359 = vunpack.c.l.b16 %v4150
        %v4360 = vunpack.c.l.b16 %v4151
        %v4361 = vunpack.c.l.b16 %v4152
        %v4362 = vunpack.c.l.b16 %v4153
        %v4363 = vunpack.c.l.b16 %v4154
        %v4364 = vunpack.c.l.b16 %v4155
        %v4365 = vunpack.c.l.b16 %v4156
        %v4366 = vunpack.c.l.b16 %v4157
        %v4367 = vunpack.c.l.b16 %v4158
        %v4368 = vunpack.c.l.b16 %v4159
        %v4369 = vunpack.c.l.b16 %v4160
        %v4370 = vunpack.c.l.b16 %v4161
        %v4371 = vunpack.c.l.b16 %v4162
        %v4372 = vunpack.c.l.b16 %v4163
        %v4373 = vpack.c.b16 %v4358, %v4357
        %v4374 = vpack.c.b16 %v4360, %v4359
        %v4375 = vpack.c.b16 %v4362, %v4361
        %v4376 = vpack.c.b16 %v4364, %v4363
        %v4377 = vpack.c.b16 %v4366, %v4365
        %v4378 = vpack.c.b16 %v4368, %v4367
        %v4379 = vpack.c.b16 %v4370, %v4369
        %v4380 = vpack.c.b16 %v4372, %v4371
        %v4405 = vunpack.c.l.b16 %v1582
        %v4406 = vunpack.c.l.b16 %v1583
        %v4407 = vunpack.c.l.b16 %v1584
        %v4408 = vunpack.c.l.b16 %v1585
        %v4409 = vunpack.c.l.b16 %v1586
        %v4410 = vunpack.c.l.b16 %v1587
        %v4411 = vunpack.c.l.b16 %v1588
        %v4412 = vunpack.c.l.b16 %v1589
        %v4413 = vunpack.c.l.b16 %v1590
        %v4414 = vunpack.c.l.b16 %v1591
        %v4415 = vunpack.c.l.b16 %v1592
        %v4416 = vunpack.c.l.b16 %v1593
        %v4417 = vunpack.c.l.b16 %v1594
        %v4418 = vunpack.c.l.b16 %v1595
        %v4419 = vunpack.c.l.b16 %v1596
        %v4420 = vunpack.c.l.b16 %v1597
        %v4421 = vpack.c.b16 %v4406, %v4405
        %v4422 = vpack.c.b16 %v4408, %v4407
        %v4423 = vpack.c.b16 %v4410, %v4409
        %v4424 = vpack.c.b16 %v4412, %v4411
        %v4425 = vpack.c.b16 %v4414, %v4413
        %v4426 = vpack.c.b16 %v4416, %v4415
        %v4427 = vpack.c.b16 %v4418, %v4417
        %v4428 = vpack.c.b16 %v4420, %v4419
        %4437 = vmatpush.bf16.msra.mxu0 %v4428
        %4438 = vmatpush.bf16.msra.mxu0 %v4427
        %4439 = vmatpush.bf16.msra.mxu0 %v4426
        %4440 = vmatpush.bf16.msra.mxu0 %v4425
        %4441 = vmatpush.bf16.msra.mxu0 %v4424
        %4442 = vmatpush.bf16.msra.mxu0 %v4423
        %4443 = vmatpush.bf16.msra.mxu0 %v4422
        %4444 = vmatpush.bf16.msra.mxu0 %v4421
        %4445 = vmatmul.bf16.gmra.mxu0 %v4373
        %v4446 = vpop.f32.mrf.mxu0
        %v4447 = vadd.f32 0.0, %v4446
        %v4448 = vpop.f32.mrf.mxu0
        %v4449 = vadd.f32 0.0, %v4448
        %4450 = vmatmul.bf16.gmra.mxu0 %v4374
        %v4451 = vpop.f32.mrf.mxu0
        %v4452 = vadd.f32 0.0, %v4451
        %v4453 = vpop.f32.mrf.mxu0
        %v4454 = vadd.f32 0.0, %v4453
        %4455 = vmatmul.bf16.gmra.mxu0 %v4375
        %v4456 = vpop.f32.mrf.mxu0
        %v4457 = vadd.f32 0.0, %v4456
        %v4458 = vpop.f32.mrf.mxu0
        %v4459 = vadd.f32 0.0, %v4458
        %4460 = vmatmul.bf16.gmra.mxu0 %v4376
        %v4461 = vpop.f32.mrf.mxu0
        %v4462 = vadd.f32 0.0, %v4461
        %v4463 = vpop.f32.mrf.mxu0
        %v4464 = vadd.f32 0.0, %v4463
        %4465 = vmatmul.bf16.gmra.mxu0 %v4377
        %v4466 = vpop.f32.mrf.mxu0
        %v4467 = vadd.f32 0.0, %v4466
        %v4468 = vpop.f32.mrf.mxu0
        %v4469 = vadd.f32 0.0, %v4468
        %4470 = vmatmul.bf16.gmra.mxu0 %v4378
        %v4471 = vpop.f32.mrf.mxu0
        %v4472 = vadd.f32 0.0, %v4471
        %v4473 = vpop.f32.mrf.mxu0
        %v4474 = vadd.f32 0.0, %v4473
        %4475 = vmatmul.bf16.gmra.mxu0 %v4379
        %v4476 = vpop.f32.mrf.mxu0
        %v4477 = vadd.f32 0.0, %v4476
        %v4478 = vpop.f32.mrf.mxu0
        %v4479 = vadd.f32 0.0, %v4478
        %4480 = vmatmul.bf16.gmra.mxu0 %v4380
        %v4481 = vpop.f32.mrf.mxu0
        %v4482 = vadd.f32 0.0, %v4481
        %v4483 = vpop.f32.mrf.mxu0
        %v4484 = vadd.f32 0.0, %v4483
        %4485 = vdwg.mxu0
        %v4502 = vunpack.c.l.b16 %v4164
        %v4503 = vunpack.c.l.b16 %v4165
        %v4504 = vunpack.c.l.b16 %v4166
        %v4505 = vunpack.c.l.b16 %v4167
        %v4506 = vunpack.c.l.b16 %v4168
        %v4507 = vunpack.c.l.b16 %v4169
        %v4508 = vunpack.c.l.b16 %v4170
        %v4509 = vunpack.c.l.b16 %v4171
        %v4510 = vunpack.c.l.b16 %v4172
        %v4511 = vunpack.c.l.b16 %v4173
        %v4512 = vunpack.c.l.b16 %v4174
        %v4513 = vunpack.c.l.b16 %v4175
        %v4514 = vunpack.c.l.b16 %v4176
        %v4515 = vunpack.c.l.b16 %v4177
        %v4516 = vunpack.c.l.b16 %v4178
        %v4517 = vunpack.c.l.b16 %v4179
        %v4518 = vpack.c.b16 %v4503, %v4502
        %v4519 = vpack.c.b16 %v4505, %v4504
        %v4520 = vpack.c.b16 %v4507, %v4506
        %v4521 = vpack.c.b16 %v4509, %v4508
        %v4522 = vpack.c.b16 %v4511, %v4510
        %v4523 = vpack.c.b16 %v4513, %v4512
        %v4524 = vpack.c.b16 %v4515, %v4514
        %v4525 = vpack.c.b16 %v4517, %v4516
        %v4550 = vunpack.c.l.b16 %v1598
        %v4551 = vunpack.c.l.b16 %v1599
        %v4552 = vunpack.c.l.b16 %v1600
        %v4553 = vunpack.c.l.b16 %v1601
        %v4554 = vunpack.c.l.b16 %v1602
        %v4555 = vunpack.c.l.b16 %v1603
        %v4556 = vunpack.c.l.b16 %v1604
        %v4557 = vunpack.c.l.b16 %v1605
        %v4558 = vunpack.c.l.b16 %v1606
        %v4559 = vunpack.c.l.b16 %v1607
        %v4560 = vunpack.c.l.b16 %v1608
        %v4561 = vunpack.c.l.b16 %v1609
        %v4562 = vunpack.c.l.b16 %v1610
        %v4563 = vunpack.c.l.b16 %v1611
        %v4564 = vunpack.c.l.b16 %v1612
        %v4565 = vunpack.c.l.b16 %v1613
        %v4566 = vpack.c.b16 %v4551, %v4550
        %v4567 = vpack.c.b16 %v4553, %v4552
        %v4568 = vpack.c.b16 %v4555, %v4554
        %v4569 = vpack.c.b16 %v4557, %v4556
        %v4570 = vpack.c.b16 %v4559, %v4558
        %v4571 = vpack.c.b16 %v4561, %v4560
        %v4572 = vpack.c.b16 %v4563, %v4562
        %v4573 = vpack.c.b16 %v4565, %v4564
        %4582 = vmatpush.bf16.msra.mxu0 %v4573
        %4583 = vmatpush.bf16.msra.mxu0 %v4572
        %4584 = vmatpush.bf16.msra.mxu0 %v4571
        %4585 = vmatpush.bf16.msra.mxu0 %v4570
        %4586 = vmatpush.bf16.msra.mxu0 %v4569
        %4587 = vmatpush.bf16.msra.mxu0 %v4568
        %4588 = vmatpush.bf16.msra.mxu0 %v4567
        %4589 = vmatpush.bf16.msra.mxu0 %v4566
        %4590 = vmatmul.bf16.gmra.mxu0 %v4518
        %v4591 = vpop.f32.mrf.mxu0
        %v4592 = vadd.f32 0.0, %v4591
        %v4593 = vpop.f32.mrf.mxu0
        %v4594 = vadd.f32 0.0, %v4593
        %4595 = vmatmul.bf16.gmra.mxu0 %v4519
        %v4596 = vpop.f32.mrf.mxu0
        %v4597 = vadd.f32 0.0, %v4596
        %v4598 = vpop.f32.mrf.mxu0
        %v4599 = vadd.f32 0.0, %v4598
        %4600 = vmatmul.bf16.gmra.mxu0 %v4520
        %v4601 = vpop.f32.mrf.mxu0
        %v4602 = vadd.f32 0.0, %v4601
        %v4603 = vpop.f32.mrf.mxu0
        %v4604 = vadd.f32 0.0, %v4603
        %4605 = vmatmul.bf16.gmra.mxu0 %v4521
        %v4606 = vpop.f32.mrf.mxu0
        %v4607 = vadd.f32 0.0, %v4606
        %v4608 = vpop.f32.mrf.mxu0
        %v4609 = vadd.f32 0.0, %v4608
        %4610 = vmatmul.bf16.gmra.mxu0 %v4522
        %v4611 = vpop.f32.mrf.mxu0
        %v4612 = vadd.f32 0.0, %v4611
        %v4613 = vpop.f32.mrf.mxu0
        %v4614 = vadd.f32 0.0, %v4613
        %4615 = vmatmul.bf16.gmra.mxu0 %v4523
        %v4616 = vpop.f32.mrf.mxu0
        %v4617 = vadd.f32 0.0, %v4616
        %v4618 = vpop.f32.mrf.mxu0
        %v4619 = vadd.f32 0.0, %v4618
        %4620 = vmatmul.bf16.gmra.mxu0 %v4524
        %v4621 = vpop.f32.mrf.mxu0
        %v4622 = vadd.f32 0.0, %v4621
        %v4623 = vpop.f32.mrf.mxu0
        %v4624 = vadd.f32 0.0, %v4623
        %4625 = vmatmul.bf16.gmra.mxu0 %v4525
        %v4626 = vpop.f32.mrf.mxu0
        %v4627 = vadd.f32 0.0, %v4626
        %v4628 = vpop.f32.mrf.mxu0
        %v4629 = vadd.f32 0.0, %v4628
        %4630 = vdwg.mxu0
        %v4647 = vunpack.c.l.b16 %v4180
        %v4648 = vunpack.c.l.b16 %v4181
        %v4649 = vunpack.c.l.b16 %v4182
        %v4650 = vunpack.c.l.b16 %v4183
        %v4651 = vunpack.c.l.b16 %v4184
        %v4652 = vunpack.c.l.b16 %v4185
        %v4653 = vunpack.c.l.b16 %v4186
        %v4654 = vunpack.c.l.b16 %v4187
        %v4655 = vunpack.c.l.b16 %v4188
        %v4656 = vunpack.c.l.b16 %v4189
        %v4657 = vunpack.c.l.b16 %v4190
        %v4658 = vunpack.c.l.b16 %v4191
        %v4659 = vunpack.c.l.b16 %v4192
        %v4660 = vunpack.c.l.b16 %v4193
        %v4661 = vunpack.c.l.b16 %v4194
        %v4662 = vunpack.c.l.b16 %v4195
        %v4663 = vpack.c.b16 %v4648, %v4647
        %v4664 = vpack.c.b16 %v4650, %v4649
        %v4665 = vpack.c.b16 %v4652, %v4651
        %v4666 = vpack.c.b16 %v4654, %v4653
        %v4667 = vpack.c.b16 %v4656, %v4655
        %v4668 = vpack.c.b16 %v4658, %v4657
        %v4669 = vpack.c.b16 %v4660, %v4659
        %v4670 = vpack.c.b16 %v4662, %v4661
        %v4695 = vunpack.c.l.b16 %v1614
        %v4696 = vunpack.c.l.b16 %v1615
        %v4697 = vunpack.c.l.b16 %v1616
        %v4698 = vunpack.c.l.b16 %v1617
        %v4699 = vunpack.c.l.b16 %v1618
        %v4700 = vunpack.c.l.b16 %v1619
        %v4701 = vunpack.c.l.b16 %v1620
        %v4702 = vunpack.c.l.b16 %v1621
        %v4703 = vunpack.c.l.b16 %v1622
        %v4704 = vunpack.c.l.b16 %v1623
        %v4705 = vunpack.c.l.b16 %v1624
        %v4706 = vunpack.c.l.b16 %v1625
        %v4707 = vunpack.c.l.b16 %v1626
        %v4708 = vunpack.c.l.b16 %v1627
        %v4709 = vunpack.c.l.b16 %v1628
        %v4710 = vunpack.c.l.b16 %v1629
        %v4711 = vpack.c.b16 %v4696, %v4695
        %v4712 = vpack.c.b16 %v4698, %v4697
        %v4713 = vpack.c.b16 %v4700, %v4699
        %v4714 = vpack.c.b16 %v4702, %v4701
        %v4715 = vpack.c.b16 %v4704, %v4703
        %v4716 = vpack.c.b16 %v4706, %v4705
        %v4717 = vpack.c.b16 %v4708, %v4707
        %v4718 = vpack.c.b16 %v4710, %v4709
        %4727 = vmatpush.bf16.msra.mxu0 %v4718
        %4728 = vmatpush.bf16.msra.mxu0 %v4717
        %4729 = vmatpush.bf16.msra.mxu0 %v4716
        %4730 = vmatpush.bf16.msra.mxu0 %v4715
        %4731 = vmatpush.bf16.msra.mxu0 %v4714
        %4732 = vmatpush.bf16.msra.mxu0 %v4713
        %4733 = vmatpush.bf16.msra.mxu0 %v4712
        %4734 = vmatpush.bf16.msra.mxu0 %v4711
        %4735 = vmatmul.bf16.gmra.mxu0 %v4663
        %v4736 = vpop.f32.mrf.mxu0
        %v4737 = vadd.f32 0.0, %v4736
        %v4738 = vpop.f32.mrf.mxu0
        %v4739 = vadd.f32 0.0, %v4738
        %4740 = vmatmul.bf16.gmra.mxu0 %v4664
        %v4741 = vpop.f32.mrf.mxu0
        %v4742 = vadd.f32 0.0, %v4741
        %v4743 = vpop.f32.mrf.mxu0
        %v4744 = vadd.f32 0.0, %v4743
        %4745 = vmatmul.bf16.gmra.mxu0 %v4665
        %v4746 = vpop.f32.mrf.mxu0
        %v4747 = vadd.f32 0.0, %v4746
        %v4748 = vpop.f32.mrf.mxu0
        %v4749 = vadd.f32 0.0, %v4748
        %4750 = vmatmul.bf16.gmra.mxu0 %v4666
        %v4751 = vpop.f32.mrf.mxu0
        %v4752 = vadd.f32 0.0, %v4751
        %v4753 = vpop.f32.mrf.mxu0
        %v4754 = vadd.f32 0.0, %v4753
        %4755 = vmatmul.bf16.gmra.mxu0 %v4667
        %v4756 = vpop.f32.mrf.mxu0
        %v4757 = vadd.f32 0.0, %v4756
        %v4758 = vpop.f32.mrf.mxu0
        %v4759 = vadd.f32 0.0, %v4758
        %4760 = vmatmul.bf16.gmra.mxu0 %v4668
        %v4761 = vpop.f32.mrf.mxu0
        %v4762 = vadd.f32 0.0, %v4761
        %v4763 = vpop.f32.mrf.mxu0
        %v4764 = vadd.f32 0.0, %v4763
        %4765 = vmatmul.bf16.gmra.mxu0 %v4669
        %v4766 = vpop.f32.mrf.mxu0
        %v4767 = vadd.f32 0.0, %v4766
        %v4768 = vpop.f32.mrf.mxu0
        %v4769 = vadd.f32 0.0, %v4768
        %4770 = vmatmul.bf16.gmra.mxu0 %v4670
        %v4771 = vpop.f32.mrf.mxu0
        %v4772 = vadd.f32 0.0, %v4771
        %v4773 = vpop.f32.mrf.mxu0
        %v4774 = vadd.f32 0.0, %v4773
        %4775 = vdwg.mxu0
        %v4776 = vadd.f32 %v4068, %v4302
        %v4777 = vadd.f32 %v4069, %v4304
        %v4778 = vadd.f32 %v4070, %v4307
        %v4779 = vadd.f32 %v4071, %v4309
        %v4780 = vadd.f32 %v4072, %v4312
        %v4781 = vadd.f32 %v4073, %v4314
        %v4782 = vadd.f32 %v4074, %v4317
        %v4783 = vadd.f32 %v4075, %v4319
        %v4784 = vadd.f32 %v4076, %v4322
        %v4785 = vadd.f32 %v4077, %v4324
        %v4786 = vadd.f32 %v4078, %v4327
        %v4787 = vadd.f32 %v4079, %v4329
        %v4788 = vadd.f32 %v4080, %v4332
        %v4789 = vadd.f32 %v4081, %v4334
        %v4790 = vadd.f32 %v4082, %v4337
        %v4791 = vadd.f32 %v4083, %v4339
        %v4792 = vadd.f32 %v4084, %v4447
        %v4793 = vadd.f32 %v4085, %v4449
        %v4794 = vadd.f32 %v4086, %v4452
        %v4795 = vadd.f32 %v4087, %v4454
        %v4796 = vadd.f32 %v4088, %v4457
        %v4797 = vadd.f32 %v4089, %v4459
        %v4798 = vadd.f32 %v4090, %v4462
        %v4799 = vadd.f32 %v4091, %v4464
        %v4800 = vadd.f32 %v4092, %v4467
        %v4801 = vadd.f32 %v4093, %v4469
        %v4802 = vadd.f32 %v4094, %v4472
        %v4803 = vadd.f32 %v4095, %v4474
        %v4804 = vadd.f32 %v4096, %v4477
        %v4805 = vadd.f32 %v4097, %v4479
        %v4806 = vadd.f32 %v4098, %v4482
        %v4807 = vadd.f32 %v4099, %v4484
        %v4808 = vadd.f32 %v4100, %v4592
        %v4809 = vadd.f32 %v4101, %v4594
        %v4810 = vadd.f32 %v4102, %v4597
        %v4811 = vadd.f32 %v4103, %v4599
        %v4812 = vadd.f32 %v4104, %v4602
        %v4813 = vadd.f32 %v4105, %v4604
        %v4814 = vadd.f32 %v4106, %v4607
        %v4815 = vadd.f32 %v4107, %v4609
        %v4816 = vadd.f32 %v4108, %v4612
        %v4817 = vadd.f32 %v4109, %v4614
        %v4818 = vadd.f32 %v4110, %v4617
        %v4819 = vadd.f32 %v4111, %v4619
        %v4820 = vadd.f32 %v4112, %v4622
        %v4821 = vadd.f32 %v4113, %v4624
        %v4822 = vadd.f32 %v4114, %v4627
        %v4823 = vadd.f32 %v4115, %v4629
        %v4824 = vadd.f32 %v4116, %v4737
        %v4825 = vadd.f32 %v4117, %v4739
        %v4826 = vadd.f32 %v4118, %v4742
        %v4827 = vadd.f32 %v4119, %v4744
        %v4828 = vadd.f32 %v4120, %v4747
        %v4829 = vadd.f32 %v4121, %v4749
        %v4830 = vadd.f32 %v4122, %v4752
        %v4831 = vadd.f32 %v4123, %v4754
        %v4832 = vadd.f32 %v4124, %v4757
        %v4833 = vadd.f32 %v4125, %v4759
        %v4834 = vadd.f32 %v4126, %v4762
        %v4835 = vadd.f32 %v4127, %v4764
        %v4836 = vadd.f32 %v4128, %v4767
        %v4837 = vadd.f32 %v4129, %v4769
        %v4838 = vadd.f32 %v4130, %v4772
        %v4839 = vadd.f32 %v4131, %v4774
        %4840 = vst.msk [vmem:[#allocation4] sm:$0xff] %vm1710, %v4776
        %4841 = vst.msk [vmem:[#allocation4 + $0x8] sm:$0xff] %vm1710, %v4777
        %4842 = vst.msk [vmem:[#allocation4 + $0x10] sm:$0xff] %vm1710, %v4778
        %4843 = vst.msk [vmem:[#allocation4 + $0x18] sm:$0xff] %vm1710, %v4779
        %4844 = vst.msk [vmem:[#allocation4 + $0x20] sm:$0xff] %vm1710, %v4780
        %4845 = vst.msk [vmem:[#allocation4 + $0x28] sm:$0xff] %vm1710, %v4781
        %4846 = vst.msk [vmem:[#allocation4 + $0x30] sm:$0xff] %vm1710, %v4782
        %4847 = vst.msk [vmem:[#allocation4 + $0x38] sm:$0xff] %vm1710, %v4783
        %4848 = vst.msk [vmem:[#allocation4 + $0x40] sm:$0xff] %vm1710, %v4784
        %4849 = vst.msk [vmem:[#allocation4 + $0x48] sm:$0xff] %vm1710, %v4785
        %4850 = vst.msk [vmem:[#allocation4 + $0x50] sm:$0xff] %vm1710, %v4786
        %4851 = vst.msk [vmem:[#allocation4 + $0x58] sm:$0xff] %vm1710, %v4787
        %4852 = vst.msk [vmem:[#allocation4 + $0x60] sm:$0xff] %vm1710, %v4788
        %4853 = vst.msk [vmem:[#allocation4 + $0x68] sm:$0xff] %vm1710, %v4789
        %4854 = vst.msk [vmem:[#allocation4 + $0x70] sm:$0xff] %vm1710, %v4790
        %4855 = vst.msk [vmem:[#allocation4 + $0x78] sm:$0xff] %vm1710, %v4791
        %4856 = vst.msk [vmem:[#allocation4 + $0x80] sm:$0xff] %vm1710, %v4792
        %4857 = vst.msk [vmem:[#allocation4 + $0x88] sm:$0xff] %vm1710, %v4793
        %4858 = vst.msk [vmem:[#allocation4 + $0x90] sm:$0xff] %vm1710, %v4794
        %4859 = vst.msk [vmem:[#allocation4 + $0x98] sm:$0xff] %vm1710, %v4795
        %4860 = vst.msk [vmem:[#allocation4 + $0xa0] sm:$0xff] %vm1710, %v4796
        %4861 = vst.msk [vmem:[#allocation4 + $0xa8] sm:$0xff] %vm1710, %v4797
        %4862 = vst.msk [vmem:[#allocation4 + $0xb0] sm:$0xff] %vm1710, %v4798
        %4863 = vst.msk [vmem:[#allocation4 + $0xb8] sm:$0xff] %vm1710, %v4799
        %4864 = vst.msk [vmem:[#allocation4 + $0xc0] sm:$0xff] %vm1710, %v4800
        %4865 = vst.msk [vmem:[#allocation4 + $0xc8] sm:$0xff] %vm1710, %v4801
        %4866 = vst.msk [vmem:[#allocation4 + $0xd0] sm:$0xff] %vm1710, %v4802
        %4867 = vst.msk [vmem:[#allocation4 + $0xd8] sm:$0xff] %vm1710, %v4803
        %4868 = vst.msk [vmem:[#allocation4 + $0xe0] sm:$0xff] %vm1710, %v4804
        %4869 = vst.msk [vmem:[#allocation4 + $0xe8] sm:$0xff] %vm1710, %v4805
        %4870 = vst.msk [vmem:[#allocation4 + $0xf0] sm:$0xff] %vm1710, %v4806
        %4871 = vst.msk [vmem:[#allocation4 + $0xf8] sm:$0xff] %vm1710, %v4807
        %4872 = vst.msk [vmem:[#allocation4 + $0x100] sm:$0xff] %vm1710, %v4808
        %4873 = vst.msk [vmem:[#allocation4 + $0x108] sm:$0xff] %vm1710, %v4809
        %4874 = vst.msk [vmem:[#allocation4 + $0x110] sm:$0xff] %vm1710, %v4810
        %4875 = vst.msk [vmem:[#allocation4 + $0x118] sm:$0xff] %vm1710, %v4811
        %4876 = vst.msk [vmem:[#allocation4 + $0x120] sm:$0xff] %vm1710, %v4812
        %4877 = vst.msk [vmem:[#allocation4 + $0x128] sm:$0xff] %vm1710, %v4813
        %4878 = vst.msk [vmem:[#allocation4 + $0x130] sm:$0xff] %vm1710, %v4814
        %4879 = vst.msk [vmem:[#allocation4 + $0x138] sm:$0xff] %vm1710, %v4815
        %4880 = vst.msk [vmem:[#allocation4 + $0x140] sm:$0xff] %vm1710, %v4816
        %4881 = vst.msk [vmem:[#allocation4 + $0x148] sm:$0xff] %vm1710, %v4817
        %4882 = vst.msk [vmem:[#allocation4 + $0x150] sm:$0xff] %vm1710, %v4818
        %4883 = vst.msk [vmem:[#allocation4 + $0x158] sm:$0xff] %vm1710, %v4819
        %4884 = vst.msk [vmem:[#allocation4 + $0x160] sm:$0xff] %vm1710, %v4820
        %4885 = vst.msk [vmem:[#allocation4 + $0x168] sm:$0xff] %vm1710, %v4821
        %4886 = vst.msk [vmem:[#allocation4 + $0x170] sm:$0xff] %vm1710, %v4822
        %4887 = vst.msk [vmem:[#allocation4 + $0x178] sm:$0xff] %vm1710, %v4823
        %4888 = vst.msk [vmem:[#allocation4 + $0x180] sm:$0xff] %vm1710, %v4824
        %4889 = vst.msk [vmem:[#allocation4 + $0x188] sm:$0xff] %vm1710, %v4825
        %4890 = vst.msk [vmem:[#allocation4 + $0x190] sm:$0xff] %vm1710, %v4826
        %4891 = vst.msk [vmem:[#allocation4 + $0x198] sm:$0xff] %vm1710, %v4827
        %4892 = vst.msk [vmem:[#allocation4 + $0x1a0] sm:$0xff] %vm1710, %v4828
        %4893 = vst.msk [vmem:[#allocation4 + $0x1a8] sm:$0xff] %vm1710, %v4829
        %4894 = vst.msk [vmem:[#allocation4 + $0x1b0] sm:$0xff] %vm1710, %v4830
        %4895 = vst.msk [vmem:[#allocation4 + $0x1b8] sm:$0xff] %vm1710, %v4831
        %4896 = vst.msk [vmem:[#allocation4 + $0x1c0] sm:$0xff] %vm1710, %v4832
        %4897 = vst.msk [vmem:[#allocation4 + $0x1c8] sm:$0xff] %vm1710, %v4833
        %4898 = vst.msk [vmem:[#allocation4 + $0x1d0] sm:$0xff] %vm1710, %v4834
        %4899 = vst.msk [vmem:[#allocation4 + $0x1d8] sm:$0xff] %vm1710, %v4835
        %4900 = vst.msk [vmem:[#allocation4 + $0x1e0] sm:$0xff] %vm1710, %v4836
        %4901 = vst.msk [vmem:[#allocation4 + $0x1e8] sm:$0xff] %vm1710, %v4837
        %4902 = vst.msk [vmem:[#allocation4 + $0x1f0] sm:$0xff] %vm1710, %v4838
        %4903 = vst.msk [vmem:[#allocation4 + $0x1f8] sm:$0xff] %vm1710, %v4839
        %4904 = vst.msk [vmem:[#allocation2] sm:$0xff] %vm3619, %v2531
        %4905 = vst.msk [vmem:[#allocation2 + $0x8] sm:$0xff] %vm3619, %v2532
        %4906 = vst.msk [vmem:[#allocation2 + $0x10] sm:$0xff] %vm3619, %v2533
        %4907 = vst.msk [vmem:[#allocation2 + $0x18] sm:$0xff] %vm3619, %v2534
        %4908 = vst.msk [vmem:[#allocation2 + $0x20] sm:$0xff] %vm3619, %v2535
        %4909 = vst.msk [vmem:[#allocation2 + $0x28] sm:$0xff] %vm3619, %v2536
        %4910 = vst.msk [vmem:[#allocation2 + $0x30] sm:$0xff] %vm3619, %v2537
        %4911 = vst.msk [vmem:[#allocation2 + $0x38] sm:$0xff] %vm3619, %v2538
        %4912 = vst.msk [vmem:[#allocation2 + $0x40] sm:$0xff] %vm3619, %v2539
        %4913 = vst.msk [vmem:[#allocation2 + $0x48] sm:$0xff] %vm3619, %v2540
        %4914 = vst.msk [vmem:[#allocation2 + $0x50] sm:$0xff] %vm3619, %v2541
        %4915 = vst.msk [vmem:[#allocation2 + $0x58] sm:$0xff] %vm3619, %v2542
        %4916 = vst.msk [vmem:[#allocation2 + $0x60] sm:$0xff] %vm3619, %v2543
        %4917 = vst.msk [vmem:[#allocation2 + $0x68] sm:$0xff] %vm3619, %v2544
        %4918 = vst.msk [vmem:[#allocation2 + $0x70] sm:$0xff] %vm3619, %v2545
        %4919 = vst.msk [vmem:[#allocation2 + $0x78] sm:$0xff] %vm3619, %v2546
        %4920 = vst.msk [vmem:[#allocation2 + $0x80] sm:$0xff] %vm3619, %v2547
        %4921 = vst.msk [vmem:[#allocation2 + $0x88] sm:$0xff] %vm3619, %v2548
        %4922 = vst.msk [vmem:[#allocation2 + $0x90] sm:$0xff] %vm3619, %v2549
        %4923 = vst.msk [vmem:[#allocation2 + $0x98] sm:$0xff] %vm3619, %v2550
        %4924 = vst.msk [vmem:[#allocation2 + $0xa0] sm:$0xff] %vm3619, %v2551
        %4925 = vst.msk [vmem:[#allocation2 + $0xa8] sm:$0xff] %vm3619, %v2552
        %4926 = vst.msk [vmem:[#allocation2 + $0xb0] sm:$0xff] %vm3619, %v2553
        %4927 = vst.msk [vmem:[#allocation2 + $0xb8] sm:$0xff] %vm3619, %v2554
        %4928 = vst.msk [vmem:[#allocation2 + $0xc0] sm:$0xff] %vm3619, %v2555
        %4929 = vst.msk [vmem:[#allocation2 + $0xc8] sm:$0xff] %vm3619, %v2556
        %4930 = vst.msk [vmem:[#allocation2 + $0xd0] sm:$0xff] %vm3619, %v2557
        %4931 = vst.msk [vmem:[#allocation2 + $0xd8] sm:$0xff] %vm3619, %v2558
        %4932 = vst.msk [vmem:[#allocation2 + $0xe0] sm:$0xff] %vm3619, %v2559
        %4933 = vst.msk [vmem:[#allocation2 + $0xe8] sm:$0xff] %vm3619, %v2560
        %4934 = vst.msk [vmem:[#allocation2 + $0xf0] sm:$0xff] %vm3619, %v2561
        %4935 = vst.msk [vmem:[#allocation2 + $0xf8] sm:$0xff] %vm3619, %v2562
        %4936 = vst.msk [vmem:[#allocation2 + $0x100] sm:$0xff] %vm3619, %v2563
        %4937 = vst.msk [vmem:[#allocation2 + $0x108] sm:$0xff] %vm3619, %v2564
        %4938 = vst.msk [vmem:[#allocation2 + $0x110] sm:$0xff] %vm3619, %v2565
        %4939 = vst.msk [vmem:[#allocation2 + $0x118] sm:$0xff] %vm3619, %v2566
        %4940 = vst.msk [vmem:[#allocation2 + $0x120] sm:$0xff] %vm3619, %v2567
        %4941 = vst.msk [vmem:[#allocation2 + $0x128] sm:$0xff] %vm3619, %v2568
        %4942 = vst.msk [vmem:[#allocation2 + $0x130] sm:$0xff] %vm3619, %v2569
        %4943 = vst.msk [vmem:[#allocation2 + $0x138] sm:$0xff] %vm3619, %v2570
        %4944 = vst.msk [vmem:[#allocation2 + $0x140] sm:$0xff] %vm3619, %v2571
        %4945 = vst.msk [vmem:[#allocation2 + $0x148] sm:$0xff] %vm3619, %v2572
        %4946 = vst.msk [vmem:[#allocation2 + $0x150] sm:$0xff] %vm3619, %v2573
        %4947 = vst.msk [vmem:[#allocation2 + $0x158] sm:$0xff] %vm3619, %v2574
        %4948 = vst.msk [vmem:[#allocation2 + $0x160] sm:$0xff] %vm3619, %v2575
        %4949 = vst.msk [vmem:[#allocation2 + $0x168] sm:$0xff] %vm3619, %v2576
        %4950 = vst.msk [vmem:[#allocation2 + $0x170] sm:$0xff] %vm3619, %v2577
        %4951 = vst.msk [vmem:[#allocation2 + $0x178] sm:$0xff] %vm3619, %v2578
        %4952 = vst.msk [vmem:[#allocation2 + $0x180] sm:$0xff] %vm3619, %v2579
        %4953 = vst.msk [vmem:[#allocation2 + $0x188] sm:$0xff] %vm3619, %v2580
        %4954 = vst.msk [vmem:[#allocation2 + $0x190] sm:$0xff] %vm3619, %v2581
        %4955 = vst.msk [vmem:[#allocation2 + $0x198] sm:$0xff] %vm3619, %v2582
        %4956 = vst.msk [vmem:[#allocation2 + $0x1a0] sm:$0xff] %vm3619, %v2583
        %4957 = vst.msk [vmem:[#allocation2 + $0x1a8] sm:$0xff] %vm3619, %v2584
        %4958 = vst.msk [vmem:[#allocation2 + $0x1b0] sm:$0xff] %vm3619, %v2585
        %4959 = vst.msk [vmem:[#allocation2 + $0x1b8] sm:$0xff] %vm3619, %v2586
        %4960 = vst.msk [vmem:[#allocation2 + $0x1c0] sm:$0xff] %vm3619, %v2587
        %4961 = vst.msk [vmem:[#allocation2 + $0x1c8] sm:$0xff] %vm3619, %v2588
        %4962 = vst.msk [vmem:[#allocation2 + $0x1d0] sm:$0xff] %vm3619, %v2589
        %4963 = vst.msk [vmem:[#allocation2 + $0x1d8] sm:$0xff] %vm3619, %v2590
        %4964 = vst.msk [vmem:[#allocation2 + $0x1e0] sm:$0xff] %vm3619, %v2591
        %4965 = vst.msk [vmem:[#allocation2 + $0x1e8] sm:$0xff] %vm3619, %v2592
        %4966 = vst.msk [vmem:[#allocation2 + $0x1f0] sm:$0xff] %vm3619, %v2593
        %4967 = vst.msk [vmem:[#allocation2 + $0x1f8] sm:$0xff] %vm3619, %v2594
        %p4968 = scmp.eq.s32.totalorder %s24, 2
        // Predicated region
        $region172: #{tpu_custom_call.1} parent=154 // pred_check
          %p4969 = pneg %p4968
        $region173: #{tpu_custom_call.1} parent=154 // pred_check_branch
          %4971 = sbr.rel (%p4969) target = $region175
        $region174: #{tpu_custom_call.1} parent=154 // pred_region
          %v4972 = vld [vmem:[#allocation3] sm:$0xff]
          %v4973 = vld [vmem:[#allocation3 + $0x8] sm:$0xff]
          %v4974 = vld [vmem:[#allocation3 + $0x10] sm:$0xff]
          %v4975 = vld [vmem:[#allocation3 + $0x18] sm:$0xff]
          %v4976 = vld [vmem:[#allocation3 + $0x20] sm:$0xff]
          %v4977 = vld [vmem:[#allocation3 + $0x28] sm:$0xff]
          %v4978 = vld [vmem:[#allocation3 + $0x30] sm:$0xff]
          %v4979 = vld [vmem:[#allocation3 + $0x38] sm:$0xff]
          %v4980 = vld [vmem:[#allocation3 + $0x40] sm:$0xff]
          %v4981 = vld [vmem:[#allocation3 + $0x48] sm:$0xff]
          %v4982 = vld [vmem:[#allocation3 + $0x50] sm:$0xff]
          %v4983 = vld [vmem:[#allocation3 + $0x58] sm:$0xff]
          %v4984 = vld [vmem:[#allocation3 + $0x60] sm:$0xff]
          %v4985 = vld [vmem:[#allocation3 + $0x68] sm:$0xff]
          %v4986 = vld [vmem:[#allocation3 + $0x70] sm:$0xff]
          %v4987 = vld [vmem:[#allocation3 + $0x78] sm:$0xff]
          %v4988 = vld [vmem:[#allocation3 + $0x80] sm:$0xff]
          %v4989 = vld [vmem:[#allocation3 + $0x88] sm:$0xff]
          %v4990 = vld [vmem:[#allocation3 + $0x90] sm:$0xff]
          %v4991 = vld [vmem:[#allocation3 + $0x98] sm:$0xff]
          %v4992 = vld [vmem:[#allocation3 + $0xa0] sm:$0xff]
          %v4993 = vld [vmem:[#allocation3 + $0xa8] sm:$0xff]
          %v4994 = vld [vmem:[#allocation3 + $0xb0] sm:$0xff]
          %v4995 = vld [vmem:[#allocation3 + $0xb8] sm:$0xff]
          %v4996 = vld [vmem:[#allocation3 + $0xc0] sm:$0xff]
          %v4997 = vld [vmem:[#allocation3 + $0xc8] sm:$0xff]
          %v4998 = vld [vmem:[#allocation3 + $0xd0] sm:$0xff]
          %v4999 = vld [vmem:[#allocation3 + $0xd8] sm:$0xff]
          %v5000 = vld [vmem:[#allocation3 + $0xe0] sm:$0xff]
          %v5001 = vld [vmem:[#allocation3 + $0xe8] sm:$0xff]
          %v5002 = vld [vmem:[#allocation3 + $0xf0] sm:$0xff]
          %v5003 = vld [vmem:[#allocation3 + $0xf8] sm:$0xff]
          %v5004 = vld [vmem:[#allocation3 + $0x100] sm:$0xff]
          %v5005 = vld [vmem:[#allocation3 + $0x108] sm:$0xff]
          %v5006 = vld [vmem:[#allocation3 + $0x110] sm:$0xff]
          %v5007 = vld [vmem:[#allocation3 + $0x118] sm:$0xff]
          %v5008 = vld [vmem:[#allocation3 + $0x120] sm:$0xff]
          %v5009 = vld [vmem:[#allocation3 + $0x128] sm:$0xff]
          %v5010 = vld [vmem:[#allocation3 + $0x130] sm:$0xff]
          %v5011 = vld [vmem:[#allocation3 + $0x138] sm:$0xff]
          %v5012 = vld [vmem:[#allocation3 + $0x140] sm:$0xff]
          %v5013 = vld [vmem:[#allocation3 + $0x148] sm:$0xff]
          %v5014 = vld [vmem:[#allocation3 + $0x150] sm:$0xff]
          %v5015 = vld [vmem:[#allocation3 + $0x158] sm:$0xff]
          %v5016 = vld [vmem:[#allocation3 + $0x160] sm:$0xff]
          %v5017 = vld [vmem:[#allocation3 + $0x168] sm:$0xff]
          %v5018 = vld [vmem:[#allocation3 + $0x170] sm:$0xff]
          %v5019 = vld [vmem:[#allocation3 + $0x178] sm:$0xff]
          %v5020 = vld [vmem:[#allocation3 + $0x180] sm:$0xff]
          %v5021 = vld [vmem:[#allocation3 + $0x188] sm:$0xff]
          %v5022 = vld [vmem:[#allocation3 + $0x190] sm:$0xff]
          %v5023 = vld [vmem:[#allocation3 + $0x198] sm:$0xff]
          %v5024 = vld [vmem:[#allocation3 + $0x1a0] sm:$0xff]
          %v5025 = vld [vmem:[#allocation3 + $0x1a8] sm:$0xff]
          %v5026 = vld [vmem:[#allocation3 + $0x1b0] sm:$0xff]
          %v5027 = vld [vmem:[#allocation3 + $0x1b8] sm:$0xff]
          %v5028 = vld [vmem:[#allocation3 + $0x1c0] sm:$0xff]
          %v5029 = vld [vmem:[#allocation3 + $0x1c8] sm:$0xff]
          %v5030 = vld [vmem:[#allocation3 + $0x1d0] sm:$0xff]
          %v5031 = vld [vmem:[#allocation3 + $0x1d8] sm:$0xff]
          %v5032 = vld [vmem:[#allocation3 + $0x1e0] sm:$0xff]
          %v5033 = vld [vmem:[#allocation3 + $0x1e8] sm:$0xff]
          %v5034 = vld [vmem:[#allocation3 + $0x1f0] sm:$0xff]
          %v5035 = vld [vmem:[#allocation3 + $0x1f8] sm:$0xff]
          %v5036 = vrcp.pop %v4972
          %v5037 = vrcp.pop %v4973
          %v5038 = vrcp.pop %v4974
          %v5039 = vrcp.pop %v4975
          %v5040 = vrcp.pop %v4976
          %v5041 = vrcp.pop %v4977
          %v5042 = vrcp.pop %v4978
          %v5043 = vrcp.pop %v4979
          %v5044 = vrcp.pop %v4980
          %v5045 = vrcp.pop %v4981
          %v5046 = vrcp.pop %v4982
          %v5047 = vrcp.pop %v4983
          %v5048 = vrcp.pop %v4984
          %v5049 = vrcp.pop %v4985
          %v5050 = vrcp.pop %v4986
          %v5051 = vrcp.pop %v4987
          %v5052 = vrcp.pop %v4988
          %v5053 = vrcp.pop %v4989
          %v5054 = vrcp.pop %v4990
          %v5055 = vrcp.pop %v4991
          %v5056 = vrcp.pop %v4992
          %v5057 = vrcp.pop %v4993
          %v5058 = vrcp.pop %v4994
          %v5059 = vrcp.pop %v4995
          %v5060 = vrcp.pop %v4996
          %v5061 = vrcp.pop %v4997
          %v5062 = vrcp.pop %v4998
          %v5063 = vrcp.pop %v4999
          %v5064 = vrcp.pop %v5000
          %v5065 = vrcp.pop %v5001
          %v5066 = vrcp.pop %v5002
          %v5067 = vrcp.pop %v5003
          %v5068 = vrcp.pop %v5004
          %v5069 = vrcp.pop %v5005
          %v5070 = vrcp.pop %v5006
          %v5071 = vrcp.pop %v5007
          %v5072 = vrcp.pop %v5008
          %v5073 = vrcp.pop %v5009
          %v5074 = vrcp.pop %v5010
          %v5075 = vrcp.pop %v5011
          %v5076 = vrcp.pop %v5012
          %v5077 = vrcp.pop %v5013
          %v5078 = vrcp.pop %v5014
          %v5079 = vrcp.pop %v5015
          %v5080 = vrcp.pop %v5016
          %v5081 = vrcp.pop %v5017
          %v5082 = vrcp.pop %v5018
          %v5083 = vrcp.pop %v5019
          %v5084 = vrcp.pop %v5020
          %v5085 = vrcp.pop %v5021
          %v5086 = vrcp.pop %v5022
          %v5087 = vrcp.pop %v5023
          %v5088 = vrcp.pop %v5024
          %v5089 = vrcp.pop %v5025
          %v5090 = vrcp.pop %v5026
          %v5091 = vrcp.pop %v5027
          %v5092 = vrcp.pop %v5028
          %v5093 = vrcp.pop %v5029
          %v5094 = vrcp.pop %v5030
          %v5095 = vrcp.pop %v5031
          %v5096 = vrcp.pop %v5032
          %v5097 = vrcp.pop %v5033
          %v5098 = vrcp.pop %v5034
          %v5099 = vrcp.pop %v5035
          %v5100 = vld [vmem:[#allocation4] sm:$0xff]
          %v5101 = vld [vmem:[#allocation4 + $0x8] sm:$0xff]
          %v5102 = vld [vmem:[#allocation4 + $0x10] sm:$0xff]
          %v5103 = vld [vmem:[#allocation4 + $0x18] sm:$0xff]
          %v5104 = vld [vmem:[#allocation4 + $0x20] sm:$0xff]
          %v5105 = vld [vmem:[#allocation4 + $0x28] sm:$0xff]
          %v5106 = vld [vmem:[#allocation4 + $0x30] sm:$0xff]
          %v5107 = vld [vmem:[#allocation4 + $0x38] sm:$0xff]
          %v5108 = vld [vmem:[#allocation4 + $0x40] sm:$0xff]
          %v5109 = vld [vmem:[#allocation4 + $0x48] sm:$0xff]
          %v5110 = vld [vmem:[#allocation4 + $0x50] sm:$0xff]
          %v5111 = vld [vmem:[#allocation4 + $0x58] sm:$0xff]
          %v5112 = vld [vmem:[#allocation4 + $0x60] sm:$0xff]
          %v5113 = vld [vmem:[#allocation4 + $0x68] sm:$0xff]
          %v5114 = vld [vmem:[#allocation4 + $0x70] sm:$0xff]
          %v5115 = vld [vmem:[#allocation4 + $0x78] sm:$0xff]
          %v5116 = vld [vmem:[#allocation4 + $0x80] sm:$0xff]
          %v5117 = vld [vmem:[#allocation4 + $0x88] sm:$0xff]
          %v5118 = vld [vmem:[#allocation4 + $0x90] sm:$0xff]
          %v5119 = vld [vmem:[#allocation4 + $0x98] sm:$0xff]
          %v5120 = vld [vmem:[#allocation4 + $0xa0] sm:$0xff]
          %v5121 = vld [vmem:[#allocation4 + $0xa8] sm:$0xff]
          %v5122 = vld [vmem:[#allocation4 + $0xb0] sm:$0xff]
          %v5123 = vld [vmem:[#allocation4 + $0xb8] sm:$0xff]
          %v5124 = vld [vmem:[#allocation4 + $0xc0] sm:$0xff]
          %v5125 = vld [vmem:[#allocation4 + $0xc8] sm:$0xff]
          %v5126 = vld [vmem:[#allocation4 + $0xd0] sm:$0xff]
          %v5127 = vld [vmem:[#allocation4 + $0xd8] sm:$0xff]
          %v5128 = vld [vmem:[#allocation4 + $0xe0] sm:$0xff]
          %v5129 = vld [vmem:[#allocation4 + $0xe8] sm:$0xff]
          %v5130 = vld [vmem:[#allocation4 + $0xf0] sm:$0xff]
          %v5131 = vld [vmem:[#allocation4 + $0xf8] sm:$0xff]
          %v5132 = vld [vmem:[#allocation4 + $0x100] sm:$0xff]
          %v5133 = vld [vmem:[#allocation4 + $0x108] sm:$0xff]
          %v5134 = vld [vmem:[#allocation4 + $0x110] sm:$0xff]
          %v5135 = vld [vmem:[#allocation4 + $0x118] sm:$0xff]
          %v5136 = vld [vmem:[#allocation4 + $0x120] sm:$0xff]
          %v5137 = vld [vmem:[#allocation4 + $0x128] sm:$0xff]
          %v5138 = vld [vmem:[#allocation4 + $0x130] sm:$0xff]
          %v5139 = vld [vmem:[#allocation4 + $0x138] sm:$0xff]
          %v5140 = vld [vmem:[#allocation4 + $0x140] sm:$0xff]
          %v5141 = vld [vmem:[#allocation4 + $0x148] sm:$0xff]
          %v5142 = vld [vmem:[#allocation4 + $0x150] sm:$0xff]
          %v5143 = vld [vmem:[#allocation4 + $0x158] sm:$0xff]
          %v5144 = vld [vmem:[#allocation4 + $0x160] sm:$0xff]
          %v5145 = vld [vmem:[#allocation4 + $0x168] sm:$0xff]
          %v5146 = vld [vmem:[#allocation4 + $0x170] sm:$0xff]
          %v5147 = vld [vmem:[#allocation4 + $0x178] sm:$0xff]
          %v5148 = vld [vmem:[#allocation4 + $0x180] sm:$0xff]
          %v5149 = vld [vmem:[#allocation4 + $0x188] sm:$0xff]
          %v5150 = vld [vmem:[#allocation4 + $0x190] sm:$0xff]
          %v5151 = vld [vmem:[#allocation4 + $0x198] sm:$0xff]
          %v5152 = vld [vmem:[#allocation4 + $0x1a0] sm:$0xff]
          %v5153 = vld [vmem:[#allocation4 + $0x1a8] sm:$0xff]
          %v5154 = vld [vmem:[#allocation4 + $0x1b0] sm:$0xff]
          %v5155 = vld [vmem:[#allocation4 + $0x1b8] sm:$0xff]
          %v5156 = vld [vmem:[#allocation4 + $0x1c0] sm:$0xff]
          %v5157 = vld [vmem:[#allocation4 + $0x1c8] sm:$0xff]
          %v5158 = vld [vmem:[#allocation4 + $0x1d0] sm:$0xff]
          %v5159 = vld [vmem:[#allocation4 + $0x1d8] sm:$0xff]
          %v5160 = vld [vmem:[#allocation4 + $0x1e0] sm:$0xff]
          %v5161 = vld [vmem:[#allocation4 + $0x1e8] sm:$0xff]
          %v5162 = vld [vmem:[#allocation4 + $0x1f0] sm:$0xff]
          %v5163 = vld [vmem:[#allocation4 + $0x1f8] sm:$0xff]
          %5165 = vset.pattern.permute.xlu0 0
          %5166 = vperm.xlu0 %5165, %v5036
          %v5167 = vpop.permute.xlu0 %5166
          %5170 = vset.pattern.permute.xlu0 0
          %5171 = vperm.xlu0 %5170, %v5037
          %v5172 = vpop.permute.xlu0 %5171
          %5175 = vset.pattern.permute.xlu0 0
          %5176 = vperm.xlu0 %5175, %v5038
          %v5177 = vpop.permute.xlu0 %5176
          %5180 = vset.pattern.permute.xlu0 0
          %5181 = vperm.xlu0 %5180, %v5039
          %v5182 = vpop.permute.xlu0 %5181
          %5185 = vset.pattern.permute.xlu0 0
          %5186 = vperm.xlu0 %5185, %v5040
          %v5187 = vpop.permute.xlu0 %5186
          %5190 = vset.pattern.permute.xlu0 0
          %5191 = vperm.xlu0 %5190, %v5041
          %v5192 = vpop.permute.xlu0 %5191
          %5195 = vset.pattern.permute.xlu0 0
          %5196 = vperm.xlu0 %5195, %v5042
          %v5197 = vpop.permute.xlu0 %5196
          %5200 = vset.pattern.permute.xlu0 0
          %5201 = vperm.xlu0 %5200, %v5043
          %v5202 = vpop.permute.xlu0 %5201
          %5205 = vset.pattern.permute.xlu0 0
          %5206 = vperm.xlu0 %5205, %v5044
          %v5207 = vpop.permute.xlu0 %5206
          %5210 = vset.pattern.permute.xlu0 0
          %5211 = vperm.xlu0 %5210, %v5045
          %v5212 = vpop.permute.xlu0 %5211
          %5215 = vset.pattern.permute.xlu0 0
          %5216 = vperm.xlu0 %5215, %v5046
          %v5217 = vpop.permute.xlu0 %5216
          %5220 = vset.pattern.permute.xlu0 0
          %5221 = vperm.xlu0 %5220, %v5047
          %v5222 = vpop.permute.xlu0 %5221
          %5225 = vset.pattern.permute.xlu0 0
          %5226 = vperm.xlu0 %5225, %v5048
          %v5227 = vpop.permute.xlu0 %5226
          %5230 = vset.pattern.permute.xlu0 0
          %5231 = vperm.xlu0 %5230, %v5049
          %v5232 = vpop.permute.xlu0 %5231
          %5235 = vset.pattern.permute.xlu0 0
          %5236 = vperm.xlu0 %5235, %v5050
          %v5237 = vpop.permute.xlu0 %5236
          %5240 = vset.pattern.permute.xlu0 0
          %5241 = vperm.xlu0 %5240, %v5051
          %v5242 = vpop.permute.xlu0 %5241
          %5245 = vset.pattern.permute.xlu0 0
          %5246 = vperm.xlu0 %5245, %v5052
          %v5247 = vpop.permute.xlu0 %5246
          %5250 = vset.pattern.permute.xlu0 0
          %5251 = vperm.xlu0 %5250, %v5053
          %v5252 = vpop.permute.xlu0 %5251
          %5255 = vset.pattern.permute.xlu0 0
          %5256 = vperm.xlu0 %5255, %v5054
          %v5257 = vpop.permute.xlu0 %5256
          %5260 = vset.pattern.permute.xlu0 0
          %5261 = vperm.xlu0 %5260, %v5055
          %v5262 = vpop.permute.xlu0 %5261
          %5265 = vset.pattern.permute.xlu0 0
          %5266 = vperm.xlu0 %5265, %v5056
          %v5267 = vpop.permute.xlu0 %5266
          %5270 = vset.pattern.permute.xlu0 0
          %5271 = vperm.xlu0 %5270, %v5057
          %v5272 = vpop.permute.xlu0 %5271
          %5275 = vset.pattern.permute.xlu0 0
          %5276 = vperm.xlu0 %5275, %v5058
          %v5277 = vpop.permute.xlu0 %5276
          %5280 = vset.pattern.permute.xlu0 0
          %5281 = vperm.xlu0 %5280, %v5059
          %v5282 = vpop.permute.xlu0 %5281
          %5285 = vset.pattern.permute.xlu0 0
          %5286 = vperm.xlu0 %5285, %v5060
          %v5287 = vpop.permute.xlu0 %5286
          %5290 = vset.pattern.permute.xlu0 0
          %5291 = vperm.xlu0 %5290, %v5061
          %v5292 = vpop.permute.xlu0 %5291
          %5295 = vset.pattern.permute.xlu0 0
          %5296 = vperm.xlu0 %5295, %v5062
          %v5297 = vpop.permute.xlu0 %5296
          %5300 = vset.pattern.permute.xlu0 0
          %5301 = vperm.xlu0 %5300, %v5063
          %v5302 = vpop.permute.xlu0 %5301
          %5305 = vset.pattern.permute.xlu0 0
          %5306 = vperm.xlu0 %5305, %v5064
          %v5307 = vpop.permute.xlu0 %5306
          %5310 = vset.pattern.permute.xlu0 0
          %5311 = vperm.xlu0 %5310, %v5065
          %v5312 = vpop.permute.xlu0 %5311
          %5315 = vset.pattern.permute.xlu0 0
          %5316 = vperm.xlu0 %5315, %v5066
          %v5317 = vpop.permute.xlu0 %5316
          %5320 = vset.pattern.permute.xlu0 0
          %5321 = vperm.xlu0 %5320, %v5067
          %v5322 = vpop.permute.xlu0 %5321
          %5325 = vset.pattern.permute.xlu0 0
          %5326 = vperm.xlu0 %5325, %v5068
          %v5327 = vpop.permute.xlu0 %5326
          %5330 = vset.pattern.permute.xlu0 0
          %5331 = vperm.xlu0 %5330, %v5069
          %v5332 = vpop.permute.xlu0 %5331
          %5335 = vset.pattern.permute.xlu0 0
          %5336 = vperm.xlu0 %5335, %v5070
          %v5337 = vpop.permute.xlu0 %5336
          %5340 = vset.pattern.permute.xlu0 0
          %5341 = vperm.xlu0 %5340, %v5071
          %v5342 = vpop.permute.xlu0 %5341
          %5345 = vset.pattern.permute.xlu0 0
          %5346 = vperm.xlu0 %5345, %v5072
          %v5347 = vpop.permute.xlu0 %5346
          %5350 = vset.pattern.permute.xlu0 0
          %5351 = vperm.xlu0 %5350, %v5073
          %v5352 = vpop.permute.xlu0 %5351
          %5355 = vset.pattern.permute.xlu0 0
          %5356 = vperm.xlu0 %5355, %v5074
          %v5357 = vpop.permute.xlu0 %5356
          %5360 = vset.pattern.permute.xlu0 0
          %5361 = vperm.xlu0 %5360, %v5075
          %v5362 = vpop.permute.xlu0 %5361
          %5365 = vset.pattern.permute.xlu0 0
          %5366 = vperm.xlu0 %5365, %v5076
          %v5367 = vpop.permute.xlu0 %5366
          %5370 = vset.pattern.permute.xlu0 0
          %5371 = vperm.xlu0 %5370, %v5077
          %v5372 = vpop.permute.xlu0 %5371
          %5375 = vset.pattern.permute.xlu0 0
          %5376 = vperm.xlu0 %5375, %v5078
          %v5377 = vpop.permute.xlu0 %5376
          %5380 = vset.pattern.permute.xlu0 0
          %5381 = vperm.xlu0 %5380, %v5079
          %v5382 = vpop.permute.xlu0 %5381
          %5385 = vset.pattern.permute.xlu0 0
          %5386 = vperm.xlu0 %5385, %v5080
          %v5387 = vpop.permute.xlu0 %5386
          %5390 = vset.pattern.permute.xlu0 0
          %5391 = vperm.xlu0 %5390, %v5081
          %v5392 = vpop.permute.xlu0 %5391
          %5395 = vset.pattern.permute.xlu0 0
          %5396 = vperm.xlu0 %5395, %v5082
          %v5397 = vpop.permute.xlu0 %5396
          %5400 = vset.pattern.permute.xlu0 0
          %5401 = vperm.xlu0 %5400, %v5083
          %v5402 = vpop.permute.xlu0 %5401
          %5405 = vset.pattern.permute.xlu0 0
          %5406 = vperm.xlu0 %5405, %v5084
          %v5407 = vpop.permute.xlu0 %5406
          %5410 = vset.pattern.permute.xlu0 0
          %5411 = vperm.xlu0 %5410, %v5085
          %v5412 = vpop.permute.xlu0 %5411
          %5415 = vset.pattern.permute.xlu0 0
          %5416 = vperm.xlu0 %5415, %v5086
          %v5417 = vpop.permute.xlu0 %5416
          %5420 = vset.pattern.permute.xlu0 0
          %5421 = vperm.xlu0 %5420, %v5087
          %v5422 = vpop.permute.xlu0 %5421
          %5425 = vset.pattern.permute.xlu0 0
          %5426 = vperm.xlu0 %5425, %v5088
          %v5427 = vpop.permute.xlu0 %5426
          %5430 = vset.pattern.permute.xlu0 0
          %5431 = vperm.xlu0 %5430, %v5089
          %v5432 = vpop.permute.xlu0 %5431
          %5435 = vset.pattern.permute.xlu0 0
          %5436 = vperm.xlu0 %5435, %v5090
          %v5437 = vpop.permute.xlu0 %5436
          %5440 = vset.pattern.permute.xlu0 0
          %5441 = vperm.xlu0 %5440, %v5091
          %v5442 = vpop.permute.xlu0 %5441
          %5445 = vset.pattern.permute.xlu0 0
          %5446 = vperm.xlu0 %5445, %v5092
          %v5447 = vpop.permute.xlu0 %5446
          %5450 = vset.pattern.permute.xlu0 0
          %5451 = vperm.xlu0 %5450, %v5093
          %v5452 = vpop.permute.xlu0 %5451
          %5455 = vset.pattern.permute.xlu0 0
          %5456 = vperm.xlu0 %5455, %v5094
          %v5457 = vpop.permute.xlu0 %5456
          %5460 = vset.pattern.permute.xlu0 0
          %5461 = vperm.xlu0 %5460, %v5095
          %v5462 = vpop.permute.xlu0 %5461
          %5465 = vset.pattern.permute.xlu0 0
          %5466 = vperm.xlu0 %5465, %v5096
          %v5467 = vpop.permute.xlu0 %5466
          %5470 = vset.pattern.permute.xlu0 0
          %5471 = vperm.xlu0 %5470, %v5097
          %v5472 = vpop.permute.xlu0 %5471
          %5475 = vset.pattern.permute.xlu0 0
          %5476 = vperm.xlu0 %5475, %v5098
          %v5477 = vpop.permute.xlu0 %5476
          %5480 = vset.pattern.permute.xlu0 0
          %5481 = vperm.xlu0 %5480, %v5099
          %v5482 = vpop.permute.xlu0 %5481
          %v5484 = vmul.f32 %v5100, %v5167
          %v5485 = vmul.f32 %v5101, %v5172
          %v5486 = vmul.f32 %v5102, %v5177
          %v5487 = vmul.f32 %v5103, %v5182
          %v5488 = vmul.f32 %v5104, %v5187
          %v5489 = vmul.f32 %v5105, %v5192
          %v5490 = vmul.f32 %v5106, %v5197
          %v5491 = vmul.f32 %v5107, %v5202
          %v5492 = vmul.f32 %v5108, %v5207
          %v5493 = vmul.f32 %v5109, %v5212
          %v5494 = vmul.f32 %v5110, %v5217
          %v5495 = vmul.f32 %v5111, %v5222
          %v5496 = vmul.f32 %v5112, %v5227
          %v5497 = vmul.f32 %v5113, %v5232
          %v5498 = vmul.f32 %v5114, %v5237
          %v5499 = vmul.f32 %v5115, %v5242
          %v5500 = vmul.f32 %v5116, %v5247
          %v5501 = vmul.f32 %v5117, %v5252
          %v5502 = vmul.f32 %v5118, %v5257
          %v5503 = vmul.f32 %v5119, %v5262
          %v5504 = vmul.f32 %v5120, %v5267
          %v5505 = vmul.f32 %v5121, %v5272
          %v5506 = vmul.f32 %v5122, %v5277
          %v5507 = vmul.f32 %v5123, %v5282
          %v5508 = vmul.f32 %v5124, %v5287
          %v5509 = vmul.f32 %v5125, %v5292
          %v5510 = vmul.f32 %v5126, %v5297
          %v5511 = vmul.f32 %v5127, %v5302
          %v5512 = vmul.f32 %v5128, %v5307
          %v5513 = vmul.f32 %v5129, %v5312
          %v5514 = vmul.f32 %v5130, %v5317
          %v5515 = vmul.f32 %v5131, %v5322
          %v5516 = vmul.f32 %v5132, %v5327
          %v5517 = vmul.f32 %v5133, %v5332
          %v5518 = vmul.f32 %v5134, %v5337
          %v5519 = vmul.f32 %v5135, %v5342
          %v5520 = vmul.f32 %v5136, %v5347
          %v5521 = vmul.f32 %v5137, %v5352
          %v5522 = vmul.f32 %v5138, %v5357
          %v5523 = vmul.f32 %v5139, %v5362
          %v5524 = vmul.f32 %v5140, %v5367
          %v5525 = vmul.f32 %v5141, %v5372
          %v5526 = vmul.f32 %v5142, %v5377
          %v5527 = vmul.f32 %v5143, %v5382
          %v5528 = vmul.f32 %v5144, %v5387
          %v5529 = vmul.f32 %v5145, %v5392
          %v5530 = vmul.f32 %v5146, %v5397
          %v5531 = vmul.f32 %v5147, %v5402
          %v5532 = vmul.f32 %v5148, %v5407
          %v5533 = vmul.f32 %v5149, %v5412
          %v5534 = vmul.f32 %v5150, %v5417
          %v5535 = vmul.f32 %v5151, %v5422
          %v5536 = vmul.f32 %v5152, %v5427
          %v5537 = vmul.f32 %v5153, %v5432
          %v5538 = vmul.f32 %v5154, %v5437
          %v5539 = vmul.f32 %v5155, %v5442
          %v5540 = vmul.f32 %v5156, %v5447
          %v5541 = vmul.f32 %v5157, %v5452
          %v5542 = vmul.f32 %v5158, %v5457
          %v5543 = vmul.f32 %v5159, %v5462
          %v5544 = vmul.f32 %v5160, %v5467
          %v5545 = vmul.f32 %v5161, %v5472
          %v5546 = vmul.f32 %v5162, %v5477
          %v5547 = vmul.f32 %v5163, %v5482
          %v5548 = vpack.c.bf16 %v5484, %v5484
          %v5549 = vpack.c.bf16 %v5485, %v5485
          %v5550 = vpack.c.bf16 %v5486, %v5486
          %v5551 = vpack.c.bf16 %v5487, %v5487
          %v5552 = vpack.c.bf16 %v5488, %v5488
          %v5553 = vpack.c.bf16 %v5489, %v5489
          %v5554 = vpack.c.bf16 %v5490, %v5490
          %v5555 = vpack.c.bf16 %v5491, %v5491
          %v5556 = vpack.c.bf16 %v5492, %v5492
          %v5557 = vpack.c.bf16 %v5493, %v5493
          %v5558 = vpack.c.bf16 %v5494, %v5494
          %v5559 = vpack.c.bf16 %v5495, %v5495
          %v5560 = vpack.c.bf16 %v5496, %v5496
          %v5561 = vpack.c.bf16 %v5497, %v5497
          %v5562 = vpack.c.bf16 %v5498, %v5498
          %v5563 = vpack.c.bf16 %v5499, %v5499
          %v5564 = vpack.c.bf16 %v5500, %v5500
          %v5565 = vpack.c.bf16 %v5501, %v5501
          %v5566 = vpack.c.bf16 %v5502, %v5502
          %v5567 = vpack.c.bf16 %v5503, %v5503
          %v5568 = vpack.c.bf16 %v5504, %v5504
          %v5569 = vpack.c.bf16 %v5505, %v5505
          %v5570 = vpack.c.bf16 %v5506, %v5506
          %v5571 = vpack.c.bf16 %v5507, %v5507
          %v5572 = vpack.c.bf16 %v5508, %v5508
          %v5573 = vpack.c.bf16 %v5509, %v5509
          %v5574 = vpack.c.bf16 %v5510, %v5510
          %v5575 = vpack.c.bf16 %v5511, %v5511
          %v5576 = vpack.c.bf16 %v5512, %v5512
          %v5577 = vpack.c.bf16 %v5513, %v5513
          %v5578 = vpack.c.bf16 %v5514, %v5514
          %v5579 = vpack.c.bf16 %v5515, %v5515
          %v5580 = vpack.c.bf16 %v5516, %v5516
          %v5581 = vpack.c.bf16 %v5517, %v5517
          %v5582 = vpack.c.bf16 %v5518, %v5518
          %v5583 = vpack.c.bf16 %v5519, %v5519
          %v5584 = vpack.c.bf16 %v5520, %v5520
          %v5585 = vpack.c.bf16 %v5521, %v5521
          %v5586 = vpack.c.bf16 %v5522, %v5522
          %v5587 = vpack.c.bf16 %v5523, %v5523
          %v5588 = vpack.c.bf16 %v5524, %v5524
          %v5589 = vpack.c.bf16 %v5525, %v5525
          %v5590 = vpack.c.bf16 %v5526, %v5526
          %v5591 = vpack.c.bf16 %v5527, %v5527
          %v5592 = vpack.c.bf16 %v5528, %v5528
          %v5593 = vpack.c.bf16 %v5529, %v5529
          %v5594 = vpack.c.bf16 %v5530, %v5530
          %v5595 = vpack.c.bf16 %v5531, %v5531
          %v5596 = vpack.c.bf16 %v5532, %v5532
          %v5597 = vpack.c.bf16 %v5533, %v5533
          %v5598 = vpack.c.bf16 %v5534, %v5534
          %v5599 = vpack.c.bf16 %v5535, %v5535
          %v5600 = vpack.c.bf16 %v5536, %v5536
          %v5601 = vpack.c.bf16 %v5537, %v5537
          %v5602 = vpack.c.bf16 %v5538, %v5538
          %v5603 = vpack.c.bf16 %v5539, %v5539
          %v5604 = vpack.c.bf16 %v5540, %v5540
          %v5605 = vpack.c.bf16 %v5541, %v5541
          %v5606 = vpack.c.bf16 %v5542, %v5542
          %v5607 = vpack.c.bf16 %v5543, %v5543
          %v5608 = vpack.c.bf16 %v5544, %v5544
          %v5609 = vpack.c.bf16 %v5545, %v5545
          %v5610 = vpack.c.bf16 %v5546, %v5546
          %v5611 = vpack.c.bf16 %v5547, %v5547
          %v5612 = vld [vmem:[%s4] sm:$0xf]
          %v5613 = vld [vmem:[%s4 + $0x4] sm:$0xf]
          %v5614 = vld [vmem:[%s4 + $0x8] sm:$0xf]
          %v5615 = vld [vmem:[%s4 + $0xc] sm:$0xf]
          %v5616 = vld [vmem:[%s4 + $0x10] sm:$0xf]
          %v5617 = vld [vmem:[%s4 + $0x14] sm:$0xf]
          %v5618 = vld [vmem:[%s4 + $0x18] sm:$0xf]
          %v5619 = vld [vmem:[%s4 + $0x1c] sm:$0xf]
          %v5620 = vld [vmem:[%s4 + $0x20] sm:$0xf]
          %v5621 = vld [vmem:[%s4 + $0x24] sm:$0xf]
          %v5622 = vld [vmem:[%s4 + $0x28] sm:$0xf]
          %v5623 = vld [vmem:[%s4 + $0x2c] sm:$0xf]
          %v5624 = vld [vmem:[%s4 + $0x30] sm:$0xf]
          %v5625 = vld [vmem:[%s4 + $0x34] sm:$0xf]
          %v5626 = vld [vmem:[%s4 + $0x38] sm:$0xf]
          %v5627 = vld [vmem:[%s4 + $0x3c] sm:$0xf]
          %v5644 = vunpack.c.l.b16 %v5548
          %v5645 = vunpack.c.l.b16 %v5549
          %v5646 = vunpack.c.l.b16 %v5550
          %v5647 = vunpack.c.l.b16 %v5551
          %v5648 = vunpack.c.l.b16 %v5552
          %v5649 = vunpack.c.l.b16 %v5553
          %v5650 = vunpack.c.l.b16 %v5554
          %v5651 = vunpack.c.l.b16 %v5555
          %v5652 = vunpack.c.l.b16 %v5556
          %v5653 = vunpack.c.l.b16 %v5557
          %v5654 = vunpack.c.l.b16 %v5558
          %v5655 = vunpack.c.l.b16 %v5559
          %v5656 = vunpack.c.l.b16 %v5560
          %v5657 = vunpack.c.l.b16 %v5561
          %v5658 = vunpack.c.l.b16 %v5562
          %v5659 = vunpack.c.l.b16 %v5563
          %v5660 = vpack.c.b16 %v5645, %v5644
          %v5661 = vpack.c.b16 %v5647, %v5646
          %v5662 = vpack.c.b16 %v5649, %v5648
          %v5663 = vpack.c.b16 %v5651, %v5650
          %v5664 = vpack.c.b16 %v5653, %v5652
          %v5665 = vpack.c.b16 %v5655, %v5654
          %v5666 = vpack.c.b16 %v5657, %v5656
          %v5667 = vpack.c.b16 %v5659, %v5658
          %v5672 = vunpack.c.l.b16 %v5612
          %v5673 = vunpack.c.l.b16 %v5613
          %v5674 = vunpack.c.l.b16 %v5614
          %v5675 = vunpack.c.l.b16 %v5615
          %v5676 = vpack.c.b16 %v5673, %v5672
          %v5677 = vpack.c.b16 %v5675, %v5674
          %v5681 = vsel %vm1710, %v5660, 0
          %v5684 = vsel %vm1710, %v5661, 0
          %v5687 = vsel %vm1710, %v5662, 0
          %v5690 = vsel %vm1710, %v5663, 0
          %v5693 = vsel %vm1710, %v5664, 0
          %v5696 = vsel %vm1710, %v5665, 0
          %v5699 = vsel %vm1710, %v5666, 0
          %v5702 = vsel %vm1710, %v5667, 0
          %5704 = vmatpush.bf16.msra.mxu0 0
          %5705 = vmatpush.bf16.msra.mxu0 0
          %5706 = vmatpush.bf16.msra.mxu0 0
          %5707 = vmatpush.bf16.msra.mxu0 0
          %5708 = vmatpush.bf16.msra.mxu0 0
          %5709 = vmatpush.bf16.msra.mxu0 0
          %5710 = vmatpush.bf16.msra.mxu0 %v5677
          %5711 = vmatpush.bf16.msra.mxu0 %v5676
          %5712 = vmatmul.bf16.gmra.mxu0 %v5681
          %v5713 = vpop.f32.mrf.mxu0
          %v5714 = vadd.f32 0.0, %v5713
          %v5715 = vpop.f32.mrf.mxu0
          %v5716 = vadd.f32 0.0, %v5715
          %5717 = vmatmul.bf16.gmra.mxu0 %v5684
          %v5718 = vpop.f32.mrf.mxu0
          %v5719 = vadd.f32 0.0, %v5718
          %v5720 = vpop.f32.mrf.mxu0
          %v5721 = vadd.f32 0.0, %v5720
          %5722 = vmatmul.bf16.gmra.mxu0 %v5687
          %v5723 = vpop.f32.mrf.mxu0
          %v5724 = vadd.f32 0.0, %v5723
          %v5725 = vpop.f32.mrf.mxu0
          %v5726 = vadd.f32 0.0, %v5725
          %5727 = vmatmul.bf16.gmra.mxu0 %v5690
          %v5728 = vpop.f32.mrf.mxu0
          %v5729 = vadd.f32 0.0, %v5728
          %v5730 = vpop.f32.mrf.mxu0
          %v5731 = vadd.f32 0.0, %v5730
          %5732 = vmatmul.bf16.gmra.mxu0 %v5693
          %v5733 = vpop.f32.mrf.mxu0
          %v5734 = vadd.f32 0.0, %v5733
          %v5735 = vpop.f32.mrf.mxu0
          %v5736 = vadd.f32 0.0, %v5735
          %5737 = vmatmul.bf16.gmra.mxu0 %v5696
          %v5738 = vpop.f32.mrf.mxu0
          %v5739 = vadd.f32 0.0, %v5738
          %v5740 = vpop.f32.mrf.mxu0
          %v5741 = vadd.f32 0.0, %v5740
          %5742 = vmatmul.bf16.gmra.mxu0 %v5699
          %v5743 = vpop.f32.mrf.mxu0
          %v5744 = vadd.f32 0.0, %v5743
          %v5745 = vpop.f32.mrf.mxu0
          %v5746 = vadd.f32 0.0, %v5745
          %5747 = vmatmul.bf16.gmra.mxu0 %v5702
          %v5748 = vpop.f32.mrf.mxu0
          %v5749 = vadd.f32 0.0, %v5748
          %v5750 = vpop.f32.mrf.mxu0
          %v5751 = vadd.f32 0.0, %v5750
          %5752 = vdwg.mxu0
          %v5769 = vunpack.c.l.b16 %v5564
          %v5770 = vunpack.c.l.b16 %v5565
          %v5771 = vunpack.c.l.b16 %v5566
          %v5772 = vunpack.c.l.b16 %v5567
          %v5773 = vunpack.c.l.b16 %v5568
          %v5774 = vunpack.c.l.b16 %v5569
          %v5775 = vunpack.c.l.b16 %v5570
          %v5776 = vunpack.c.l.b16 %v5571
          %v5777 = vunpack.c.l.b16 %v5572
          %v5778 = vunpack.c.l.b16 %v5573
          %v5779 = vunpack.c.l.b16 %v5574
          %v5780 = vunpack.c.l.b16 %v5575
          %v5781 = vunpack.c.l.b16 %v5576
          %v5782 = vunpack.c.l.b16 %v5577
          %v5783 = vunpack.c.l.b16 %v5578
          %v5784 = vunpack.c.l.b16 %v5579
          %v5785 = vpack.c.b16 %v5770, %v5769
          %v5786 = vpack.c.b16 %v5772, %v5771
          %v5787 = vpack.c.b16 %v5774, %v5773
          %v5788 = vpack.c.b16 %v5776, %v5775
          %v5789 = vpack.c.b16 %v5778, %v5777
          %v5790 = vpack.c.b16 %v5780, %v5779
          %v5791 = vpack.c.b16 %v5782, %v5781
          %v5792 = vpack.c.b16 %v5784, %v5783
          %v5797 = vunpack.c.l.b16 %v5616
          %v5798 = vunpack.c.l.b16 %v5617
          %v5799 = vunpack.c.l.b16 %v5618
          %v5800 = vunpack.c.l.b16 %v5619
          %v5801 = vpack.c.b16 %v5798, %v5797
          %v5802 = vpack.c.b16 %v5800, %v5799
          %v5806 = vsel %vm1710, %v5785, 0
          %v5809 = vsel %vm1710, %v5786, 0
          %v5812 = vsel %vm1710, %v5787, 0
          %v5815 = vsel %vm1710, %v5788, 0
          %v5818 = vsel %vm1710, %v5789, 0
          %v5821 = vsel %vm1710, %v5790, 0
          %v5824 = vsel %vm1710, %v5791, 0
          %v5827 = vsel %vm1710, %v5792, 0
          %5829 = vmatpush.bf16.msra.mxu0 0
          %5830 = vmatpush.bf16.msra.mxu0 0
          %5831 = vmatpush.bf16.msra.mxu0 0
          %5832 = vmatpush.bf16.msra.mxu0 0
          %5833 = vmatpush.bf16.msra.mxu0 0
          %5834 = vmatpush.bf16.msra.mxu0 0
          %5835 = vmatpush.bf16.msra.mxu0 %v5802
          %5836 = vmatpush.bf16.msra.mxu0 %v5801
          %5837 = vmatmul.bf16.gmra.mxu0 %v5806
          %v5838 = vpop.f32.mrf.mxu0
          %v5839 = vadd.f32 0.0, %v5838
          %v5840 = vpop.f32.mrf.mxu0
          %v5841 = vadd.f32 0.0, %v5840
          %5842 = vmatmul.bf16.gmra.mxu0 %v5809
          %v5843 = vpop.f32.mrf.mxu0
          %v5844 = vadd.f32 0.0, %v5843
          %v5845 = vpop.f32.mrf.mxu0
          %v5846 = vadd.f32 0.0, %v5845
          %5847 = vmatmul.bf16.gmra.mxu0 %v5812
          %v5848 = vpop.f32.mrf.mxu0
          %v5849 = vadd.f32 0.0, %v5848
          %v5850 = vpop.f32.mrf.mxu0
          %v5851 = vadd.f32 0.0, %v5850
          %5852 = vmatmul.bf16.gmra.mxu0 %v5815
          %v5853 = vpop.f32.mrf.mxu0
          %v5854 = vadd.f32 0.0, %v5853
          %v5855 = vpop.f32.mrf.mxu0
          %v5856 = vadd.f32 0.0, %v5855
          %5857 = vmatmul.bf16.gmra.mxu0 %v5818
          %v5858 = vpop.f32.mrf.mxu0
          %v5859 = vadd.f32 0.0, %v5858
          %v5860 = vpop.f32.mrf.mxu0
          %v5861 = vadd.f32 0.0, %v5860
          %5862 = vmatmul.bf16.gmra.mxu0 %v5821
          %v5863 = vpop.f32.mrf.mxu0
          %v5864 = vadd.f32 0.0, %v5863
          %v5865 = vpop.f32.mrf.mxu0
          %v5866 = vadd.f32 0.0, %v5865
          %5867 = vmatmul.bf16.gmra.mxu0 %v5824
          %v5868 = vpop.f32.mrf.mxu0
          %v5869 = vadd.f32 0.0, %v5868
          %v5870 = vpop.f32.mrf.mxu0
          %v5871 = vadd.f32 0.0, %v5870
          %5872 = vmatmul.bf16.gmra.mxu0 %v5827
          %v5873 = vpop.f32.mrf.mxu0
          %v5874 = vadd.f32 0.0, %v5873
          %v5875 = vpop.f32.mrf.mxu0
          %v5876 = vadd.f32 0.0, %v5875
          %5877 = vdwg.mxu0
          %v5894 = vunpack.c.l.b16 %v5580
          %v5895 = vunpack.c.l.b16 %v5581
          %v5896 = vunpack.c.l.b16 %v5582
          %v5897 = vunpack.c.l.b16 %v5583
          %v5898 = vunpack.c.l.b16 %v5584
          %v5899 = vunpack.c.l.b16 %v5585
          %v5900 = vunpack.c.l.b16 %v5586
          %v5901 = vunpack.c.l.b16 %v5587
          %v5902 = vunpack.c.l.b16 %v5588
          %v5903 = vunpack.c.l.b16 %v5589
          %v5904 = vunpack.c.l.b16 %v5590
          %v5905 = vunpack.c.l.b16 %v5591
          %v5906 = vunpack.c.l.b16 %v5592
          %v5907 = vunpack.c.l.b16 %v5593
          %v5908 = vunpack.c.l.b16 %v5594
          %v5909 = vunpack.c.l.b16 %v5595
          %v5910 = vpack.c.b16 %v5895, %v5894
          %v5911 = vpack.c.b16 %v5897, %v5896
          %v5912 = vpack.c.b16 %v5899, %v5898
          %v5913 = vpack.c.b16 %v5901, %v5900
          %v5914 = vpack.c.b16 %v5903, %v5902
          %v5915 = vpack.c.b16 %v5905, %v5904
          %v5916 = vpack.c.b16 %v5907, %v5906
          %v5917 = vpack.c.b16 %v5909, %v5908
          %v5922 = vunpack.c.l.b16 %v5620
          %v5923 = vunpack.c.l.b16 %v5621
          %v5924 = vunpack.c.l.b16 %v5622
          %v5925 = vunpack.c.l.b16 %v5623
          %v5926 = vpack.c.b16 %v5923, %v5922
          %v5927 = vpack.c.b16 %v5925, %v5924
          %v5931 = vsel %vm1710, %v5910, 0
          %v5934 = vsel %vm1710, %v5911, 0
          %v5937 = vsel %vm1710, %v5912, 0
          %v5940 = vsel %vm1710, %v5913, 0
          %v5943 = vsel %vm1710, %v5914, 0
          %v5946 = vsel %vm1710, %v5915, 0
          %v5949 = vsel %vm1710, %v5916, 0
          %v5952 = vsel %vm1710, %v5917, 0
          %5954 = vmatpush.bf16.msra.mxu0 0
          %5955 = vmatpush.bf16.msra.mxu0 0
          %5956 = vmatpush.bf16.msra.mxu0 0
          %5957 = vmatpush.bf16.msra.mxu0 0
          %5958 = vmatpush.bf16.msra.mxu0 0
          %5959 = vmatpush.bf16.msra.mxu0 0
          %5960 = vmatpush.bf16.msra.mxu0 %v5927
          %5961 = vmatpush.bf16.msra.mxu0 %v5926
          %5962 = vmatmul.bf16.gmra.mxu0 %v5931
          %v5963 = vpop.f32.mrf.mxu0
          %v5964 = vadd.f32 0.0, %v5963
          %v5965 = vpop.f32.mrf.mxu0
          %v5966 = vadd.f32 0.0, %v5965
          %5967 = vmatmul.bf16.gmra.mxu0 %v5934
          %v5968 = vpop.f32.mrf.mxu0
          %v5969 = vadd.f32 0.0, %v5968
          %v5970 = vpop.f32.mrf.mxu0
          %v5971 = vadd.f32 0.0, %v5970
          %5972 = vmatmul.bf16.gmra.mxu0 %v5937
          %v5973 = vpop.f32.mrf.mxu0
          %v5974 = vadd.f32 0.0, %v5973
          %v5975 = vpop.f32.mrf.mxu0
          %v5976 = vadd.f32 0.0, %v5975
          %5977 = vmatmul.bf16.gmra.mxu0 %v5940
          %v5978 = vpop.f32.mrf.mxu0
          %v5979 = vadd.f32 0.0, %v5978
          %v5980 = vpop.f32.mrf.mxu0
          %v5981 = vadd.f32 0.0, %v5980
          %5982 = vmatmul.bf16.gmra.mxu0 %v5943
          %v5983 = vpop.f32.mrf.mxu0
          %v5984 = vadd.f32 0.0, %v5983
          %v5985 = vpop.f32.mrf.mxu0
          %v5986 = vadd.f32 0.0, %v5985
          %5987 = vmatmul.bf16.gmra.mxu0 %v5946
          %v5988 = vpop.f32.mrf.mxu0
          %v5989 = vadd.f32 0.0, %v5988
          %v5990 = vpop.f32.mrf.mxu0
          %v5991 = vadd.f32 0.0, %v5990
          %5992 = vmatmul.bf16.gmra.mxu0 %v5949
          %v5993 = vpop.f32.mrf.mxu0
          %v5994 = vadd.f32 0.0, %v5993
          %v5995 = vpop.f32.mrf.mxu0
          %v5996 = vadd.f32 0.0, %v5995
          %5997 = vmatmul.bf16.gmra.mxu0 %v5952
          %v5998 = vpop.f32.mrf.mxu0
          %v5999 = vadd.f32 0.0, %v5998
          %v6000 = vpop.f32.mrf.mxu0
          %v6001 = vadd.f32 0.0, %v6000
          %6002 = vdwg.mxu0
          %v6019 = vunpack.c.l.b16 %v5596
          %v6020 = vunpack.c.l.b16 %v5597
          %v6021 = vunpack.c.l.b16 %v5598
          %v6022 = vunpack.c.l.b16 %v5599
          %v6023 = vunpack.c.l.b16 %v5600
          %v6024 = vunpack.c.l.b16 %v5601
          %v6025 = vunpack.c.l.b16 %v5602
          %v6026 = vunpack.c.l.b16 %v5603
          %v6027 = vunpack.c.l.b16 %v5604
          %v6028 = vunpack.c.l.b16 %v5605
          %v6029 = vunpack.c.l.b16 %v5606
          %v6030 = vunpack.c.l.b16 %v5607
          %v6031 = vunpack.c.l.b16 %v5608
          %v6032 = vunpack.c.l.b16 %v5609
          %v6033 = vunpack.c.l.b16 %v5610
          %v6034 = vunpack.c.l.b16 %v5611
          %v6035 = vpack.c.b16 %v6020, %v6019
          %v6036 = vpack.c.b16 %v6022, %v6021
          %v6037 = vpack.c.b16 %v6024, %v6023
          %v6038 = vpack.c.b16 %v6026, %v6025
          %v6039 = vpack.c.b16 %v6028, %v6027
          %v6040 = vpack.c.b16 %v6030, %v6029
          %v6041 = vpack.c.b16 %v6032, %v6031
          %v6042 = vpack.c.b16 %v6034, %v6033
          %v6047 = vunpack.c.l.b16 %v5624
          %v6048 = vunpack.c.l.b16 %v5625
          %v6049 = vunpack.c.l.b16 %v5626
          %v6050 = vunpack.c.l.b16 %v5627
          %v6051 = vpack.c.b16 %v6048, %v6047
          %v6052 = vpack.c.b16 %v6050, %v6049
          %v6056 = vsel %vm1710, %v6035, 0
          %v6059 = vsel %vm1710, %v6036, 0
          %v6062 = vsel %vm1710, %v6037, 0
          %v6065 = vsel %vm1710, %v6038, 0
          %v6068 = vsel %vm1710, %v6039, 0
          %v6071 = vsel %vm1710, %v6040, 0
          %v6074 = vsel %vm1710, %v6041, 0
          %v6077 = vsel %vm1710, %v6042, 0
          %6079 = vmatpush.bf16.msra.mxu0 0
          %6080 = vmatpush.bf16.msra.mxu0 0
          %6081 = vmatpush.bf16.msra.mxu0 0
          %6082 = vmatpush.bf16.msra.mxu0 0
          %6083 = vmatpush.bf16.msra.mxu0 0
          %6084 = vmatpush.bf16.msra.mxu0 0
          %6085 = vmatpush.bf16.msra.mxu0 %v6052
          %6086 = vmatpush.bf16.msra.mxu0 %v6051
          %6087 = vmatmul.bf16.gmra.mxu0 %v6056
          %v6088 = vpop.f32.mrf.mxu0
          %v6089 = vadd.f32 0.0, %v6088
          %v6090 = vpop.f32.mrf.mxu0
          %v6091 = vadd.f32 0.0, %v6090
          %6092 = vmatmul.bf16.gmra.mxu0 %v6059
          %v6093 = vpop.f32.mrf.mxu0
          %v6094 = vadd.f32 0.0, %v6093
          %v6095 = vpop.f32.mrf.mxu0
          %v6096 = vadd.f32 0.0, %v6095
          %6097 = vmatmul.bf16.gmra.mxu0 %v6062
          %v6098 = vpop.f32.mrf.mxu0
          %v6099 = vadd.f32 0.0, %v6098
          %v6100 = vpop.f32.mrf.mxu0
          %v6101 = vadd.f32 0.0, %v6100
          %6102 = vmatmul.bf16.gmra.mxu0 %v6065
          %v6103 = vpop.f32.mrf.mxu0
          %v6104 = vadd.f32 0.0, %v6103
          %v6105 = vpop.f32.mrf.mxu0
          %v6106 = vadd.f32 0.0, %v6105
          %6107 = vmatmul.bf16.gmra.mxu0 %v6068
          %v6108 = vpop.f32.mrf.mxu0
          %v6109 = vadd.f32 0.0, %v6108
          %v6110 = vpop.f32.mrf.mxu0
          %v6111 = vadd.f32 0.0, %v6110
          %6112 = vmatmul.bf16.gmra.mxu0 %v6071
          %v6113 = vpop.f32.mrf.mxu0
          %v6114 = vadd.f32 0.0, %v6113
          %v6115 = vpop.f32.mrf.mxu0
          %v6116 = vadd.f32 0.0, %v6115
          %6117 = vmatmul.bf16.gmra.mxu0 %v6074
          %v6118 = vpop.f32.mrf.mxu0
          %v6119 = vadd.f32 0.0, %v6118
          %v6120 = vpop.f32.mrf.mxu0
          %v6121 = vadd.f32 0.0, %v6120
          %6122 = vmatmul.bf16.gmra.mxu0 %v6077
          %v6123 = vpop.f32.mrf.mxu0
          %v6124 = vadd.f32 0.0, %v6123
          %v6125 = vpop.f32.mrf.mxu0
          %v6126 = vadd.f32 0.0, %v6125
          %6127 = vdwg.mxu0
          %vm6128 = vcmask 523264
          %v6129 = vsel %vm6128, %v5714, 0.0
          %v6130 = vsel %vm6128, %v5839, 0.0
          %v6131 = vadd.f32 %v6129, %v6130
          %v6132 = vsel %vm6128, %v5964, 0.0
          %v6133 = vadd.f32 %v6131, %v6132
          %v6134 = vsel %vm6128, %v6089, 0.0
          %v6135 = vadd.f32 %v6133, %v6134
          %v6136 = vsel %vm6128, %v5716, 0.0
          %v6137 = vsel %vm6128, %v5841, 0.0
          %v6138 = vadd.f32 %v6136, %v6137
          %v6139 = vsel %vm6128, %v5966, 0.0
          %v6140 = vadd.f32 %v6138, %v6139
          %v6141 = vsel %vm6128, %v6091, 0.0
          %v6142 = vadd.f32 %v6140, %v6141
          %v6143 = vsel %vm6128, %v5719, 0.0
          %v6144 = vsel %vm6128, %v5844, 0.0
          %v6145 = vadd.f32 %v6143, %v6144
          %v6146 = vsel %vm6128, %v5969, 0.0
          %v6147 = vadd.f32 %v6145, %v6146
          %v6148 = vsel %vm6128, %v6094, 0.0
          %v6149 = vadd.f32 %v6147, %v6148
          %v6150 = vsel %vm6128, %v5721, 0.0
          %v6151 = vsel %vm6128, %v5846, 0.0
          %v6152 = vadd.f32 %v6150, %v6151
          %v6153 = vsel %vm6128, %v5971, 0.0
          %v6154 = vadd.f32 %v6152, %v6153
          %v6155 = vsel %vm6128, %v6096, 0.0
          %v6156 = vadd.f32 %v6154, %v6155
          %v6157 = vsel %vm6128, %v5724, 0.0
          %v6158 = vsel %vm6128, %v5849, 0.0
          %v6159 = vadd.f32 %v6157, %v6158
          %v6160 = vsel %vm6128, %v5974, 0.0
          %v6161 = vadd.f32 %v6159, %v6160
          %v6162 = vsel %vm6128, %v6099, 0.0
          %v6163 = vadd.f32 %v6161, %v6162
          %v6164 = vsel %vm6128, %v5726, 0.0
          %v6165 = vsel %vm6128, %v5851, 0.0
          %v6166 = vadd.f32 %v6164, %v6165
          %v6167 = vsel %vm6128, %v5976, 0.0
          %v6168 = vadd.f32 %v6166, %v6167
          %v6169 = vsel %vm6128, %v6101, 0.0
          %v6170 = vadd.f32 %v6168, %v6169
          %v6171 = vsel %vm6128, %v5729, 0.0
          %v6172 = vsel %vm6128, %v5854, 0.0
          %v6173 = vadd.f32 %v6171, %v6172
          %v6174 = vsel %vm6128, %v5979, 0.0
          %v6175 = vadd.f32 %v6173, %v6174
          %v6176 = vsel %vm6128, %v6104, 0.0
          %v6177 = vadd.f32 %v6175, %v6176
          %v6178 = vsel %vm6128, %v5731, 0.0
          %v6179 = vsel %vm6128, %v5856, 0.0
          %v6180 = vadd.f32 %v6178, %v6179
          %v6181 = vsel %vm6128, %v5981, 0.0
          %v6182 = vadd.f32 %v6180, %v6181
          %v6183 = vsel %vm6128, %v6106, 0.0
          %v6184 = vadd.f32 %v6182, %v6183
          %v6185 = vsel %vm6128, %v5734, 0.0
          %v6186 = vsel %vm6128, %v5859, 0.0
          %v6187 = vadd.f32 %v6185, %v6186
          %v6188 = vsel %vm6128, %v5984, 0.0
          %v6189 = vadd.f32 %v6187, %v6188
          %v6190 = vsel %vm6128, %v6109, 0.0
          %v6191 = vadd.f32 %v6189, %v6190
          %v6192 = vsel %vm6128, %v5736, 0.0
          %v6193 = vsel %vm6128, %v5861, 0.0
          %v6194 = vadd.f32 %v6192, %v6193
          %v6195 = vsel %vm6128, %v5986, 0.0
          %v6196 = vadd.f32 %v6194, %v6195
          %v6197 = vsel %vm6128, %v6111, 0.0
          %v6198 = vadd.f32 %v6196, %v6197
          %v6199 = vsel %vm6128, %v5739, 0.0
          %v6200 = vsel %vm6128, %v5864, 0.0
          %v6201 = vadd.f32 %v6199, %v6200
          %v6202 = vsel %vm6128, %v5989, 0.0
          %v6203 = vadd.f32 %v6201, %v6202
          %v6204 = vsel %vm6128, %v6114, 0.0
          %v6205 = vadd.f32 %v6203, %v6204
          %v6206 = vsel %vm6128, %v5741, 0.0
          %v6207 = vsel %vm6128, %v5866, 0.0
          %v6208 = vadd.f32 %v6206, %v6207
          %v6209 = vsel %vm6128, %v5991, 0.0
          %v6210 = vadd.f32 %v6208, %v6209
          %v6211 = vsel %vm6128, %v6116, 0.0
          %v6212 = vadd.f32 %v6210, %v6211
          %v6213 = vsel %vm6128, %v5744, 0.0
          %v6214 = vsel %vm6128, %v5869, 0.0
          %v6215 = vadd.f32 %v6213, %v6214
          %v6216 = vsel %vm6128, %v5994, 0.0
          %v6217 = vadd.f32 %v6215, %v6216
          %v6218 = vsel %vm6128, %v6119, 0.0
          %v6219 = vadd.f32 %v6217, %v6218
          %v6220 = vsel %vm6128, %v5746, 0.0
          %v6221 = vsel %vm6128, %v5871, 0.0
          %v6222 = vadd.f32 %v6220, %v6221
          %v6223 = vsel %vm6128, %v5996, 0.0
          %v6224 = vadd.f32 %v6222, %v6223
          %v6225 = vsel %vm6128, %v6121, 0.0
          %v6226 = vadd.f32 %v6224, %v6225
          %v6227 = vsel %vm6128, %v5749, 0.0
          %v6228 = vsel %vm6128, %v5874, 0.0
          %v6229 = vadd.f32 %v6227, %v6228
          %v6230 = vsel %vm6128, %v5999, 0.0
          %v6231 = vadd.f32 %v6229, %v6230
          %v6232 = vsel %vm6128, %v6124, 0.0
          %v6233 = vadd.f32 %v6231, %v6232
          %v6234 = vsel %vm6128, %v5751, 0.0
          %v6235 = vsel %vm6128, %v5876, 0.0
          %v6236 = vadd.f32 %v6234, %v6235
          %v6237 = vsel %vm6128, %v6001, 0.0
          %v6238 = vadd.f32 %v6236, %v6237
          %v6239 = vsel %vm6128, %v6126, 0.0
          %v6240 = vadd.f32 %v6238, %v6239
          %v6241 = vld [vmem:[%s5] sm:$0x1]
          %v6243 = vperm.slane %v6241, 0
          %v6245 = vadd.f32 %v6135, %v6243
          %v6246 = vadd.f32 %v6142, %v6243
          %v6247 = vadd.f32 %v6149, %v6243
          %v6248 = vadd.f32 %v6156, %v6243
          %v6249 = vadd.f32 %v6163, %v6243
          %v6250 = vadd.f32 %v6170, %v6243
          %v6251 = vadd.f32 %v6177, %v6243
          %v6252 = vadd.f32 %v6184, %v6243
          %v6253 = vadd.f32 %v6191, %v6243
          %v6254 = vadd.f32 %v6198, %v6243
          %v6255 = vadd.f32 %v6205, %v6243
          %v6256 = vadd.f32 %v6212, %v6243
          %v6257 = vadd.f32 %v6219, %v6243
          %v6258 = vadd.f32 %v6226, %v6243
          %v6259 = vadd.f32 %v6233, %v6243
          %v6260 = vadd.f32 %v6240, %v6243
          %6261 = vst.msk [vmem:[%s1237] sm:$0xff] %vm6128, %v6245
          %6262 = vst.msk [vmem:[%s1237 + $0x8] sm:$0xff] %vm6128, %v6246
          %6263 = vst.msk [vmem:[%s1237 + $0x10] sm:$0xff] %vm6128, %v6247
          %6264 = vst.msk [vmem:[%s1237 + $0x18] sm:$0xff] %vm6128, %v6248
          %6265 = vst.msk [vmem:[%s1237 + $0x20] sm:$0xff] %vm6128, %v6249
          %6266 = vst.msk [vmem:[%s1237 + $0x28] sm:$0xff] %vm6128, %v6250
          %6267 = vst.msk [vmem:[%s1237 + $0x30] sm:$0xff] %vm6128, %v6251
          %6268 = vst.msk [vmem:[%s1237 + $0x38] sm:$0xff] %vm6128, %v6252
          %6269 = vst.msk [vmem:[%s1237 + $0x40] sm:$0xff] %vm6128, %v6253
          %6270 = vst.msk [vmem:[%s1237 + $0x48] sm:$0xff] %vm6128, %v6254
          %6271 = vst.msk [vmem:[%s1237 + $0x50] sm:$0xff] %vm6128, %v6255
          %6272 = vst.msk [vmem:[%s1237 + $0x58] sm:$0xff] %vm6128, %v6256
          %6273 = vst.msk [vmem:[%s1237 + $0x60] sm:$0xff] %vm6128, %v6257
          %6274 = vst.msk [vmem:[%s1237 + $0x68] sm:$0xff] %vm6128, %v6258
          %6275 = vst.msk [vmem:[%s1237 + $0x70] sm:$0xff] %vm6128, %v6259
          %6276 = vst.msk [vmem:[%s1237 + $0x78] sm:$0xff] %vm6128, %v6260
        $region175: #{tpu_custom_call.1} parent=154 // pred_fallthru
          _
        %s6277 = smul.u32 16, %s23
        %p6278 = scmp.lt.s32.totalorder %s22, 1
        %s6279 = scalar_select %p6278, %s22, 1
        %p6280 = scmp.lt.s32.totalorder %s6277, 47
        %s6281 = scalar_select %p6280, %s6277, 47
        %s6282 = smul.addr %s6279, 48
        %s6283 = sadd.s32 %s6281, %s6282
        %s6284 = smul.addr %s6283, 8
        %s6285 = scalar_lea.vmem %s6, %s6284
        // Predicated region
        $region176: #{tpu_custom_call.1} parent=154 // pred_check
          %p6286 = pneg %p208
        $region177: #{tpu_custom_call.1} parent=154 // pred_check_branch
          %6288 = sbr.rel (%p6286) target = $region179
        $region178: #{tpu_custom_call.1} parent=154 // pred_region
          %s6289 = smul.u32 16, %s23
        $region179: #{tpu_custom_call.1} parent=154 // pred_fallthru
          _
      $region155: #{tpu_custom_call.1} parent=5 // pred_fallthru
        _
      %p6290 = scmp.le.s32.totalorder 2, %s12
      // Predicated region
      $region180: #{tpu_custom_call.1} parent=5 // pred_check
        %p6291 = pneg %p6290
      $region181: #{tpu_custom_call.1} parent=5 // pred_check_branch
        %6293 = sbr.rel (%p6291) target = $region183
      $region182: #{tpu_custom_call.1} parent=5 // pred_region
        %s6294 = ssub.s32 %s12, 2
        // Predicated region
        $region184: #{tpu_custom_call.1} parent=182 // pred_check
          %p6295 = pneg %p214
        $region185: #{tpu_custom_call.1} parent=182 // pred_check_branch
          %6297 = sbr.rel (%p6295) target = $region187
        $region186: #{tpu_custom_call.1} parent=182 // pred_region
          %s6298 = smul.u32 16, %s26
          %p6299 = scmp.lt.s32.totalorder %s25, 1
          %s6300 = scalar_select %p6299, %s25, 1
          %p6301 = scmp.lt.s32.totalorder %s6298, 47
          %s6302 = scalar_select %p6301, %s6298, 47
          %s6303 = smul.addr %s6300, 48
          %s6304 = sadd.s32 %s6302, %s6303
          %s6305 = smul.addr %s6304, 8
          %s6306 = scalar_lea.vmem %s6, %s6305
        $region187: #{tpu_custom_call.1} parent=182 // pred_fallthru
          _
      $region183: #{tpu_custom_call.1} parent=5 // pred_fallthru
        _
    $region6: #{tpu_custom_call.1} parent=1 // loop_footer
      %s16 = sadd.s32 1, %s12
    $region7: #{tpu_custom_call.1} parent=1 // loop_footer_branch
      %11 = sbr.rel target = $region3
    $region8: #{tpu_custom_call.1} parent=1 // loop_exit
      _

</llo_original>
